<compile_context>
chip_gen: v7x
topology: tpu7x:2x2x1
jax: 0.10.0
libtpu: 0.0.40
codegen_flags: <defaults>
</compile_context>

<pallas_src>
import jax
import jax.numpy as jnp
from jax import lax
from jax.experimental import pallas as pl
from jax.experimental.pallas import tpu as pltpu

# ----- QModule default hyper-parameters (w_bit=8, a_bit=8, half_wave=True) ---
A_BIT = 8          # self._a_bit (half_wave=True so a_bit stored as-is)
W_BIT = 8          # self._w_bit
B_BIT = 32         # self._b_bit
INIT_RANGE = 6.0   # self.init_range

_MAX_BLOCK_ROWS = 4096                # (4096,128) f32 = 2 MiB per block
_VMEM_LIMIT = 32 * 1024 * 1024        # scoped-VMEM cap safe on v5e/v6e/v7x
_SMALL_TOTAL = 32 * 1024              # below this, plain jnp beats launch+DMA
_FUSE_BYTES = 4 * 1024 * 1024         # fused cold-path kernel when w fits VMEM
_EPS = 1e-12                          # guards scale == 0 -> NaN (degenerate)


# --------------------------- layout helper ------------------------------------
def _as_lane_dense(flat):
    """View/reshape a flat f32 vector as a lane-dense (rows, 128) slab.

    Fast path (total % 1024 == 0): pure reshape, no copy, no pad, no slice
    needed afterwards.  Otherwise zero-pad to the next multiple of 8*128 only
    (NOT up to a multiple of block_rows).  rows is always a multiple of 8 so
    any multiple-of-8 block_rows satisfies the (8,128) constraint; the ragged
    last grid block is masked by Pallas.  Returns (slab, was_padded)."""
    total = flat.shape[0]
    if total % (8 * 128) == 0:
        return flat.reshape(total // 128, 128), False
    rows = -(-total // 128)              # ceil-div to lanes
    rows = -(-rows // 8) * 8             # round up to a multiple of 8 sublanes
    flat = jnp.pad(flat, (0, rows * 128 - total))
    return flat.reshape(rows, 128), True


# ------------------------------- kernels ---------------------------------------
def _act_quant_kernel(x_ref, r_ref, o_ref):
    # half-wave + trainable range:
    #   ori = 0.5*(|x| - |x - R| + R) == clamp(x, 0, R)   (for R >= 0)
    #   scale = R / (2**a_bit - 1);  out = round(ori / scale) * scale
    r = r_ref[0]
    levels = 2.0 ** A_BIT - 1.0
    safe_r = jnp.maximum(r, _EPS)          # avoids NaN when R == 0
    scale = safe_r / levels
    inv_scale = levels / safe_r            # scalar; mul instead of per-elem div
    ori = jnp.clip(x_ref[...], 0.0, r)
    o_ref[...] = jnp.round(ori * inv_scale) * scale


def _w_quant_kernel(w_ref, thr_ref, o_ref):
    #   scale = threshold / (2**(w_bit-1) - 1)
    #   out   = round(clamp(w, -t, t) / scale) * scale
    t = thr_ref[0]
    levels = 2.0 ** (W_BIT - 1) - 1.0
    safe_t = jnp.maximum(t, _EPS)
    scale = safe_t / levels
    inv_scale = levels / safe_t
    wc = jnp.clip(w_ref[...], -t, t)
    o_ref[...] = jnp.round(wc * inv_scale) * scale


def _w_fused_cold_kernel(w_ref, o_ref, thr_ref):
    # Cold path only (weight_range <= 0): the whole weight slab is resident in
    # VMEM, so abs-max + quantize share a single HBM read/write of w.
    # thr_ref is an (8,128) lane-dense VMEM tile (unmasked store); caller
    # takes [0,0].
    w = w_ref[...]
    t = jnp.max(jnp.abs(w))
    thr_ref[...] = jnp.full((8, 128), t, dtype=jnp.float32)
    levels = 2.0 ** (W_BIT - 1) - 1.0
    safe_t = jnp.maximum(t, _EPS)
    scale = safe_t / levels
    inv_scale = levels / safe_t
    wc = jnp.clip(w, -t, t)
    o_ref[...] = jnp.round(wc * inv_scale) * scale


def _make_absmax_partial_kernel(rows, block_rows):
    # Stage 1 of the two-stage |w|-max: each grid block writes its own (8,128)
    # partial-max tile (no resident accumulator -> "parallel" grid, both v7x
    # TCs stream w).  The ragged tail block is masked against the valid row
    # count so OOB garbage never contaminates the max.
    def kernel(w_ref, o_ref):
        i = pl.program_id(0)
        row = lax.broadcasted_iota(jnp.int32, (block_rows, 128), 0)
        valid = (i * block_rows + row) < rows
        a = jnp.where(valid, jnp.abs(w_ref[...]), 0.0)
        o_ref[...] = jnp.full((8, 128), jnp.max(a), dtype=jnp.float32)
    return kernel


# --------------------------- pallas_call helpers --------------------------------
def _tiled_elementwise(kernel, slab, scalar_arg):
    """Run an elementwise quant kernel over a (rows,128) slab with 2 MiB blocks,
    cdiv grid (masked ragged tail) and a scalar SMEM side input."""
    rows = slab.shape[0]
    block_rows = min(_MAX_BLOCK_ROWS, rows)
    grid = pl.cdiv(rows, block_rows)
    return pl.pallas_call(
        kernel,
        out_shape=jax.ShapeDtypeStruct(slab.shape, slab.dtype),
        grid=(grid,),
        in_specs=[pl.BlockSpec((block_rows, 128), lambda i: (i, 0)),
                  pl.BlockSpec(memory_space=pltpu.SMEM)],
        out_specs=pl.BlockSpec((block_rows, 128), lambda i: (i, 0)),
        compiler_params=pltpu.CompilerParams(
            dimension_semantics=("parallel",),
            vmem_limit_bytes=_VMEM_LIMIT),
    )(slab, scalar_arg)


def _two_stage_absmax(slab):
    """Parallel partial-max pass + tiny final max.  Only runs on the cold path."""
    rows = slab.shape[0]
    block_rows = min(_MAX_BLOCK_ROWS, rows)
    grid = pl.cdiv(rows, block_rows)
    partial = pl.pallas_call(
        _make_absmax_partial_kernel(rows, block_rows),
        out_shape=jax.ShapeDtypeStruct((grid * 8, 128), jnp.float32),
        grid=(grid,),
        in_specs=[pl.BlockSpec((block_rows, 128), lambda i: (i, 0))],
        out_specs=pl.BlockSpec((8, 128), lambda i: (i, 0)),
        compiler_params=pltpu.CompilerParams(
            dimension_semantics=("parallel",),
            vmem_limit_bytes=_VMEM_LIMIT),
    )(slab)
    return jnp.max(partial)


# ------------------------------ references -------------------------------------
# Pure-JAX mirrors of the PyTorch math; also used as the small-tensor fallback
# (for tiny tensors the pad copy, launch and DMA setup dwarf the compute).
def _ref_act(x, r):
    levels = 2.0 ** A_BIT - 1.0
    safe_r = jnp.maximum(r, _EPS)
    ori = jnp.clip(x, 0.0, r)              # == 0.5*(|x| - |x - r| + r) for r>=0
    return jnp.round(ori * (levels / safe_r)) * (safe_r / levels)


def _ref_weight(w, wr):
    thr = jnp.where(wr > 0.0, wr, jnp.max(jnp.abs(w)))
    levels = 2.0 ** (W_BIT - 1) - 1.0
    safe_t = jnp.maximum(thr, _EPS)
    qw = jnp.round(jnp.clip(w, -thr, thr) * (levels / safe_t)) * (safe_t / levels)
    return qw, thr


def _ref_bias(b):
    threshold = jnp.max(b) + 1e-5
    scale = threshold / (2.0 ** (B_BIT - 1) - 1.0)
    return jnp.round(jnp.clip(b, -threshold, threshold) / scale) * scale


# ------------------------- activation fake-quant --------------------------------
def quantize_activation(x, activation_range):
    """x: float32 NCHW (or any shape). activation_range: float32 array (1,)."""
    orig_shape = x.shape
    total = x.size
    if total <= _SMALL_TOTAL:
        return _ref_act(x, activation_range[0])        # launch overhead > compute

    slab, padded = _as_lane_dense(x.reshape(-1))
    out = _tiled_elementwise(_act_quant_kernel, slab, activation_range)
    if padded:
        return out.reshape(-1)[:total].reshape(orig_shape)
    return out.reshape(orig_shape)                      # free view on aligned path


# --------------------------- weight fake-quant -----------------------------------
def quantize_weight(w, weight_range):
    """w: float32 OIHW conv weight (any shape). weight_range: float32 (1,).
    Returns (quantized_weight, new_weight_range)."""
    orig_shape = w.shape
    total = w.size
    wr = weight_range[0]

    if total <= _SMALL_TOTAL:
        qw, thr = _ref_weight(w, wr)
        return qw, thr.reshape(1)

    slab, padded = _as_lane_dense(w.reshape(-1))

    if total * 4 <= _FUSE_BYTES:
        # Weight fits comfortably in VMEM: fuse abs-max + quantize on the cold
        # path (one HBM read of w, one launch); hot path = tiled quant only.
        def cold():
            qslab, thr_tile = pl.pallas_call(
                _w_fused_cold_kernel,
                out_shape=(jax.ShapeDtypeStruct(slab.shape, slab.dtype),
                           jax.ShapeDtypeStruct((8, 128), jnp.float32)),
                in_specs=[pl.BlockSpec(memory_space=pltpu.VMEM)],
                out_specs=(pl.BlockSpec(memory_space=pltpu.VMEM),
                           pl.BlockSpec(memory_space=pltpu.VMEM)),
                compiler_params=pltpu.CompilerParams(
                    vmem_limit_bytes=_VMEM_LIMIT),
            )(slab)
            return qslab, thr_tile[0, 0].reshape(1)

        def hot():
            return _tiled_elementwise(_w_quant_kernel, slab, wr.reshape(1)), weight_range

        qslab, new_range = lax.cond(wr <= 0.0, cold, hot)
    else:
        # Too large for one VMEM block: gated, fully-parallel two-stage abs-max
        # (cold path only), then the tiled elementwise quant kernel.
        thr = lax.cond(wr <= 0.0, lambda: _two_stage_absmax(slab), lambda: wr)
        qslab = _tiled_elementwise(_w_quant_kernel, slab, thr.reshape(1))
        new_range = thr.reshape(1)

    if padded:
        qw = qslab.reshape(-1)[:total].reshape(orig_shape)
    else:
        qw = qslab.reshape(orig_shape)
    return qw, new_range


# ---------------------------- bias fake-quant ------------------------------------
def quantize_bias(b):
    """b: float32 (C,).  Plain jnp: a (C,)-sized tensor is far below the cost of
    a pallas_call launch + DMA setup.  (b_bit=32 makes this a near pass-through,
    inherited from PyTorch.)"""
    return _ref_bias(b)


# --------------------------- QModule._quantize -----------------------------------
def qmodule_quantize(x, w, b, activation_range, weight_range):
    """Mirrors QModule._quantize(): quantize activations + weights, pass bias
    through (bias quantization is not triggered on the default path)."""
    qx = quantize_activation(x, activation_range)
    qw, new_weight_range = quantize_weight(w, weight_range)
    return qx, qw, b, new_weight_range


# ---------------------------------- main -----------------------------------------
if __name__ == "__main__":
    key = jax.random.PRNGKey(0)
    kx, kw, kb, k1, k2, k3, k4 = jax.random.split(key, 7)

    # Small shapes consistent with a quantized conv layer (jnp fallback path).
    x = jax.random.normal(kx, (2, 4, 16, 16), dtype=jnp.float32) * 3.0     # NCHW
    w = jax.random.normal(kw, (8, 4, 3, 3), dtype=jnp.float32) * 0.5       # OIHW
    b = jax.random.normal(kb, (8,), dtype=jnp.float32) * 0.1

    # Larger tensors exercising the Pallas paths.
    x_big = jax.random.normal(k1, (8, 32, 64, 64), dtype=jnp.float32) * 3.0   # aligned, grid=2
    x_rag = jax.random.normal(k2, (3, 17, 101, 103), dtype=jnp.float32) * 3.0 # ragged tail block
    w_mid = jax.random.normal(k3, (128, 64, 3, 3), dtype=jnp.float32) * 0.5   # fused cold path
    w_big = jax.random.normal(k4, (512, 256, 3, 3), dtype=jnp.float32) * 0.5  # two-stage absmax

    activation_range = jnp.array([INIT_RANGE], dtype=jnp.float32)  # nn.Parameter([6.0])
    wr_cold = jnp.array([-1.0], dtype=jnp.float32)                 # nn.Parameter([-1.0])
    wr_hot = jnp.array([0.4], dtype=jnp.float32)                   # trained-range path

    # Full QModule._quantize on the small layer.
    qx, qw, qb, new_wr = qmodule_quantize(x, w, b, activation_range, wr_cold)

    # Pallas activation paths.
    qx_big = quantize_activation(x_big, activation_range)
    qx_rag = quantize_activation(x_rag, activation_range)

    # Pallas weight paths (fused cold, tiled hot, two-stage-absmax cold, tiled hot).
    qw_mid_cold, wr_mid_cold = quantize_weight(w_mid, wr_cold)
    qw_mid_hot, wr_mid_hot = quantize_weight(w_mid, wr_hot)
    qw_big_cold, wr_big_cold = quantize_weight(w_big, wr_cold)
    qw_big_hot, wr_big_hot = quantize_weight(w_big, wr_hot)

    qbias = quantize_bias(b)

    jax.block_until_ready((qx, qw, qb, new_wr, qx_big, qx_rag,
                           qw_mid_cold, wr_mid_cold, qw_mid_hot, wr_mid_hot,
                           qw_big_cold, wr_big_cold, qw_big_hot, wr_big_hot, qbias))

    # ----- verify against pure-JAX references of the PyTorch math -----
    def check(name, got, want):
        assert jnp.allclose(got, want, atol=1e-5), f"{name} mismatch"

    check("small activation", qx, _ref_act(x, activation_range[0]))
    check("big activation", qx_big, _ref_act(x_big, activation_range[0]))
    check("ragged activation", qx_rag, _ref_act(x_rag, activation_range[0]))

    ref_qw, ref_thr = _ref_weight(w, wr_cold[0])
    check("small weight", qw, ref_qw)
    check("small weight_range", new_wr[0], ref_thr)

    ref_qw, ref_thr = _ref_weight(w_mid, wr_cold[0])
    check("mid weight (cold/fused)", qw_mid_cold, ref_qw)
    check("mid weight_range (cold)", wr_mid_cold[0], ref_thr)
    ref_qw, ref_thr = _ref_weight(w_mid, wr_hot[0])
    check("mid weight (hot)", qw_mid_hot, ref_qw)
    check("mid weight_range (hot)", wr_mid_hot[0], ref_thr)

    ref_qw, ref_thr = _ref_weight(w_big, wr_cold[0])
    check("big weight (cold/two-stage)", qw_big_cold, ref_qw)
    check("big weight_range (cold)", wr_big_cold[0], ref_thr)
    ref_qw, ref_thr = _ref_weight(w_big, wr_hot[0])
    check("big weight (hot)", qw_big_hot, ref_qw)
    check("big weight_range (hot)", wr_big_hot[0], ref_thr)

    check("bias", qbias, _ref_bias(b))

    print("KERNEL_OK")
</pallas_src>

<mosaic_0001>
module attributes {stable_mosaic.version = 11 : i64} {
  func.func @_act_quant_kernel(%arg0: i32, %arg1: memref<4096x128xf32, #tpu.memory_space<vmem>>, %arg2: memref<1xf32, #tpu.memory_space<smem>>, %arg3: memref<4096x128xf32, #tpu.memory_space<vmem>>) attributes {dimension_semantics = [#tpu.dimension_semantics<parallel>], iteration_bounds = array<i64: 2>, scalar_prefetch = 0 : i64, scratch_operands = 0 : i64, tpu.core_type = #tpu.core_type<tc>, window_params = [{transform_indices = @transform_0, window_bounds = array<i64: 4096, 128>}, {transform_indices = @transform_1, window_bounds = array<i64: 1>}, {transform_indices = @transform_2, window_bounds = array<i64: 4096, 128>}]} {
    %c0 = arith.constant 0 : index
    %0 = memref.load %arg2[%c0] : memref<1xf32, #tpu.memory_space<smem>>
    %cst = arith.constant 9.99999996E-13 : f32
    %1 = arith.maximumf %0, %cst : f32
    %cst_0 = arith.constant 2.550000e+02 : f32
    %2 = arith.divf %1, %cst_0 : f32
    %cst_1 = arith.constant 2.550000e+02 : f32
    %3 = arith.divf %cst_1, %1 : f32
    %c0_2 = arith.constant 0 : index
    %c0_3 = arith.constant 0 : index
    %4 = vector.load %arg1[%c0_2, %c0_3] : memref<4096x128xf32, #tpu.memory_space<vmem>>, vector<4096x128xf32>
    %cst_4 = arith.constant 0.000000e+00 : f32
    %5 = vector.broadcast %cst_4 : f32 to vector<4096x128xf32>
    %6 = arith.maximumf %5, %4 : vector<4096x128xf32>
    %7 = vector.broadcast %0 : f32 to vector<4096x128xf32>
    %8 = arith.minimumf %7, %6 : vector<4096x128xf32>
    %9 = vector.broadcast %3 : f32 to vector<4096x128xf32>
    %10 = arith.mulf %8, %9 : vector<4096x128xf32>
    %11 = math.roundeven %10 : vector<4096x128xf32>
    %12 = vector.broadcast %2 : f32 to vector<4096x128xf32>
    %13 = arith.mulf %11, %12 : vector<4096x128xf32>
    %c0_5 = arith.constant 0 : index
    %c0_6 = arith.constant 0 : index
    %14 = vector.load %arg3[%c0_5, %c0_6] : memref<4096x128xf32, #tpu.memory_space<vmem>>, vector<4096x128xf32>
    tpu.vector_store %arg3[%c0_5, %c0_6], %13 {strides = array<i32>} : memref<4096x128xf32, #tpu.memory_space<vmem>>, vector<4096x128xf32>,
    return
  }
  func.func @transform_0(%arg0: i32) -> (i32, i32) {
    %c0_i32 = arith.constant 0 : i32
    %c0_i32_0 = arith.constant 0 : i32
    return %arg0, %c0_i32 : i32, i32
  }
  func.func @transform_1(%arg0: i32) -> i32 {
    %c0_i32 = arith.constant 0 : i32
    %c0_i32_0 = arith.constant 0 : i32
    return %c0_i32 : i32
  }
  func.func @transform_2(%arg0: i32) -> (i32, i32) {
    %c0_i32 = arith.constant 0 : i32
    %c0_i32_0 = arith.constant 0 : i32
    return %arg0, %c0_i32 : i32, i32
  }
}

</mosaic_0001>

<llo_original>
// kernel: tpu_custom_call.1
$region0: #{tpu_custom_call.1}
  #allocation0 [shape = 'u32[]', space=smem, size = 0x4, offset = 0x4, fixed_abs, tag = 'smem constant byte address 0x4 - core index']
  #allocation1 [shape = 'u32[144,128]{1,0:T(1,128)}', space=vmem, size = 0x12000, scoped, tag = 'internal scratch']
  #allocation2 [shape = 'f32[1]{0:T(128)S(6)}', space=smem, size = 0x200, scoped, tag = 'scoped memory for tpu_custom_call.1']
  %s0 = inlined_call_operand.hbm [shape: f32[8192,128], index: 0, kind: input, shape index: {}]
  %s1 = inlined_call_operand.<no memory space> [shape: f32[1], index: 1, kind: input, shape index: {}]
  %s2 = inlined_call_operand.hbm [shape: f32[8192,128], index: 2, kind: output, shape index: {}]
  %s3 = sld [smem:[#allocation0]]
  $region45: #{tpu_custom_call.1} parent=0
    _
  %s5 = ssub.s32 1, %s3
  %s6 = scalar_select 0, %s5, %s3
  %7 = sst [smem:[#allocation2]] %s1
  $region1: #{tpu_custom_call.1} parent=0
    #allocation3 [shape = 'u8[4194304]{0}', space=vmem, size = 0x400000, scoped, tag = 'input window, operand 0']
    #allocation4 [shape = 's32[2]{0}', space=sflag, size = 0x8, scoped, tag = 'scoped memory for tpu_custom_call.1']
    #allocation5 [shape = 's32[2]{0}', space=sflag, size = 0x8, scoped, tag = 'scoped memory for tpu_custom_call.1']
    #allocation6 [shape = 'u8[4194304]{0}', space=vmem, size = 0x400000, scoped, tag = 'output window, operand 0']
    %8 = vsyncpa [#allocation4], 0
    %s9 = scalar_lea.sflag [#allocation4], 1
    %10 = vsyncpa %s9, 0
    %11 = vsyncpa [#allocation5], 0
    %s12 = scalar_lea.sflag [#allocation5], 1
    %13 = vsyncpa %s12, 0
    loop: start=0, step=1, limit=4
    $region2: #{tpu_custom_call.1} parent=1 // loop_pre_header
      _
    $region3: #{tpu_custom_call.1} parent=1 // loop_header
      %s15 = sphi 0, %s19
      %p16 = scmp.ge.s32.totalorder %s15, 4
      %s25 = sphi 0, %s27
      %s28 = sphi 0, %s25
      %s29 = sphi 0, %s28
      %s45 = sphi 0, %s29
      %s49 = sphi 0, %s49
      %s51 = sphi 0, %s49
      %s52 = sphi 0, %s51
      %s66 = sphi 0, %s52
      %s72 = sphi 0, %s74
      %s75 = sphi 0, %s72
      %s76 = sphi 0, %s75
      %s92 = sphi 0, %s76
    $region4: #{tpu_custom_call.1} parent=1 // loop_header_branch
      %18 = sbr.rel (%p16) target = $region8
    $region5: #{tpu_custom_call.1} parent=1 // loop_body
      %s20 = ssub.s32 %s15, 1
      %s21 = ssub.s32 %s15, 2
      %s22 = sadd.s32 %s15, 1
      %s23 = ssub.s32 %s15, %s22
      %p24 = scmp.eq.s32.totalorder %s23, 0
      %s26 = sadd.s32 %s25, 1
      %s27 = scalar_select %p24, %s25, %s26
      %p30 = pneg %p24
      %p31 = scmp.eq.s32.totalorder %s15, 1
      %p32 = por %p30, %p31
      %p33 = scmp.ne.s32.totalorder %s25, %s28
      %p34 = scmp.eq.s32.totalorder %s15, 0
      %p35 = por %p33, %p34
      %p36 = scmp.ne.s32.totalorder %s25, %s28
      %p37 = scmp.eq.s32.totalorder %s20, 1
      %p38 = por %p36, %p37
      %p39 = scmp.ne.s32.totalorder %s28, %s29
      %p40 = scmp.eq.s32.totalorder %s20, 0
      %p41 = por %p39, %p40
      %p42 = scmp.ne.s32.totalorder %s28, %s29
      %p43 = scmp.eq.s32.totalorder %s21, 1
      %p44 = por %p42, %p43
      %p46 = scmp.ne.s32.totalorder %s29, %s45
      %p47 = scmp.eq.s32.totalorder %s21, 0
      %p48 = por %p46, %p47
      %s50 = sadd.s32 %s49, 1
      %p53 = scmp.eq.s32.totalorder %s15, 1
      %p54 = scmp.ne.s32.totalorder %s49, %s51
      %p55 = scmp.eq.s32.totalorder %s15, 0
      %p56 = por %p54, %p55
      %p57 = scmp.ne.s32.totalorder %s49, %s51
      %p58 = scmp.eq.s32.totalorder %s20, 1
      %p59 = por %p57, %p58
      %p60 = scmp.ne.s32.totalorder %s51, %s52
      %p61 = scmp.eq.s32.totalorder %s20, 0
      %p62 = por %p60, %p61
      %p63 = scmp.ne.s32.totalorder %s51, %s52
      %p64 = scmp.eq.s32.totalorder %s21, 1
      %p65 = por %p63, %p64
      %p67 = scmp.ne.s32.totalorder %s52, %s66
      %p68 = scmp.eq.s32.totalorder %s21, 0
      %p69 = por %p67, %p68
      %s70 = ssub.s32 %s15, %s22
      %p71 = scmp.eq.s32.totalorder %s70, 0
      %s73 = sadd.s32 %s72, 1
      %s74 = scalar_select %p71, %s72, %s73
      %p77 = pneg %p71
      %p78 = scmp.eq.s32.totalorder %s15, 1
      %p79 = por %p77, %p78
      %p80 = scmp.ne.s32.totalorder %s72, %s75
      %p81 = scmp.eq.s32.totalorder %s15, 0
      %p82 = por %p80, %p81
      %p83 = scmp.ne.s32.totalorder %s72, %s75
      %p84 = scmp.eq.s32.totalorder %s20, 1
      %p85 = por %p83, %p84
      %p86 = scmp.ne.s32.totalorder %s75, %s76
      %p87 = scmp.eq.s32.totalorder %s20, 0
      %p88 = por %p86, %p87
      %p89 = scmp.ne.s32.totalorder %s75, %s76
      %p90 = scmp.eq.s32.totalorder %s21, 1
      %p91 = por %p89, %p90
      %p93 = scmp.ne.s32.totalorder %s76, %s92
      %p94 = scmp.eq.s32.totalorder %s21, 0
      %p95 = por %p93, %p94
      %p96 = scmp.le.s32.totalorder 1, %s15
      %p97 = scmp.lt.s32.totalorder %s15, 3
      %p98 = pnand %p96, %p97
      %p99 = pneg %p98
      // Predicated region
      $region9: #{tpu_custom_call.1} parent=5 // pred_check
        _
      $region10: #{tpu_custom_call.1} parent=5 // pred_check_branch
        %101 = sbr.rel (%p98) target = $region12
      $region11: #{tpu_custom_call.1} parent=5 // pred_region
        %s102 = ssub.s32 %s15, 1
        // Predicated region
        $region13: #{tpu_custom_call.1} parent=11 // pred_check
          %p103 = pneg %p62
        $region14: #{tpu_custom_call.1} parent=11 // pred_check_branch
          %105 = sbr.rel (%p103) target = $region16
        $region15: #{tpu_custom_call.1} parent=11 // pred_region
          _
        $region16: #{tpu_custom_call.1} parent=11 // pred_fallthru
          _
      $region12: #{tpu_custom_call.1} parent=5 // pred_fallthru
        _
      %p106 = scmp.lt.s32.totalorder %s15, 2
      // Predicated region
      $region17: #{tpu_custom_call.1} parent=5 // pred_check
        %p107 = pneg %p106
      $region18: #{tpu_custom_call.1} parent=5 // pred_check_branch
        %109 = sbr.rel (%p107) target = $region20
      $region19: #{tpu_custom_call.1} parent=5 // pred_region
        // Predicated region
        $region21: #{tpu_custom_call.1} parent=19 // pred_check
          %p110 = pneg %p35
        $region22: #{tpu_custom_call.1} parent=19 // pred_check_branch
          %112 = sbr.rel (%p110) target = $region24
        $region23: #{tpu_custom_call.1} parent=19 // pred_region
          %s113 = sand.u32 %s25, 1
          %s114 = scalar_lea.sflag [#allocation4], %s113
          %s115 = sand.u32 %s25, 1
          %s116 = smul.addr %s115, 4096
          %s117 = scalar_lea.vmem [#allocation3], %s116
          %s118 = smul.u32 512, %s15
          %s120 = ssub.s32 65536, 65536
          %121 = vsyncadd %s114, %s120
          %s122 = smul.addr %s118, 128
          %s123 = scalar_lea.hbm %s0, %s122
          %s124 = sshll.u32 %s117, 4
          %s125 = int_to_ptr.vmem [resolvable:$true] %s124
          %130 = dma.hbm_to_vmem [thread:$0]  %s123, 65536, %s125, %s114, 128, 128, 8
        $region24: #{tpu_custom_call.1} parent=19 // pred_fallthru
          _
      $region20: #{tpu_custom_call.1} parent=5 // pred_fallthru
        _
      %p131 = scmp.le.s32.totalorder 1, %s15
      %p132 = scmp.lt.s32.totalorder %s15, 3
      %p133 = pnand %p131, %p132
      %p134 = pneg %p133
      // Predicated region
      $region25: #{tpu_custom_call.1} parent=5 // pred_check
        _
      $region26: #{tpu_custom_call.1} parent=5 // pred_check_branch
        %136 = sbr.rel (%p133) target = $region28
      $region27: #{tpu_custom_call.1} parent=5 // pred_region
        %s137 = ssub.s32 %s15, 1
        %s138 = sand.u32 %s28, 1
        %s139 = scalar_lea.sflag [#allocation4], %s138
        %s140 = sand.u32 %s28, 1
        %s141 = smul.addr %s140, 4096
        %s142 = scalar_lea.vmem [#allocation3], %s141
        // Predicated region
        $region29: #{tpu_custom_call.1} parent=27 // pred_check
          %p143 = pneg %p41
        $region30: #{tpu_custom_call.1} parent=27 // pred_check_branch
          %145 = sbr.rel (%p143) target = $region32
        $region31: #{tpu_custom_call.1} parent=27 // pred_region
          %146 = dma.done %s139, 65536
        $region32: #{tpu_custom_call.1} parent=27 // pred_fallthru
          _
        %s147 = sand.u32 %s28, 1
        %s148 = scalar_lea.sflag [#allocation4], %s147
        %s149 = sand.u32 %s28, 1
        %s150 = smul.addr %s149, 4096
        %s151 = scalar_lea.vmem [#allocation3], %s150
        %p152 = pneg %p41
        %p153 = pneg %p38
        %p154 = pneg %p62
        %p155 = pneg %p59
        %p156 = pneg %p88
        %p157 = pneg %p85
        %s158 = sand.u32 %s75, 1
        %s159 = scalar_lea.sflag [#allocation5], %s158
        %s160 = sand.u32 %s75, 1
        %s161 = smul.addr %s160, 4096
        %s162 = scalar_lea.vmem [#allocation6], %s161
        %s163 = smul.u32 512, %s20
        %s164 = smul.u32 512, %s20
        %s165 = sld [smem:[#allocation2]]
        %s166 = smax.f32 %s165, 1e-12
        %v167 = vrcp.pop 255.0
        %s168 = vtos %v167
        %s169 = smul.f32 %s166, %s168
        %v170 = vstv %s166
        %v171 = vrcp.pop %v170
        %s172 = vtos %v171
        %s173 = smul.f32 255.0, %s172
        %v174 = vld [vmem:[%s142] sm:$0xff]
        %v175 = vld [vmem:[%s142 + $0x8] sm:$0xff]
        %v176 = vld [vmem:[%s142 + $0x10] sm:$0xff]
        %v177 = vld [vmem:[%s142 + $0x18] sm:$0xff]
        %v178 = vld [vmem:[%s142 + $0x20] sm:$0xff]
        %v179 = vld [vmem:[%s142 + $0x28] sm:$0xff]
        %v180 = vld [vmem:[%s142 + $0x30] sm:$0xff]
        %v181 = vld [vmem:[%s142 + $0x38] sm:$0xff]
        %v182 = vld [vmem:[%s142 + $0x40] sm:$0xff]
        %v183 = vld [vmem:[%s142 + $0x48] sm:$0xff]
        %v184 = vld [vmem:[%s142 + $0x50] sm:$0xff]
        %v185 = vld [vmem:[%s142 + $0x58] sm:$0xff]
        %v186 = vld [vmem:[%s142 + $0x60] sm:$0xff]
        %v187 = vld [vmem:[%s142 + $0x68] sm:$0xff]
        %v188 = vld [vmem:[%s142 + $0x70] sm:$0xff]
        %v189 = vld [vmem:[%s142 + $0x78] sm:$0xff]
        %v190 = vld [vmem:[%s142 + $0x80] sm:$0xff]
        %v191 = vld [vmem:[%s142 + $0x88] sm:$0xff]
        %v192 = vld [vmem:[%s142 + $0x90] sm:$0xff]
        %v193 = vld [vmem:[%s142 + $0x98] sm:$0xff]
        %v194 = vld [vmem:[%s142 + $0xa0] sm:$0xff]
        %v195 = vld [vmem:[%s142 + $0xa8] sm:$0xff]
        %v196 = vld [vmem:[%s142 + $0xb0] sm:$0xff]
        %v197 = vld [vmem:[%s142 + $0xb8] sm:$0xff]
        %v198 = vld [vmem:[%s142 + $0xc0] sm:$0xff]
        %v199 = vld [vmem:[%s142 + $0xc8] sm:$0xff]
        %v200 = vld [vmem:[%s142 + $0xd0] sm:$0xff]
        %v201 = vld [vmem:[%s142 + $0xd8] sm:$0xff]
        %v202 = vld [vmem:[%s142 + $0xe0] sm:$0xff]
        %v203 = vld [vmem:[%s142 + $0xe8] sm:$0xff]
        %v204 = vld [vmem:[%s142 + $0xf0] sm:$0xff]
        %v205 = vld [vmem:[%s142 + $0xf8] sm:$0xff]
        %v206 = vld [vmem:[%s142 + $0x100] sm:$0xff]
        %v207 = vld [vmem:[%s142 + $0x108] sm:$0xff]
        %v208 = vld [vmem:[%s142 + $0x110] sm:$0xff]
        %v209 = vld [vmem:[%s142 + $0x118] sm:$0xff]
        %v210 = vld [vmem:[%s142 + $0x120] sm:$0xff]
        %v211 = vld [vmem:[%s142 + $0x128] sm:$0xff]
        %v212 = vld [vmem:[%s142 + $0x130] sm:$0xff]
        %v213 = vld [vmem:[%s142 + $0x138] sm:$0xff]
        %v214 = vld [vmem:[%s142 + $0x140] sm:$0xff]
        %v215 = vld [vmem:[%s142 + $0x148] sm:$0xff]
        %v216 = vld [vmem:[%s142 + $0x150] sm:$0xff]
        %v217 = vld [vmem:[%s142 + $0x158] sm:$0xff]
        %v218 = vld [vmem:[%s142 + $0x160] sm:$0xff]
        %v219 = vld [vmem:[%s142 + $0x168] sm:$0xff]
        %v220 = vld [vmem:[%s142 + $0x170] sm:$0xff]
        %v221 = vld [vmem:[%s142 + $0x178] sm:$0xff]
        %v222 = vld [vmem:[%s142 + $0x180] sm:$0xff]
        %v223 = vld [vmem:[%s142 + $0x188] sm:$0xff]
        %v224 = vld [vmem:[%s142 + $0x190] sm:$0xff]
        %v225 = vld [vmem:[%s142 + $0x198] sm:$0xff]
        %v226 = vld [vmem:[%s142 + $0x1a0] sm:$0xff]
        %v227 = vld [vmem:[%s142 + $0x1a8] sm:$0xff]
        %v228 = vld [vmem:[%s142 + $0x1b0] sm:$0xff]
        %v229 = vld [vmem:[%s142 + $0x1b8] sm:$0xff]
        %v230 = vld [vmem:[%s142 + $0x1c0] sm:$0xff]
        %v231 = vld [vmem:[%s142 + $0x1c8] sm:$0xff]
        %v232 = vld [vmem:[%s142 + $0x1d0] sm:$0xff]
        %v233 = vld [vmem:[%s142 + $0x1d8] sm:$0xff]
        %v234 = vld [vmem:[%s142 + $0x1e0] sm:$0xff]
        %v235 = vld [vmem:[%s142 + $0x1e8] sm:$0xff]
        %v236 = vld [vmem:[%s142 + $0x1f0] sm:$0xff]
        %v237 = vld [vmem:[%s142 + $0x1f8] sm:$0xff]
        %v238 = vld [vmem:[%s142 + $0x200] sm:$0xff]
        %v239 = vld [vmem:[%s142 + $0x208] sm:$0xff]
        %v240 = vld [vmem:[%s142 + $0x210] sm:$0xff]
        %v241 = vld [vmem:[%s142 + $0x218] sm:$0xff]
        %v242 = vld [vmem:[%s142 + $0x220] sm:$0xff]
        %v243 = vld [vmem:[%s142 + $0x228] sm:$0xff]
        %v244 = vld [vmem:[%s142 + $0x230] sm:$0xff]
        %v245 = vld [vmem:[%s142 + $0x238] sm:$0xff]
        %v246 = vld [vmem:[%s142 + $0x240] sm:$0xff]
        %v247 = vld [vmem:[%s142 + $0x248] sm:$0xff]
        %v248 = vld [vmem:[%s142 + $0x250] sm:$0xff]
        %v249 = vld [vmem:[%s142 + $0x258] sm:$0xff]
        %v250 = vld [vmem:[%s142 + $0x260] sm:$0xff]
        %v251 = vld [vmem:[%s142 + $0x268] sm:$0xff]
        %v252 = vld [vmem:[%s142 + $0x270] sm:$0xff]
        %v253 = vld [vmem:[%s142 + $0x278] sm:$0xff]
        %v254 = vld [vmem:[%s142 + $0x280] sm:$0xff]
        %v255 = vld [vmem:[%s142 + $0x288] sm:$0xff]
        %v256 = vld [vmem:[%s142 + $0x290] sm:$0xff]
        %v257 = vld [vmem:[%s142 + $0x298] sm:$0xff]
        %v258 = vld [vmem:[%s142 + $0x2a0] sm:$0xff]
        %v259 = vld [vmem:[%s142 + $0x2a8] sm:$0xff]
        %v260 = vld [vmem:[%s142 + $0x2b0] sm:$0xff]
        %v261 = vld [vmem:[%s142 + $0x2b8] sm:$0xff]
        %v262 = vld [vmem:[%s142 + $0x2c0] sm:$0xff]
        %v263 = vld [vmem:[%s142 + $0x2c8] sm:$0xff]
        %v264 = vld [vmem:[%s142 + $0x2d0] sm:$0xff]
        %v265 = vld [vmem:[%s142 + $0x2d8] sm:$0xff]
        %v266 = vld [vmem:[%s142 + $0x2e0] sm:$0xff]
        %v267 = vld [vmem:[%s142 + $0x2e8] sm:$0xff]
        %v268 = vld [vmem:[%s142 + $0x2f0] sm:$0xff]
        %v269 = vld [vmem:[%s142 + $0x2f8] sm:$0xff]
        %v270 = vld [vmem:[%s142 + $0x300] sm:$0xff]
        %v271 = vld [vmem:[%s142 + $0x308] sm:$0xff]
        %v272 = vld [vmem:[%s142 + $0x310] sm:$0xff]
        %v273 = vld [vmem:[%s142 + $0x318] sm:$0xff]
        %v274 = vld [vmem:[%s142 + $0x320] sm:$0xff]
        %v275 = vld [vmem:[%s142 + $0x328] sm:$0xff]
        %v276 = vld [vmem:[%s142 + $0x330] sm:$0xff]
        %v277 = vld [vmem:[%s142 + $0x338] sm:$0xff]
        %v278 = vld [vmem:[%s142 + $0x340] sm:$0xff]
        %v279 = vld [vmem:[%s142 + $0x348] sm:$0xff]
        %v280 = vld [vmem:[%s142 + $0x350] sm:$0xff]
        %v281 = vld [vmem:[%s142 + $0x358] sm:$0xff]
        %v282 = vld [vmem:[%s142 + $0x360] sm:$0xff]
        %v283 = vld [vmem:[%s142 + $0x368] sm:$0xff]
        %v284 = vld [vmem:[%s142 + $0x370] sm:$0xff]
        %v285 = vld [vmem:[%s142 + $0x378] sm:$0xff]
        %v286 = vld [vmem:[%s142 + $0x380] sm:$0xff]
        %v287 = vld [vmem:[%s142 + $0x388] sm:$0xff]
        %v288 = vld [vmem:[%s142 + $0x390] sm:$0xff]
        %v289 = vld [vmem:[%s142 + $0x398] sm:$0xff]
        %v290 = vld [vmem:[%s142 + $0x3a0] sm:$0xff]
        %v291 = vld [vmem:[%s142 + $0x3a8] sm:$0xff]
        %v292 = vld [vmem:[%s142 + $0x3b0] sm:$0xff]
        %v293 = vld [vmem:[%s142 + $0x3b8] sm:$0xff]
        %v294 = vld [vmem:[%s142 + $0x3c0] sm:$0xff]
        %v295 = vld [vmem:[%s142 + $0x3c8] sm:$0xff]
        %v296 = vld [vmem:[%s142 + $0x3d0] sm:$0xff]
        %v297 = vld [vmem:[%s142 + $0x3d8] sm:$0xff]
        %v298 = vld [vmem:[%s142 + $0x3e0] sm:$0xff]
        %v299 = vld [vmem:[%s142 + $0x3e8] sm:$0xff]
        %v300 = vld [vmem:[%s142 + $0x3f0] sm:$0xff]
        %v301 = vld [vmem:[%s142 + $0x3f8] sm:$0xff]
        %v302 = vld [vmem:[%s142 + $0x400] sm:$0xff]
        %v303 = vld [vmem:[%s142 + $0x408] sm:$0xff]
        %v304 = vld [vmem:[%s142 + $0x410] sm:$0xff]
        %v305 = vld [vmem:[%s142 + $0x418] sm:$0xff]
        %v306 = vld [vmem:[%s142 + $0x420] sm:$0xff]
        %v307 = vld [vmem:[%s142 + $0x428] sm:$0xff]
        %v308 = vld [vmem:[%s142 + $0x430] sm:$0xff]
        %v309 = vld [vmem:[%s142 + $0x438] sm:$0xff]
        %v310 = vld [vmem:[%s142 + $0x440] sm:$0xff]
        %v311 = vld [vmem:[%s142 + $0x448] sm:$0xff]
        %v312 = vld [vmem:[%s142 + $0x450] sm:$0xff]
        %v313 = vld [vmem:[%s142 + $0x458] sm:$0xff]
        %v314 = vld [vmem:[%s142 + $0x460] sm:$0xff]
        %v315 = vld [vmem:[%s142 + $0x468] sm:$0xff]
        %v316 = vld [vmem:[%s142 + $0x470] sm:$0xff]
        %v317 = vld [vmem:[%s142 + $0x478] sm:$0xff]
        %v318 = vld [vmem:[%s142 + $0x480] sm:$0xff]
        %v319 = vld [vmem:[%s142 + $0x488] sm:$0xff]
        %v320 = vld [vmem:[%s142 + $0x490] sm:$0xff]
        %v321 = vld [vmem:[%s142 + $0x498] sm:$0xff]
        %v322 = vld [vmem:[%s142 + $0x4a0] sm:$0xff]
        %v323 = vld [vmem:[%s142 + $0x4a8] sm:$0xff]
        %v324 = vld [vmem:[%s142 + $0x4b0] sm:$0xff]
        %v325 = vld [vmem:[%s142 + $0x4b8] sm:$0xff]
        %v326 = vld [vmem:[%s142 + $0x4c0] sm:$0xff]
        %v327 = vld [vmem:[%s142 + $0x4c8] sm:$0xff]
        %v328 = vld [vmem:[%s142 + $0x4d0] sm:$0xff]
        %v329 = vld [vmem:[%s142 + $0x4d8] sm:$0xff]
        %v330 = vld [vmem:[%s142 + $0x4e0] sm:$0xff]
        %v331 = vld [vmem:[%s142 + $0x4e8] sm:$0xff]
        %v332 = vld [vmem:[%s142 + $0x4f0] sm:$0xff]
        %v333 = vld [vmem:[%s142 + $0x4f8] sm:$0xff]
        %v334 = vld [vmem:[%s142 + $0x500] sm:$0xff]
        %v335 = vld [vmem:[%s142 + $0x508] sm:$0xff]
        %v336 = vld [vmem:[%s142 + $0x510] sm:$0xff]
        %v337 = vld [vmem:[%s142 + $0x518] sm:$0xff]
        %v338 = vld [vmem:[%s142 + $0x520] sm:$0xff]
        %v339 = vld [vmem:[%s142 + $0x528] sm:$0xff]
        %v340 = vld [vmem:[%s142 + $0x530] sm:$0xff]
        %v341 = vld [vmem:[%s142 + $0x538] sm:$0xff]
        %v342 = vld [vmem:[%s142 + $0x540] sm:$0xff]
        %v343 = vld [vmem:[%s142 + $0x548] sm:$0xff]
        %v344 = vld [vmem:[%s142 + $0x550] sm:$0xff]
        %v345 = vld [vmem:[%s142 + $0x558] sm:$0xff]
        %v346 = vld [vmem:[%s142 + $0x560] sm:$0xff]
        %v347 = vld [vmem:[%s142 + $0x568] sm:$0xff]
        %v348 = vld [vmem:[%s142 + $0x570] sm:$0xff]
        %v349 = vld [vmem:[%s142 + $0x578] sm:$0xff]
        %v350 = vld [vmem:[%s142 + $0x580] sm:$0xff]
        %v351 = vld [vmem:[%s142 + $0x588] sm:$0xff]
        %v352 = vld [vmem:[%s142 + $0x590] sm:$0xff]
        %v353 = vld [vmem:[%s142 + $0x598] sm:$0xff]
        %v354 = vld [vmem:[%s142 + $0x5a0] sm:$0xff]
        %v355 = vld [vmem:[%s142 + $0x5a8] sm:$0xff]
        %v356 = vld [vmem:[%s142 + $0x5b0] sm:$0xff]
        %v357 = vld [vmem:[%s142 + $0x5b8] sm:$0xff]
        %v358 = vld [vmem:[%s142 + $0x5c0] sm:$0xff]
        %v359 = vld [vmem:[%s142 + $0x5c8] sm:$0xff]
        %v360 = vld [vmem:[%s142 + $0x5d0] sm:$0xff]
        %v361 = vld [vmem:[%s142 + $0x5d8] sm:$0xff]
        %v362 = vld [vmem:[%s142 + $0x5e0] sm:$0xff]
        %v363 = vld [vmem:[%s142 + $0x5e8] sm:$0xff]
        %v364 = vld [vmem:[%s142 + $0x5f0] sm:$0xff]
        %v365 = vld [vmem:[%s142 + $0x5f8] sm:$0xff]
        %v366 = vld [vmem:[%s142 + $0x600] sm:$0xff]
        %v367 = vld [vmem:[%s142 + $0x608] sm:$0xff]
        %v368 = vld [vmem:[%s142 + $0x610] sm:$0xff]
        %v369 = vld [vmem:[%s142 + $0x618] sm:$0xff]
        %v370 = vld [vmem:[%s142 + $0x620] sm:$0xff]
        %v371 = vld [vmem:[%s142 + $0x628] sm:$0xff]
        %v372 = vld [vmem:[%s142 + $0x630] sm:$0xff]
        %v373 = vld [vmem:[%s142 + $0x638] sm:$0xff]
        %v374 = vld [vmem:[%s142 + $0x640] sm:$0xff]
        %v375 = vld [vmem:[%s142 + $0x648] sm:$0xff]
        %v376 = vld [vmem:[%s142 + $0x650] sm:$0xff]
        %v377 = vld [vmem:[%s142 + $0x658] sm:$0xff]
        %v378 = vld [vmem:[%s142 + $0x660] sm:$0xff]
        %v379 = vld [vmem:[%s142 + $0x668] sm:$0xff]
        %v380 = vld [vmem:[%s142 + $0x670] sm:$0xff]
        %v381 = vld [vmem:[%s142 + $0x678] sm:$0xff]
        %v382 = vld [vmem:[%s142 + $0x680] sm:$0xff]
        %v383 = vld [vmem:[%s142 + $0x688] sm:$0xff]
        %v384 = vld [vmem:[%s142 + $0x690] sm:$0xff]
        %v385 = vld [vmem:[%s142 + $0x698] sm:$0xff]
        %v386 = vld [vmem:[%s142 + $0x6a0] sm:$0xff]
        %v387 = vld [vmem:[%s142 + $0x6a8] sm:$0xff]
        %v388 = vld [vmem:[%s142 + $0x6b0] sm:$0xff]
        %v389 = vld [vmem:[%s142 + $0x6b8] sm:$0xff]
        %v390 = vld [vmem:[%s142 + $0x6c0] sm:$0xff]
        %v391 = vld [vmem:[%s142 + $0x6c8] sm:$0xff]
        %v392 = vld [vmem:[%s142 + $0x6d0] sm:$0xff]
        %v393 = vld [vmem:[%s142 + $0x6d8] sm:$0xff]
        %v394 = vld [vmem:[%s142 + $0x6e0] sm:$0xff]
        %v395 = vld [vmem:[%s142 + $0x6e8] sm:$0xff]
        %v396 = vld [vmem:[%s142 + $0x6f0] sm:$0xff]
        %v397 = vld [vmem:[%s142 + $0x6f8] sm:$0xff]
        %v398 = vld [vmem:[%s142 + $0x700] sm:$0xff]
        %v399 = vld [vmem:[%s142 + $0x708] sm:$0xff]
        %v400 = vld [vmem:[%s142 + $0x710] sm:$0xff]
        %v401 = vld [vmem:[%s142 + $0x718] sm:$0xff]
        %v402 = vld [vmem:[%s142 + $0x720] sm:$0xff]
        %v403 = vld [vmem:[%s142 + $0x728] sm:$0xff]
        %v404 = vld [vmem:[%s142 + $0x730] sm:$0xff]
        %v405 = vld [vmem:[%s142 + $0x738] sm:$0xff]
        %v406 = vld [vmem:[%s142 + $0x740] sm:$0xff]
        %v407 = vld [vmem:[%s142 + $0x748] sm:$0xff]
        %v408 = vld [vmem:[%s142 + $0x750] sm:$0xff]
        %v409 = vld [vmem:[%s142 + $0x758] sm:$0xff]
        %v410 = vld [vmem:[%s142 + $0x760] sm:$0xff]
        %v411 = vld [vmem:[%s142 + $0x768] sm:$0xff]
        %v412 = vld [vmem:[%s142 + $0x770] sm:$0xff]
        %v413 = vld [vmem:[%s142 + $0x778] sm:$0xff]
        %v414 = vld [vmem:[%s142 + $0x780] sm:$0xff]
        %v415 = vld [vmem:[%s142 + $0x788] sm:$0xff]
        %v416 = vld [vmem:[%s142 + $0x790] sm:$0xff]
        %v417 = vld [vmem:[%s142 + $0x798] sm:$0xff]
        %v418 = vld [vmem:[%s142 + $0x7a0] sm:$0xff]
        %v419 = vld [vmem:[%s142 + $0x7a8] sm:$0xff]
        %v420 = vld [vmem:[%s142 + $0x7b0] sm:$0xff]
        %v421 = vld [vmem:[%s142 + $0x7b8] sm:$0xff]
        %v422 = vld [vmem:[%s142 + $0x7c0] sm:$0xff]
        %v423 = vld [vmem:[%s142 + $0x7c8] sm:$0xff]
        %v424 = vld [vmem:[%s142 + $0x7d0] sm:$0xff]
        %v425 = vld [vmem:[%s142 + $0x7d8] sm:$0xff]
        %v426 = vld [vmem:[%s142 + $0x7e0] sm:$0xff]
        %v427 = vld [vmem:[%s142 + $0x7e8] sm:$0xff]
        %v428 = vld [vmem:[%s142 + $0x7f0] sm:$0xff]
        %v429 = vld [vmem:[%s142 + $0x7f8] sm:$0xff]
        %v430 = vld [vmem:[%s142 + $0x800] sm:$0xff]
        %v431 = vld [vmem:[%s142 + $0x808] sm:$0xff]
        %v432 = vld [vmem:[%s142 + $0x810] sm:$0xff]
        %v433 = vld [vmem:[%s142 + $0x818] sm:$0xff]
        %v434 = vld [vmem:[%s142 + $0x820] sm:$0xff]
        %v435 = vld [vmem:[%s142 + $0x828] sm:$0xff]
        %v436 = vld [vmem:[%s142 + $0x830] sm:$0xff]
        %v437 = vld [vmem:[%s142 + $0x838] sm:$0xff]
        %v438 = vld [vmem:[%s142 + $0x840] sm:$0xff]
        %v439 = vld [vmem:[%s142 + $0x848] sm:$0xff]
        %v440 = vld [vmem:[%s142 + $0x850] sm:$0xff]
        %v441 = vld [vmem:[%s142 + $0x858] sm:$0xff]
        %v442 = vld [vmem:[%s142 + $0x860] sm:$0xff]
        %v443 = vld [vmem:[%s142 + $0x868] sm:$0xff]
        %v444 = vld [vmem:[%s142 + $0x870] sm:$0xff]
        %v445 = vld [vmem:[%s142 + $0x878] sm:$0xff]
        %v446 = vld [vmem:[%s142 + $0x880] sm:$0xff]
        %v447 = vld [vmem:[%s142 + $0x888] sm:$0xff]
        %v448 = vld [vmem:[%s142 + $0x890] sm:$0xff]
        %v449 = vld [vmem:[%s142 + $0x898] sm:$0xff]
        %v450 = vld [vmem:[%s142 + $0x8a0] sm:$0xff]
        %v451 = vld [vmem:[%s142 + $0x8a8] sm:$0xff]
        %v452 = vld [vmem:[%s142 + $0x8b0] sm:$0xff]
        %v453 = vld [vmem:[%s142 + $0x8b8] sm:$0xff]
        %v454 = vld [vmem:[%s142 + $0x8c0] sm:$0xff]
        %v455 = vld [vmem:[%s142 + $0x8c8] sm:$0xff]
        %v456 = vld [vmem:[%s142 + $0x8d0] sm:$0xff]
        %v457 = vld [vmem:[%s142 + $0x8d8] sm:$0xff]
        %v458 = vld [vmem:[%s142 + $0x8e0] sm:$0xff]
        %v459 = vld [vmem:[%s142 + $0x8e8] sm:$0xff]
        %v460 = vld [vmem:[%s142 + $0x8f0] sm:$0xff]
        %v461 = vld [vmem:[%s142 + $0x8f8] sm:$0xff]
        %v462 = vld [vmem:[%s142 + $0x900] sm:$0xff]
        %v463 = vld [vmem:[%s142 + $0x908] sm:$0xff]
        %v464 = vld [vmem:[%s142 + $0x910] sm:$0xff]
        %v465 = vld [vmem:[%s142 + $0x918] sm:$0xff]
        %v466 = vld [vmem:[%s142 + $0x920] sm:$0xff]
        %v467 = vld [vmem:[%s142 + $0x928] sm:$0xff]
        %v468 = vld [vmem:[%s142 + $0x930] sm:$0xff]
        %v469 = vld [vmem:[%s142 + $0x938] sm:$0xff]
        %v470 = vld [vmem:[%s142 + $0x940] sm:$0xff]
        %v471 = vld [vmem:[%s142 + $0x948] sm:$0xff]
        %v472 = vld [vmem:[%s142 + $0x950] sm:$0xff]
        %v473 = vld [vmem:[%s142 + $0x958] sm:$0xff]
        %v474 = vld [vmem:[%s142 + $0x960] sm:$0xff]
        %v475 = vld [vmem:[%s142 + $0x968] sm:$0xff]
        %v476 = vld [vmem:[%s142 + $0x970] sm:$0xff]
        %v477 = vld [vmem:[%s142 + $0x978] sm:$0xff]
        %v478 = vld [vmem:[%s142 + $0x980] sm:$0xff]
        %v479 = vld [vmem:[%s142 + $0x988] sm:$0xff]
        %v480 = vld [vmem:[%s142 + $0x990] sm:$0xff]
        %v481 = vld [vmem:[%s142 + $0x998] sm:$0xff]
        %v482 = vld [vmem:[%s142 + $0x9a0] sm:$0xff]
        %v483 = vld [vmem:[%s142 + $0x9a8] sm:$0xff]
        %v484 = vld [vmem:[%s142 + $0x9b0] sm:$0xff]
        %v485 = vld [vmem:[%s142 + $0x9b8] sm:$0xff]
        %v486 = vld [vmem:[%s142 + $0x9c0] sm:$0xff]
        %v487 = vld [vmem:[%s142 + $0x9c8] sm:$0xff]
        %v488 = vld [vmem:[%s142 + $0x9d0] sm:$0xff]
        %v489 = vld [vmem:[%s142 + $0x9d8] sm:$0xff]
        %v490 = vld [vmem:[%s142 + $0x9e0] sm:$0xff]
        %v491 = vld [vmem:[%s142 + $0x9e8] sm:$0xff]
        %v492 = vld [vmem:[%s142 + $0x9f0] sm:$0xff]
        %v493 = vld [vmem:[%s142 + $0x9f8] sm:$0xff]
        %v494 = vld [vmem:[%s142 + $0xa00] sm:$0xff]
        %v495 = vld [vmem:[%s142 + $0xa08] sm:$0xff]
        %v496 = vld [vmem:[%s142 + $0xa10] sm:$0xff]
        %v497 = vld [vmem:[%s142 + $0xa18] sm:$0xff]
        %v498 = vld [vmem:[%s142 + $0xa20] sm:$0xff]
        %v499 = vld [vmem:[%s142 + $0xa28] sm:$0xff]
        %v500 = vld [vmem:[%s142 + $0xa30] sm:$0xff]
        %v501 = vld [vmem:[%s142 + $0xa38] sm:$0xff]
        %v502 = vld [vmem:[%s142 + $0xa40] sm:$0xff]
        %v503 = vld [vmem:[%s142 + $0xa48] sm:$0xff]
        %v504 = vld [vmem:[%s142 + $0xa50] sm:$0xff]
        %v505 = vld [vmem:[%s142 + $0xa58] sm:$0xff]
        %v506 = vld [vmem:[%s142 + $0xa60] sm:$0xff]
        %v507 = vld [vmem:[%s142 + $0xa68] sm:$0xff]
        %v508 = vld [vmem:[%s142 + $0xa70] sm:$0xff]
        %v509 = vld [vmem:[%s142 + $0xa78] sm:$0xff]
        %v510 = vld [vmem:[%s142 + $0xa80] sm:$0xff]
        %v511 = vld [vmem:[%s142 + $0xa88] sm:$0xff]
        %v512 = vld [vmem:[%s142 + $0xa90] sm:$0xff]
        %v513 = vld [vmem:[%s142 + $0xa98] sm:$0xff]
        %v514 = vld [vmem:[%s142 + $0xaa0] sm:$0xff]
        %v515 = vld [vmem:[%s142 + $0xaa8] sm:$0xff]
        %v516 = vld [vmem:[%s142 + $0xab0] sm:$0xff]
        %v517 = vld [vmem:[%s142 + $0xab8] sm:$0xff]
        %v518 = vld [vmem:[%s142 + $0xac0] sm:$0xff]
        %v519 = vld [vmem:[%s142 + $0xac8] sm:$0xff]
        %v520 = vld [vmem:[%s142 + $0xad0] sm:$0xff]
        %v521 = vld [vmem:[%s142 + $0xad8] sm:$0xff]
        %v522 = vld [vmem:[%s142 + $0xae0] sm:$0xff]
        %v523 = vld [vmem:[%s142 + $0xae8] sm:$0xff]
        %v524 = vld [vmem:[%s142 + $0xaf0] sm:$0xff]
        %v525 = vld [vmem:[%s142 + $0xaf8] sm:$0xff]
        %v526 = vld [vmem:[%s142 + $0xb00] sm:$0xff]
        %v527 = vld [vmem:[%s142 + $0xb08] sm:$0xff]
        %v528 = vld [vmem:[%s142 + $0xb10] sm:$0xff]
        %v529 = vld [vmem:[%s142 + $0xb18] sm:$0xff]
        %v530 = vld [vmem:[%s142 + $0xb20] sm:$0xff]
        %v531 = vld [vmem:[%s142 + $0xb28] sm:$0xff]
        %v532 = vld [vmem:[%s142 + $0xb30] sm:$0xff]
        %v533 = vld [vmem:[%s142 + $0xb38] sm:$0xff]
        %v534 = vld [vmem:[%s142 + $0xb40] sm:$0xff]
        %v535 = vld [vmem:[%s142 + $0xb48] sm:$0xff]
        %v536 = vld [vmem:[%s142 + $0xb50] sm:$0xff]
        %v537 = vld [vmem:[%s142 + $0xb58] sm:$0xff]
        %v538 = vld [vmem:[%s142 + $0xb60] sm:$0xff]
        %v539 = vld [vmem:[%s142 + $0xb68] sm:$0xff]
        %v540 = vld [vmem:[%s142 + $0xb70] sm:$0xff]
        %v541 = vld [vmem:[%s142 + $0xb78] sm:$0xff]
        %v542 = vld [vmem:[%s142 + $0xb80] sm:$0xff]
        %v543 = vld [vmem:[%s142 + $0xb88] sm:$0xff]
        %v544 = vld [vmem:[%s142 + $0xb90] sm:$0xff]
        %v545 = vld [vmem:[%s142 + $0xb98] sm:$0xff]
        %v546 = vld [vmem:[%s142 + $0xba0] sm:$0xff]
        %v547 = vld [vmem:[%s142 + $0xba8] sm:$0xff]
        %v548 = vld [vmem:[%s142 + $0xbb0] sm:$0xff]
        %v549 = vld [vmem:[%s142 + $0xbb8] sm:$0xff]
        %v550 = vld [vmem:[%s142 + $0xbc0] sm:$0xff]
        %v551 = vld [vmem:[%s142 + $0xbc8] sm:$0xff]
        %v552 = vld [vmem:[%s142 + $0xbd0] sm:$0xff]
        %v553 = vld [vmem:[%s142 + $0xbd8] sm:$0xff]
        %v554 = vld [vmem:[%s142 + $0xbe0] sm:$0xff]
        %v555 = vld [vmem:[%s142 + $0xbe8] sm:$0xff]
        %v556 = vld [vmem:[%s142 + $0xbf0] sm:$0xff]
        %v557 = vld [vmem:[%s142 + $0xbf8] sm:$0xff]
        %v558 = vld [vmem:[%s142 + $0xc00] sm:$0xff]
        %v559 = vld [vmem:[%s142 + $0xc08] sm:$0xff]
        %v560 = vld [vmem:[%s142 + $0xc10] sm:$0xff]
        %v561 = vld [vmem:[%s142 + $0xc18] sm:$0xff]
        %v562 = vld [vmem:[%s142 + $0xc20] sm:$0xff]
        %v563 = vld [vmem:[%s142 + $0xc28] sm:$0xff]
        %v564 = vld [vmem:[%s142 + $0xc30] sm:$0xff]
        %v565 = vld [vmem:[%s142 + $0xc38] sm:$0xff]
        %v566 = vld [vmem:[%s142 + $0xc40] sm:$0xff]
        %v567 = vld [vmem:[%s142 + $0xc48] sm:$0xff]
        %v568 = vld [vmem:[%s142 + $0xc50] sm:$0xff]
        %v569 = vld [vmem:[%s142 + $0xc58] sm:$0xff]
        %v570 = vld [vmem:[%s142 + $0xc60] sm:$0xff]
        %v571 = vld [vmem:[%s142 + $0xc68] sm:$0xff]
        %v572 = vld [vmem:[%s142 + $0xc70] sm:$0xff]
        %v573 = vld [vmem:[%s142 + $0xc78] sm:$0xff]
        %v574 = vld [vmem:[%s142 + $0xc80] sm:$0xff]
        %v575 = vld [vmem:[%s142 + $0xc88] sm:$0xff]
        %v576 = vld [vmem:[%s142 + $0xc90] sm:$0xff]
        %v577 = vld [vmem:[%s142 + $0xc98] sm:$0xff]
        %v578 = vld [vmem:[%s142 + $0xca0] sm:$0xff]
        %v579 = vld [vmem:[%s142 + $0xca8] sm:$0xff]
        %v580 = vld [vmem:[%s142 + $0xcb0] sm:$0xff]
        %v581 = vld [vmem:[%s142 + $0xcb8] sm:$0xff]
        %v582 = vld [vmem:[%s142 + $0xcc0] sm:$0xff]
        %v583 = vld [vmem:[%s142 + $0xcc8] sm:$0xff]
        %v584 = vld [vmem:[%s142 + $0xcd0] sm:$0xff]
        %v585 = vld [vmem:[%s142 + $0xcd8] sm:$0xff]
        %v586 = vld [vmem:[%s142 + $0xce0] sm:$0xff]
        %v587 = vld [vmem:[%s142 + $0xce8] sm:$0xff]
        %v588 = vld [vmem:[%s142 + $0xcf0] sm:$0xff]
        %v589 = vld [vmem:[%s142 + $0xcf8] sm:$0xff]
        %v590 = vld [vmem:[%s142 + $0xd00] sm:$0xff]
        %v591 = vld [vmem:[%s142 + $0xd08] sm:$0xff]
        %v592 = vld [vmem:[%s142 + $0xd10] sm:$0xff]
        %v593 = vld [vmem:[%s142 + $0xd18] sm:$0xff]
        %v594 = vld [vmem:[%s142 + $0xd20] sm:$0xff]
        %v595 = vld [vmem:[%s142 + $0xd28] sm:$0xff]
        %v596 = vld [vmem:[%s142 + $0xd30] sm:$0xff]
        %v597 = vld [vmem:[%s142 + $0xd38] sm:$0xff]
        %v598 = vld [vmem:[%s142 + $0xd40] sm:$0xff]
        %v599 = vld [vmem:[%s142 + $0xd48] sm:$0xff]
        %v600 = vld [vmem:[%s142 + $0xd50] sm:$0xff]
        %v601 = vld [vmem:[%s142 + $0xd58] sm:$0xff]
        %v602 = vld [vmem:[%s142 + $0xd60] sm:$0xff]
        %v603 = vld [vmem:[%s142 + $0xd68] sm:$0xff]
        %v604 = vld [vmem:[%s142 + $0xd70] sm:$0xff]
        %v605 = vld [vmem:[%s142 + $0xd78] sm:$0xff]
        %v606 = vld [vmem:[%s142 + $0xd80] sm:$0xff]
        %v607 = vld [vmem:[%s142 + $0xd88] sm:$0xff]
        %v608 = vld [vmem:[%s142 + $0xd90] sm:$0xff]
        %v609 = vld [vmem:[%s142 + $0xd98] sm:$0xff]
        %v610 = vld [vmem:[%s142 + $0xda0] sm:$0xff]
        %v611 = vld [vmem:[%s142 + $0xda8] sm:$0xff]
        %v612 = vld [vmem:[%s142 + $0xdb0] sm:$0xff]
        %v613 = vld [vmem:[%s142 + $0xdb8] sm:$0xff]
        %v614 = vld [vmem:[%s142 + $0xdc0] sm:$0xff]
        %v615 = vld [vmem:[%s142 + $0xdc8] sm:$0xff]
        %v616 = vld [vmem:[%s142 + $0xdd0] sm:$0xff]
        %v617 = vld [vmem:[%s142 + $0xdd8] sm:$0xff]
        %v618 = vld [vmem:[%s142 + $0xde0] sm:$0xff]
        %v619 = vld [vmem:[%s142 + $0xde8] sm:$0xff]
        %v620 = vld [vmem:[%s142 + $0xdf0] sm:$0xff]
        %v621 = vld [vmem:[%s142 + $0xdf8] sm:$0xff]
        %v622 = vld [vmem:[%s142 + $0xe00] sm:$0xff]
        %v623 = vld [vmem:[%s142 + $0xe08] sm:$0xff]
        %v624 = vld [vmem:[%s142 + $0xe10] sm:$0xff]
        %v625 = vld [vmem:[%s142 + $0xe18] sm:$0xff]
        %v626 = vld [vmem:[%s142 + $0xe20] sm:$0xff]
        %v627 = vld [vmem:[%s142 + $0xe28] sm:$0xff]
        %v628 = vld [vmem:[%s142 + $0xe30] sm:$0xff]
        %v629 = vld [vmem:[%s142 + $0xe38] sm:$0xff]
        %v630 = vld [vmem:[%s142 + $0xe40] sm:$0xff]
        %v631 = vld [vmem:[%s142 + $0xe48] sm:$0xff]
        %v632 = vld [vmem:[%s142 + $0xe50] sm:$0xff]
        %v633 = vld [vmem:[%s142 + $0xe58] sm:$0xff]
        %v634 = vld [vmem:[%s142 + $0xe60] sm:$0xff]
        %v635 = vld [vmem:[%s142 + $0xe68] sm:$0xff]
        %v636 = vld [vmem:[%s142 + $0xe70] sm:$0xff]
        %v637 = vld [vmem:[%s142 + $0xe78] sm:$0xff]
        %v638 = vld [vmem:[%s142 + $0xe80] sm:$0xff]
        %v639 = vld [vmem:[%s142 + $0xe88] sm:$0xff]
        %v640 = vld [vmem:[%s142 + $0xe90] sm:$0xff]
        %v641 = vld [vmem:[%s142 + $0xe98] sm:$0xff]
        %v642 = vld [vmem:[%s142 + $0xea0] sm:$0xff]
        %v643 = vld [vmem:[%s142 + $0xea8] sm:$0xff]
        %v644 = vld [vmem:[%s142 + $0xeb0] sm:$0xff]
        %v645 = vld [vmem:[%s142 + $0xeb8] sm:$0xff]
        %v646 = vld [vmem:[%s142 + $0xec0] sm:$0xff]
        %v647 = vld [vmem:[%s142 + $0xec8] sm:$0xff]
        %v648 = vld [vmem:[%s142 + $0xed0] sm:$0xff]
        %v649 = vld [vmem:[%s142 + $0xed8] sm:$0xff]
        %v650 = vld [vmem:[%s142 + $0xee0] sm:$0xff]
        %v651 = vld [vmem:[%s142 + $0xee8] sm:$0xff]
        %v652 = vld [vmem:[%s142 + $0xef0] sm:$0xff]
        %v653 = vld [vmem:[%s142 + $0xef8] sm:$0xff]
        %v654 = vld [vmem:[%s142 + $0xf00] sm:$0xff]
        %v655 = vld [vmem:[%s142 + $0xf08] sm:$0xff]
        %v656 = vld [vmem:[%s142 + $0xf10] sm:$0xff]
        %v657 = vld [vmem:[%s142 + $0xf18] sm:$0xff]
        %v658 = vld [vmem:[%s142 + $0xf20] sm:$0xff]
        %v659 = vld [vmem:[%s142 + $0xf28] sm:$0xff]
        %v660 = vld [vmem:[%s142 + $0xf30] sm:$0xff]
        %v661 = vld [vmem:[%s142 + $0xf38] sm:$0xff]
        %v662 = vld [vmem:[%s142 + $0xf40] sm:$0xff]
        %v663 = vld [vmem:[%s142 + $0xf48] sm:$0xff]
        %v664 = vld [vmem:[%s142 + $0xf50] sm:$0xff]
        %v665 = vld [vmem:[%s142 + $0xf58] sm:$0xff]
        %v666 = vld [vmem:[%s142 + $0xf60] sm:$0xff]
        %v667 = vld [vmem:[%s142 + $0xf68] sm:$0xff]
        %v668 = vld [vmem:[%s142 + $0xf70] sm:$0xff]
        %v669 = vld [vmem:[%s142 + $0xf78] sm:$0xff]
        %v670 = vld [vmem:[%s142 + $0xf80] sm:$0xff]
        %v671 = vld [vmem:[%s142 + $0xf88] sm:$0xff]
        %v672 = vld [vmem:[%s142 + $0xf90] sm:$0xff]
        %v673 = vld [vmem:[%s142 + $0xf98] sm:$0xff]
        %v674 = vld [vmem:[%s142 + $0xfa0] sm:$0xff]
        %v675 = vld [vmem:[%s142 + $0xfa8] sm:$0xff]
        %v676 = vld [vmem:[%s142 + $0xfb0] sm:$0xff]
        %v677 = vld [vmem:[%s142 + $0xfb8] sm:$0xff]
        %v678 = vld [vmem:[%s142 + $0xfc0] sm:$0xff]
        %v679 = vld [vmem:[%s142 + $0xfc8] sm:$0xff]
        %v680 = vld [vmem:[%s142 + $0xfd0] sm:$0xff]
        %v681 = vld [vmem:[%s142 + $0xfd8] sm:$0xff]
        %v682 = vld [vmem:[%s142 + $0xfe0] sm:$0xff]
        %v683 = vld [vmem:[%s142 + $0xfe8] sm:$0xff]
        %v684 = vld [vmem:[%s142 + $0xff0] sm:$0xff]
        %v685 = vld [vmem:[%s142 + $0xff8] sm:$0xff]
        %v686 = vmax.f32 %v174, 0.0
        %v687 = vmax.f32 %v175, 0.0
        %v688 = vmax.f32 %v176, 0.0
        %v689 = vmax.f32 %v177, 0.0
        %v690 = vmax.f32 %v178, 0.0
        %v691 = vmax.f32 %v179, 0.0
        %v692 = vmax.f32 %v180, 0.0
        %v693 = vmax.f32 %v181, 0.0
        %v694 = vmax.f32 %v182, 0.0
        %v695 = vmax.f32 %v183, 0.0
        %v696 = vmax.f32 %v184, 0.0
        %v697 = vmax.f32 %v185, 0.0
        %v698 = vmax.f32 %v186, 0.0
        %v699 = vmax.f32 %v187, 0.0
        %v700 = vmax.f32 %v188, 0.0
        %v701 = vmax.f32 %v189, 0.0
        %v702 = vmax.f32 %v190, 0.0
        %v703 = vmax.f32 %v191, 0.0
        %v704 = vmax.f32 %v192, 0.0
        %v705 = vmax.f32 %v193, 0.0
        %v706 = vmax.f32 %v194, 0.0
        %v707 = vmax.f32 %v195, 0.0
        %v708 = vmax.f32 %v196, 0.0
        %v709 = vmax.f32 %v197, 0.0
        %v710 = vmax.f32 %v198, 0.0
        %v711 = vmax.f32 %v199, 0.0
        %v712 = vmax.f32 %v200, 0.0
        %v713 = vmax.f32 %v201, 0.0
        %v714 = vmax.f32 %v202, 0.0
        %v715 = vmax.f32 %v203, 0.0
        %v716 = vmax.f32 %v204, 0.0
        %v717 = vmax.f32 %v205, 0.0
        %v718 = vmax.f32 %v206, 0.0
        %v719 = vmax.f32 %v207, 0.0
        %v720 = vmax.f32 %v208, 0.0
        %v721 = vmax.f32 %v209, 0.0
        %v722 = vmax.f32 %v210, 0.0
        %v723 = vmax.f32 %v211, 0.0
        %v724 = vmax.f32 %v212, 0.0
        %v725 = vmax.f32 %v213, 0.0
        %v726 = vmax.f32 %v214, 0.0
        %v727 = vmax.f32 %v215, 0.0
        %v728 = vmax.f32 %v216, 0.0
        %v729 = vmax.f32 %v217, 0.0
        %v730 = vmax.f32 %v218, 0.0
        %v731 = vmax.f32 %v219, 0.0
        %v732 = vmax.f32 %v220, 0.0
        %v733 = vmax.f32 %v221, 0.0
        %v734 = vmax.f32 %v222, 0.0
        %v735 = vmax.f32 %v223, 0.0
        %v736 = vmax.f32 %v224, 0.0
        %v737 = vmax.f32 %v225, 0.0
        %v738 = vmax.f32 %v226, 0.0
        %v739 = vmax.f32 %v227, 0.0
        %v740 = vmax.f32 %v228, 0.0
        %v741 = vmax.f32 %v229, 0.0
        %v742 = vmax.f32 %v230, 0.0
        %v743 = vmax.f32 %v231, 0.0
        %v744 = vmax.f32 %v232, 0.0
        %v745 = vmax.f32 %v233, 0.0
        %v746 = vmax.f32 %v234, 0.0
        %v747 = vmax.f32 %v235, 0.0
        %v748 = vmax.f32 %v236, 0.0
        %v749 = vmax.f32 %v237, 0.0
        %v750 = vmax.f32 %v238, 0.0
        %v751 = vmax.f32 %v239, 0.0
        %v752 = vmax.f32 %v240, 0.0
        %v753 = vmax.f32 %v241, 0.0
        %v754 = vmax.f32 %v242, 0.0
        %v755 = vmax.f32 %v243, 0.0
        %v756 = vmax.f32 %v244, 0.0
        %v757 = vmax.f32 %v245, 0.0
        %v758 = vmax.f32 %v246, 0.0
        %v759 = vmax.f32 %v247, 0.0
        %v760 = vmax.f32 %v248, 0.0
        %v761 = vmax.f32 %v249, 0.0
        %v762 = vmax.f32 %v250, 0.0
        %v763 = vmax.f32 %v251, 0.0
        %v764 = vmax.f32 %v252, 0.0
        %v765 = vmax.f32 %v253, 0.0
        %v766 = vmax.f32 %v254, 0.0
        %v767 = vmax.f32 %v255, 0.0
        %v768 = vmax.f32 %v256, 0.0
        %v769 = vmax.f32 %v257, 0.0
        %v770 = vmax.f32 %v258, 0.0
        %v771 = vmax.f32 %v259, 0.0
        %v772 = vmax.f32 %v260, 0.0
        %v773 = vmax.f32 %v261, 0.0
        %v774 = vmax.f32 %v262, 0.0
        %v775 = vmax.f32 %v263, 0.0
        %v776 = vmax.f32 %v264, 0.0
        %v777 = vmax.f32 %v265, 0.0
        %v778 = vmax.f32 %v266, 0.0
        %v779 = vmax.f32 %v267, 0.0
        %v780 = vmax.f32 %v268, 0.0
        %v781 = vmax.f32 %v269, 0.0
        %v782 = vmax.f32 %v270, 0.0
        %v783 = vmax.f32 %v271, 0.0
        %v784 = vmax.f32 %v272, 0.0
        %v785 = vmax.f32 %v273, 0.0
        %v786 = vmax.f32 %v274, 0.0
        %v787 = vmax.f32 %v275, 0.0
        %v788 = vmax.f32 %v276, 0.0
        %v789 = vmax.f32 %v277, 0.0
        %v790 = vmax.f32 %v278, 0.0
        %v791 = vmax.f32 %v279, 0.0
        %v792 = vmax.f32 %v280, 0.0
        %v793 = vmax.f32 %v281, 0.0
        %v794 = vmax.f32 %v282, 0.0
        %v795 = vmax.f32 %v283, 0.0
        %v796 = vmax.f32 %v284, 0.0
        %v797 = vmax.f32 %v285, 0.0
        %v798 = vmax.f32 %v286, 0.0
        %v799 = vmax.f32 %v287, 0.0
        %v800 = vmax.f32 %v288, 0.0
        %v801 = vmax.f32 %v289, 0.0
        %v802 = vmax.f32 %v290, 0.0
        %v803 = vmax.f32 %v291, 0.0
        %v804 = vmax.f32 %v292, 0.0
        %v805 = vmax.f32 %v293, 0.0
        %v806 = vmax.f32 %v294, 0.0
        %v807 = vmax.f32 %v295, 0.0
        %v808 = vmax.f32 %v296, 0.0
        %v809 = vmax.f32 %v297, 0.0
        %v810 = vmax.f32 %v298, 0.0
        %v811 = vmax.f32 %v299, 0.0
        %v812 = vmax.f32 %v300, 0.0
        %v813 = vmax.f32 %v301, 0.0
        %v814 = vmax.f32 %v302, 0.0
        %v815 = vmax.f32 %v303, 0.0
        %v816 = vmax.f32 %v304, 0.0
        %v817 = vmax.f32 %v305, 0.0
        %v818 = vmax.f32 %v306, 0.0
        %v819 = vmax.f32 %v307, 0.0
        %v820 = vmax.f32 %v308, 0.0
        %v821 = vmax.f32 %v309, 0.0
        %v822 = vmax.f32 %v310, 0.0
        %v823 = vmax.f32 %v311, 0.0
        %v824 = vmax.f32 %v312, 0.0
        %v825 = vmax.f32 %v313, 0.0
        %v826 = vmax.f32 %v314, 0.0
        %v827 = vmax.f32 %v315, 0.0
        %v828 = vmax.f32 %v316, 0.0
        %v829 = vmax.f32 %v317, 0.0
        %v830 = vmax.f32 %v318, 0.0
        %v831 = vmax.f32 %v319, 0.0
        %v832 = vmax.f32 %v320, 0.0
        %v833 = vmax.f32 %v321, 0.0
        %v834 = vmax.f32 %v322, 0.0
        %v835 = vmax.f32 %v323, 0.0
        %v836 = vmax.f32 %v324, 0.0
        %v837 = vmax.f32 %v325, 0.0
        %v838 = vmax.f32 %v326, 0.0
        %v839 = vmax.f32 %v327, 0.0
        %v840 = vmax.f32 %v328, 0.0
        %v841 = vmax.f32 %v329, 0.0
        %v842 = vmax.f32 %v330, 0.0
        %v843 = vmax.f32 %v331, 0.0
        %v844 = vmax.f32 %v332, 0.0
        %v845 = vmax.f32 %v333, 0.0
        %v846 = vmax.f32 %v334, 0.0
        %v847 = vmax.f32 %v335, 0.0
        %v848 = vmax.f32 %v336, 0.0
        %v849 = vmax.f32 %v337, 0.0
        %v850 = vmax.f32 %v338, 0.0
        %v851 = vmax.f32 %v339, 0.0
        %v852 = vmax.f32 %v340, 0.0
        %v853 = vmax.f32 %v341, 0.0
        %v854 = vmax.f32 %v342, 0.0
        %v855 = vmax.f32 %v343, 0.0
        %v856 = vmax.f32 %v344, 0.0
        %v857 = vmax.f32 %v345, 0.0
        %v858 = vmax.f32 %v346, 0.0
        %v859 = vmax.f32 %v347, 0.0
        %v860 = vmax.f32 %v348, 0.0
        %v861 = vmax.f32 %v349, 0.0
        %v862 = vmax.f32 %v350, 0.0
        %v863 = vmax.f32 %v351, 0.0
        %v864 = vmax.f32 %v352, 0.0
        %v865 = vmax.f32 %v353, 0.0
        %v866 = vmax.f32 %v354, 0.0
        %v867 = vmax.f32 %v355, 0.0
        %v868 = vmax.f32 %v356, 0.0
        %v869 = vmax.f32 %v357, 0.0
        %v870 = vmax.f32 %v358, 0.0
        %v871 = vmax.f32 %v359, 0.0
        %v872 = vmax.f32 %v360, 0.0
        %v873 = vmax.f32 %v361, 0.0
        %v874 = vmax.f32 %v362, 0.0
        %v875 = vmax.f32 %v363, 0.0
        %v876 = vmax.f32 %v364, 0.0
        %v877 = vmax.f32 %v365, 0.0
        %v878 = vmax.f32 %v366, 0.0
        %v879 = vmax.f32 %v367, 0.0
        %v880 = vmax.f32 %v368, 0.0
        %v881 = vmax.f32 %v369, 0.0
        %v882 = vmax.f32 %v370, 0.0
        %v883 = vmax.f32 %v371, 0.0
        %v884 = vmax.f32 %v372, 0.0
        %v885 = vmax.f32 %v373, 0.0
        %v886 = vmax.f32 %v374, 0.0
        %v887 = vmax.f32 %v375, 0.0
        %v888 = vmax.f32 %v376, 0.0
        %v889 = vmax.f32 %v377, 0.0
        %v890 = vmax.f32 %v378, 0.0
        %v891 = vmax.f32 %v379, 0.0
        %v892 = vmax.f32 %v380, 0.0
        %v893 = vmax.f32 %v381, 0.0
        %v894 = vmax.f32 %v382, 0.0
        %v895 = vmax.f32 %v383, 0.0
        %v896 = vmax.f32 %v384, 0.0
        %v897 = vmax.f32 %v385, 0.0
        %v898 = vmax.f32 %v386, 0.0
        %v899 = vmax.f32 %v387, 0.0
        %v900 = vmax.f32 %v388, 0.0
        %v901 = vmax.f32 %v389, 0.0
        %v902 = vmax.f32 %v390, 0.0
        %v903 = vmax.f32 %v391, 0.0
        %v904 = vmax.f32 %v392, 0.0
        %v905 = vmax.f32 %v393, 0.0
        %v906 = vmax.f32 %v394, 0.0
        %v907 = vmax.f32 %v395, 0.0
        %v908 = vmax.f32 %v396, 0.0
        %v909 = vmax.f32 %v397, 0.0
        %v910 = vmax.f32 %v398, 0.0
        %v911 = vmax.f32 %v399, 0.0
        %v912 = vmax.f32 %v400, 0.0
        %v913 = vmax.f32 %v401, 0.0
        %v914 = vmax.f32 %v402, 0.0
        %v915 = vmax.f32 %v403, 0.0
        %v916 = vmax.f32 %v404, 0.0
        %v917 = vmax.f32 %v405, 0.0
        %v918 = vmax.f32 %v406, 0.0
        %v919 = vmax.f32 %v407, 0.0
        %v920 = vmax.f32 %v408, 0.0
        %v921 = vmax.f32 %v409, 0.0
        %v922 = vmax.f32 %v410, 0.0
        %v923 = vmax.f32 %v411, 0.0
        %v924 = vmax.f32 %v412, 0.0
        %v925 = vmax.f32 %v413, 0.0
        %v926 = vmax.f32 %v414, 0.0
        %v927 = vmax.f32 %v415, 0.0
        %v928 = vmax.f32 %v416, 0.0
        %v929 = vmax.f32 %v417, 0.0
        %v930 = vmax.f32 %v418, 0.0
        %v931 = vmax.f32 %v419, 0.0
        %v932 = vmax.f32 %v420, 0.0
        %v933 = vmax.f32 %v421, 0.0
        %v934 = vmax.f32 %v422, 0.0
        %v935 = vmax.f32 %v423, 0.0
        %v936 = vmax.f32 %v424, 0.0
        %v937 = vmax.f32 %v425, 0.0
        %v938 = vmax.f32 %v426, 0.0
        %v939 = vmax.f32 %v427, 0.0
        %v940 = vmax.f32 %v428, 0.0
        %v941 = vmax.f32 %v429, 0.0
        %v942 = vmax.f32 %v430, 0.0
        %v943 = vmax.f32 %v431, 0.0
        %v944 = vmax.f32 %v432, 0.0
        %v945 = vmax.f32 %v433, 0.0
        %v946 = vmax.f32 %v434, 0.0
        %v947 = vmax.f32 %v435, 0.0
        %v948 = vmax.f32 %v436, 0.0
        %v949 = vmax.f32 %v437, 0.0
        %v950 = vmax.f32 %v438, 0.0
        %v951 = vmax.f32 %v439, 0.0
        %v952 = vmax.f32 %v440, 0.0
        %v953 = vmax.f32 %v441, 0.0
        %v954 = vmax.f32 %v442, 0.0
        %v955 = vmax.f32 %v443, 0.0
        %v956 = vmax.f32 %v444, 0.0
        %v957 = vmax.f32 %v445, 0.0
        %v958 = vmax.f32 %v446, 0.0
        %v959 = vmax.f32 %v447, 0.0
        %v960 = vmax.f32 %v448, 0.0
        %v961 = vmax.f32 %v449, 0.0
        %v962 = vmax.f32 %v450, 0.0
        %v963 = vmax.f32 %v451, 0.0
        %v964 = vmax.f32 %v452, 0.0
        %v965 = vmax.f32 %v453, 0.0
        %v966 = vmax.f32 %v454, 0.0
        %v967 = vmax.f32 %v455, 0.0
        %v968 = vmax.f32 %v456, 0.0
        %v969 = vmax.f32 %v457, 0.0
        %v970 = vmax.f32 %v458, 0.0
        %v971 = vmax.f32 %v459, 0.0
        %v972 = vmax.f32 %v460, 0.0
        %v973 = vmax.f32 %v461, 0.0
        %v974 = vmax.f32 %v462, 0.0
        %v975 = vmax.f32 %v463, 0.0
        %v976 = vmax.f32 %v464, 0.0
        %v977 = vmax.f32 %v465, 0.0
        %v978 = vmax.f32 %v466, 0.0
        %v979 = vmax.f32 %v467, 0.0
        %v980 = vmax.f32 %v468, 0.0
        %v981 = vmax.f32 %v469, 0.0
        %v982 = vmax.f32 %v470, 0.0
        %v983 = vmax.f32 %v471, 0.0
        %v984 = vmax.f32 %v472, 0.0
        %v985 = vmax.f32 %v473, 0.0
        %v986 = vmax.f32 %v474, 0.0
        %v987 = vmax.f32 %v475, 0.0
        %v988 = vmax.f32 %v476, 0.0
        %v989 = vmax.f32 %v477, 0.0
        %v990 = vmax.f32 %v478, 0.0
        %v991 = vmax.f32 %v479, 0.0
        %v992 = vmax.f32 %v480, 0.0
        %v993 = vmax.f32 %v481, 0.0
        %v994 = vmax.f32 %v482, 0.0
        %v995 = vmax.f32 %v483, 0.0
        %v996 = vmax.f32 %v484, 0.0
        %v997 = vmax.f32 %v485, 0.0
        %v998 = vmax.f32 %v486, 0.0
        %v999 = vmax.f32 %v487, 0.0
        %v1000 = vmax.f32 %v488, 0.0
        %v1001 = vmax.f32 %v489, 0.0
        %v1002 = vmax.f32 %v490, 0.0
        %v1003 = vmax.f32 %v491, 0.0
        %v1004 = vmax.f32 %v492, 0.0
        %v1005 = vmax.f32 %v493, 0.0
        %v1006 = vmax.f32 %v494, 0.0
        %v1007 = vmax.f32 %v495, 0.0
        %v1008 = vmax.f32 %v496, 0.0
        %v1009 = vmax.f32 %v497, 0.0
        %v1010 = vmax.f32 %v498, 0.0
        %v1011 = vmax.f32 %v499, 0.0
        %v1012 = vmax.f32 %v500, 0.0
        %v1013 = vmax.f32 %v501, 0.0
        %v1014 = vmax.f32 %v502, 0.0
        %v1015 = vmax.f32 %v503, 0.0
        %v1016 = vmax.f32 %v504, 0.0
        %v1017 = vmax.f32 %v505, 0.0
        %v1018 = vmax.f32 %v506, 0.0
        %v1019 = vmax.f32 %v507, 0.0
        %v1020 = vmax.f32 %v508, 0.0
        %v1021 = vmax.f32 %v509, 0.0
        %v1022 = vmax.f32 %v510, 0.0
        %v1023 = vmax.f32 %v511, 0.0
        %v1024 = vmax.f32 %v512, 0.0
        %v1025 = vmax.f32 %v513, 0.0
        %v1026 = vmax.f32 %v514, 0.0
        %v1027 = vmax.f32 %v515, 0.0
        %v1028 = vmax.f32 %v516, 0.0
        %v1029 = vmax.f32 %v517, 0.0
        %v1030 = vmax.f32 %v518, 0.0
        %v1031 = vmax.f32 %v519, 0.0
        %v1032 = vmax.f32 %v520, 0.0
        %v1033 = vmax.f32 %v521, 0.0
        %v1034 = vmax.f32 %v522, 0.0
        %v1035 = vmax.f32 %v523, 0.0
        %v1036 = vmax.f32 %v524, 0.0
        %v1037 = vmax.f32 %v525, 0.0
        %v1038 = vmax.f32 %v526, 0.0
        %v1039 = vmax.f32 %v527, 0.0
        %v1040 = vmax.f32 %v528, 0.0
        %v1041 = vmax.f32 %v529, 0.0
        %v1042 = vmax.f32 %v530, 0.0
        %v1043 = vmax.f32 %v531, 0.0
        %v1044 = vmax.f32 %v532, 0.0
        %v1045 = vmax.f32 %v533, 0.0
        %v1046 = vmax.f32 %v534, 0.0
        %v1047 = vmax.f32 %v535, 0.0
        %v1048 = vmax.f32 %v536, 0.0
        %v1049 = vmax.f32 %v537, 0.0
        %v1050 = vmax.f32 %v538, 0.0
        %v1051 = vmax.f32 %v539, 0.0
        %v1052 = vmax.f32 %v540, 0.0
        %v1053 = vmax.f32 %v541, 0.0
        %v1054 = vmax.f32 %v542, 0.0
        %v1055 = vmax.f32 %v543, 0.0
        %v1056 = vmax.f32 %v544, 0.0
        %v1057 = vmax.f32 %v545, 0.0
        %v1058 = vmax.f32 %v546, 0.0
        %v1059 = vmax.f32 %v547, 0.0
        %v1060 = vmax.f32 %v548, 0.0
        %v1061 = vmax.f32 %v549, 0.0
        %v1062 = vmax.f32 %v550, 0.0
        %v1063 = vmax.f32 %v551, 0.0
        %v1064 = vmax.f32 %v552, 0.0
        %v1065 = vmax.f32 %v553, 0.0
        %v1066 = vmax.f32 %v554, 0.0
        %v1067 = vmax.f32 %v555, 0.0
        %v1068 = vmax.f32 %v556, 0.0
        %v1069 = vmax.f32 %v557, 0.0
        %v1070 = vmax.f32 %v558, 0.0
        %v1071 = vmax.f32 %v559, 0.0
        %v1072 = vmax.f32 %v560, 0.0
        %v1073 = vmax.f32 %v561, 0.0
        %v1074 = vmax.f32 %v562, 0.0
        %v1075 = vmax.f32 %v563, 0.0
        %v1076 = vmax.f32 %v564, 0.0
        %v1077 = vmax.f32 %v565, 0.0
        %v1078 = vmax.f32 %v566, 0.0
        %v1079 = vmax.f32 %v567, 0.0
        %v1080 = vmax.f32 %v568, 0.0
        %v1081 = vmax.f32 %v569, 0.0
        %v1082 = vmax.f32 %v570, 0.0
        %v1083 = vmax.f32 %v571, 0.0
        %v1084 = vmax.f32 %v572, 0.0
        %v1085 = vmax.f32 %v573, 0.0
        %v1086 = vmax.f32 %v574, 0.0
        %v1087 = vmax.f32 %v575, 0.0
        %v1088 = vmax.f32 %v576, 0.0
        %v1089 = vmax.f32 %v577, 0.0
        %v1090 = vmax.f32 %v578, 0.0
        %v1091 = vmax.f32 %v579, 0.0
        %v1092 = vmax.f32 %v580, 0.0
        %v1093 = vmax.f32 %v581, 0.0
        %v1094 = vmax.f32 %v582, 0.0
        %v1095 = vmax.f32 %v583, 0.0
        %v1096 = vmax.f32 %v584, 0.0
        %v1097 = vmax.f32 %v585, 0.0
        %v1098 = vmax.f32 %v586, 0.0
        %v1099 = vmax.f32 %v587, 0.0
        %v1100 = vmax.f32 %v588, 0.0
        %v1101 = vmax.f32 %v589, 0.0
        %v1102 = vmax.f32 %v590, 0.0
        %v1103 = vmax.f32 %v591, 0.0
        %v1104 = vmax.f32 %v592, 0.0
        %v1105 = vmax.f32 %v593, 0.0
        %v1106 = vmax.f32 %v594, 0.0
        %v1107 = vmax.f32 %v595, 0.0
        %v1108 = vmax.f32 %v596, 0.0
        %v1109 = vmax.f32 %v597, 0.0
        %v1110 = vmax.f32 %v598, 0.0
        %v1111 = vmax.f32 %v599, 0.0
        %v1112 = vmax.f32 %v600, 0.0
        %v1113 = vmax.f32 %v601, 0.0
        %v1114 = vmax.f32 %v602, 0.0
        %v1115 = vmax.f32 %v603, 0.0
        %v1116 = vmax.f32 %v604, 0.0
        %v1117 = vmax.f32 %v605, 0.0
        %v1118 = vmax.f32 %v606, 0.0
        %v1119 = vmax.f32 %v607, 0.0
        %v1120 = vmax.f32 %v608, 0.0
        %v1121 = vmax.f32 %v609, 0.0
        %v1122 = vmax.f32 %v610, 0.0
        %v1123 = vmax.f32 %v611, 0.0
        %v1124 = vmax.f32 %v612, 0.0
        %v1125 = vmax.f32 %v613, 0.0
        %v1126 = vmax.f32 %v614, 0.0
        %v1127 = vmax.f32 %v615, 0.0
        %v1128 = vmax.f32 %v616, 0.0
        %v1129 = vmax.f32 %v617, 0.0
        %v1130 = vmax.f32 %v618, 0.0
        %v1131 = vmax.f32 %v619, 0.0
        %v1132 = vmax.f32 %v620, 0.0
        %v1133 = vmax.f32 %v621, 0.0
        %v1134 = vmax.f32 %v622, 0.0
        %v1135 = vmax.f32 %v623, 0.0
        %v1136 = vmax.f32 %v624, 0.0
        %v1137 = vmax.f32 %v625, 0.0
        %v1138 = vmax.f32 %v626, 0.0
        %v1139 = vmax.f32 %v627, 0.0
        %v1140 = vmax.f32 %v628, 0.0
        %v1141 = vmax.f32 %v629, 0.0
        %v1142 = vmax.f32 %v630, 0.0
        %v1143 = vmax.f32 %v631, 0.0
        %v1144 = vmax.f32 %v632, 0.0
        %v1145 = vmax.f32 %v633, 0.0
        %v1146 = vmax.f32 %v634, 0.0
        %v1147 = vmax.f32 %v635, 0.0
        %v1148 = vmax.f32 %v636, 0.0
        %v1149 = vmax.f32 %v637, 0.0
        %v1150 = vmax.f32 %v638, 0.0
        %v1151 = vmax.f32 %v639, 0.0
        %v1152 = vmax.f32 %v640, 0.0
        %v1153 = vmax.f32 %v641, 0.0
        %v1154 = vmax.f32 %v642, 0.0
        %v1155 = vmax.f32 %v643, 0.0
        %v1156 = vmax.f32 %v644, 0.0
        %v1157 = vmax.f32 %v645, 0.0
        %v1158 = vmax.f32 %v646, 0.0
        %v1159 = vmax.f32 %v647, 0.0
        %v1160 = vmax.f32 %v648, 0.0
        %v1161 = vmax.f32 %v649, 0.0
        %v1162 = vmax.f32 %v650, 0.0
        %v1163 = vmax.f32 %v651, 0.0
        %v1164 = vmax.f32 %v652, 0.0
        %v1165 = vmax.f32 %v653, 0.0
        %v1166 = vmax.f32 %v654, 0.0
        %v1167 = vmax.f32 %v655, 0.0
        %v1168 = vmax.f32 %v656, 0.0
        %v1169 = vmax.f32 %v657, 0.0
        %v1170 = vmax.f32 %v658, 0.0
        %v1171 = vmax.f32 %v659, 0.0
        %v1172 = vmax.f32 %v660, 0.0
        %v1173 = vmax.f32 %v661, 0.0
        %v1174 = vmax.f32 %v662, 0.0
        %v1175 = vmax.f32 %v663, 0.0
        %v1176 = vmax.f32 %v664, 0.0
        %v1177 = vmax.f32 %v665, 0.0
        %v1178 = vmax.f32 %v666, 0.0
        %v1179 = vmax.f32 %v667, 0.0
        %v1180 = vmax.f32 %v668, 0.0
        %v1181 = vmax.f32 %v669, 0.0
        %v1182 = vmax.f32 %v670, 0.0
        %v1183 = vmax.f32 %v671, 0.0
        %v1184 = vmax.f32 %v672, 0.0
        %v1185 = vmax.f32 %v673, 0.0
        %v1186 = vmax.f32 %v674, 0.0
        %v1187 = vmax.f32 %v675, 0.0
        %v1188 = vmax.f32 %v676, 0.0
        %v1189 = vmax.f32 %v677, 0.0
        %v1190 = vmax.f32 %v678, 0.0
        %v1191 = vmax.f32 %v679, 0.0
        %v1192 = vmax.f32 %v680, 0.0
        %v1193 = vmax.f32 %v681, 0.0
        %v1194 = vmax.f32 %v682, 0.0
        %v1195 = vmax.f32 %v683, 0.0
        %v1196 = vmax.f32 %v684, 0.0
        %v1197 = vmax.f32 %v685, 0.0
        %v1198 = vstv %s165
        %v1199 = vmin.f32 %v1198, %v686
        %v1200 = vmin.f32 %v1198, %v687
        %v1201 = vmin.f32 %v1198, %v688
        %v1202 = vmin.f32 %v1198, %v689
        %v1203 = vmin.f32 %v1198, %v690
        %v1204 = vmin.f32 %v1198, %v691
        %v1205 = vmin.f32 %v1198, %v692
        %v1206 = vmin.f32 %v1198, %v693
        %v1207 = vmin.f32 %v1198, %v694
        %v1208 = vmin.f32 %v1198, %v695
        %v1209 = vmin.f32 %v1198, %v696
        %v1210 = vmin.f32 %v1198, %v697
        %v1211 = vmin.f32 %v1198, %v698
        %v1212 = vmin.f32 %v1198, %v699
        %v1213 = vmin.f32 %v1198, %v700
        %v1214 = vmin.f32 %v1198, %v701
        %v1215 = vmin.f32 %v1198, %v702
        %v1216 = vmin.f32 %v1198, %v703
        %v1217 = vmin.f32 %v1198, %v704
        %v1218 = vmin.f32 %v1198, %v705
        %v1219 = vmin.f32 %v1198, %v706
        %v1220 = vmin.f32 %v1198, %v707
        %v1221 = vmin.f32 %v1198, %v708
        %v1222 = vmin.f32 %v1198, %v709
        %v1223 = vmin.f32 %v1198, %v710
        %v1224 = vmin.f32 %v1198, %v711
        %v1225 = vmin.f32 %v1198, %v712
        %v1226 = vmin.f32 %v1198, %v713
        %v1227 = vmin.f32 %v1198, %v714
        %v1228 = vmin.f32 %v1198, %v715
        %v1229 = vmin.f32 %v1198, %v716
        %v1230 = vmin.f32 %v1198, %v717
        %v1231 = vmin.f32 %v1198, %v718
        %v1232 = vmin.f32 %v1198, %v719
        %v1233 = vmin.f32 %v1198, %v720
        %v1234 = vmin.f32 %v1198, %v721
        %v1235 = vmin.f32 %v1198, %v722
        %v1236 = vmin.f32 %v1198, %v723
        %v1237 = vmin.f32 %v1198, %v724
        %v1238 = vmin.f32 %v1198, %v725
        %v1239 = vmin.f32 %v1198, %v726
        %v1240 = vmin.f32 %v1198, %v727
        %v1241 = vmin.f32 %v1198, %v728
        %v1242 = vmin.f32 %v1198, %v729
        %v1243 = vmin.f32 %v1198, %v730
        %v1244 = vmin.f32 %v1198, %v731
        %v1245 = vmin.f32 %v1198, %v732
        %v1246 = vmin.f32 %v1198, %v733
        %v1247 = vmin.f32 %v1198, %v734
        %v1248 = vmin.f32 %v1198, %v735
        %v1249 = vmin.f32 %v1198, %v736
        %v1250 = vmin.f32 %v1198, %v737
        %v1251 = vmin.f32 %v1198, %v738
        %v1252 = vmin.f32 %v1198, %v739
        %v1253 = vmin.f32 %v1198, %v740
        %v1254 = vmin.f32 %v1198, %v741
        %v1255 = vmin.f32 %v1198, %v742
        %v1256 = vmin.f32 %v1198, %v743
        %v1257 = vmin.f32 %v1198, %v744
        %v1258 = vmin.f32 %v1198, %v745
        %v1259 = vmin.f32 %v1198, %v746
        %v1260 = vmin.f32 %v1198, %v747
        %v1261 = vmin.f32 %v1198, %v748
        %v1262 = vmin.f32 %v1198, %v749
        %v1263 = vmin.f32 %v1198, %v750
        %v1264 = vmin.f32 %v1198, %v751
        %v1265 = vmin.f32 %v1198, %v752
        %v1266 = vmin.f32 %v1198, %v753
        %v1267 = vmin.f32 %v1198, %v754
        %v1268 = vmin.f32 %v1198, %v755
        %v1269 = vmin.f32 %v1198, %v756
        %v1270 = vmin.f32 %v1198, %v757
        %v1271 = vmin.f32 %v1198, %v758
        %v1272 = vmin.f32 %v1198, %v759
        %v1273 = vmin.f32 %v1198, %v760
        %v1274 = vmin.f32 %v1198, %v761
        %v1275 = vmin.f32 %v1198, %v762
        %v1276 = vmin.f32 %v1198, %v763
        %v1277 = vmin.f32 %v1198, %v764
        %v1278 = vmin.f32 %v1198, %v765
        %v1279 = vmin.f32 %v1198, %v766
        %v1280 = vmin.f32 %v1198, %v767
        %v1281 = vmin.f32 %v1198, %v768
        %v1282 = vmin.f32 %v1198, %v769
        %v1283 = vmin.f32 %v1198, %v770
        %v1284 = vmin.f32 %v1198, %v771
        %v1285 = vmin.f32 %v1198, %v772
        %v1286 = vmin.f32 %v1198, %v773
        %v1287 = vmin.f32 %v1198, %v774
        %v1288 = vmin.f32 %v1198, %v775
        %v1289 = vmin.f32 %v1198, %v776
        %v1290 = vmin.f32 %v1198, %v777
        %v1291 = vmin.f32 %v1198, %v778
        %v1292 = vmin.f32 %v1198, %v779
        %v1293 = vmin.f32 %v1198, %v780
        %v1294 = vmin.f32 %v1198, %v781
        %v1295 = vmin.f32 %v1198, %v782
        %v1296 = vmin.f32 %v1198, %v783
        %v1297 = vmin.f32 %v1198, %v784
        %v1298 = vmin.f32 %v1198, %v785
        %v1299 = vmin.f32 %v1198, %v786
        %v1300 = vmin.f32 %v1198, %v787
        %v1301 = vmin.f32 %v1198, %v788
        %v1302 = vmin.f32 %v1198, %v789
        %v1303 = vmin.f32 %v1198, %v790
        %v1304 = vmin.f32 %v1198, %v791
        %v1305 = vmin.f32 %v1198, %v792
        %v1306 = vmin.f32 %v1198, %v793
        %v1307 = vmin.f32 %v1198, %v794
        %v1308 = vmin.f32 %v1198, %v795
        %v1309 = vmin.f32 %v1198, %v796
        %v1310 = vmin.f32 %v1198, %v797
        %v1311 = vmin.f32 %v1198, %v798
        %v1312 = vmin.f32 %v1198, %v799
        %v1313 = vmin.f32 %v1198, %v800
        %v1314 = vmin.f32 %v1198, %v801
        %v1315 = vmin.f32 %v1198, %v802
        %v1316 = vmin.f32 %v1198, %v803
        %v1317 = vmin.f32 %v1198, %v804
        %v1318 = vmin.f32 %v1198, %v805
        %v1319 = vmin.f32 %v1198, %v806
        %v1320 = vmin.f32 %v1198, %v807
        %v1321 = vmin.f32 %v1198, %v808
        %v1322 = vmin.f32 %v1198, %v809
        %v1323 = vmin.f32 %v1198, %v810
        %v1324 = vmin.f32 %v1198, %v811
        %v1325 = vmin.f32 %v1198, %v812
        %v1326 = vmin.f32 %v1198, %v813
        %v1327 = vmin.f32 %v1198, %v814
        %v1328 = vmin.f32 %v1198, %v815
        %v1329 = vmin.f32 %v1198, %v816
        %v1330 = vmin.f32 %v1198, %v817
        %v1331 = vmin.f32 %v1198, %v818
        %v1332 = vmin.f32 %v1198, %v819
        %v1333 = vmin.f32 %v1198, %v820
        %v1334 = vmin.f32 %v1198, %v821
        %v1335 = vmin.f32 %v1198, %v822
        %v1336 = vmin.f32 %v1198, %v823
        %v1337 = vmin.f32 %v1198, %v824
        %v1338 = vmin.f32 %v1198, %v825
        %v1339 = vmin.f32 %v1198, %v826
        %v1340 = vmin.f32 %v1198, %v827
        %v1341 = vmin.f32 %v1198, %v828
        %v1342 = vmin.f32 %v1198, %v829
        %v1343 = vmin.f32 %v1198, %v830
        %v1344 = vmin.f32 %v1198, %v831
        %v1345 = vmin.f32 %v1198, %v832
        %v1346 = vmin.f32 %v1198, %v833
        %v1347 = vmin.f32 %v1198, %v834
        %v1348 = vmin.f32 %v1198, %v835
        %v1349 = vmin.f32 %v1198, %v836
        %v1350 = vmin.f32 %v1198, %v837
        %v1351 = vmin.f32 %v1198, %v838
        %v1352 = vmin.f32 %v1198, %v839
        %v1353 = vmin.f32 %v1198, %v840
        %v1354 = vmin.f32 %v1198, %v841
        %v1355 = vmin.f32 %v1198, %v842
        %v1356 = vmin.f32 %v1198, %v843
        %v1357 = vmin.f32 %v1198, %v844
        %v1358 = vmin.f32 %v1198, %v845
        %v1359 = vmin.f32 %v1198, %v846
        %v1360 = vmin.f32 %v1198, %v847
        %v1361 = vmin.f32 %v1198, %v848
        %v1362 = vmin.f32 %v1198, %v849
        %v1363 = vmin.f32 %v1198, %v850
        %v1364 = vmin.f32 %v1198, %v851
        %v1365 = vmin.f32 %v1198, %v852
        %v1366 = vmin.f32 %v1198, %v853
        %v1367 = vmin.f32 %v1198, %v854
        %v1368 = vmin.f32 %v1198, %v855
        %v1369 = vmin.f32 %v1198, %v856
        %v1370 = vmin.f32 %v1198, %v857
        %v1371 = vmin.f32 %v1198, %v858
        %v1372 = vmin.f32 %v1198, %v859
        %v1373 = vmin.f32 %v1198, %v860
        %v1374 = vmin.f32 %v1198, %v861
        %v1375 = vmin.f32 %v1198, %v862
        %v1376 = vmin.f32 %v1198, %v863
        %v1377 = vmin.f32 %v1198, %v864
        %v1378 = vmin.f32 %v1198, %v865
        %v1379 = vmin.f32 %v1198, %v866
        %v1380 = vmin.f32 %v1198, %v867
        %v1381 = vmin.f32 %v1198, %v868
        %v1382 = vmin.f32 %v1198, %v869
        %v1383 = vmin.f32 %v1198, %v870
        %v1384 = vmin.f32 %v1198, %v871
        %v1385 = vmin.f32 %v1198, %v872
        %v1386 = vmin.f32 %v1198, %v873
        %v1387 = vmin.f32 %v1198, %v874
        %v1388 = vmin.f32 %v1198, %v875
        %v1389 = vmin.f32 %v1198, %v876
        %v1390 = vmin.f32 %v1198, %v877
        %v1391 = vmin.f32 %v1198, %v878
        %v1392 = vmin.f32 %v1198, %v879
        %v1393 = vmin.f32 %v1198, %v880
        %v1394 = vmin.f32 %v1198, %v881
        %v1395 = vmin.f32 %v1198, %v882
        %v1396 = vmin.f32 %v1198, %v883
        %v1397 = vmin.f32 %v1198, %v884
        %v1398 = vmin.f32 %v1198, %v885
        %v1399 = vmin.f32 %v1198, %v886
        %v1400 = vmin.f32 %v1198, %v887
        %v1401 = vmin.f32 %v1198, %v888
        %v1402 = vmin.f32 %v1198, %v889
        %v1403 = vmin.f32 %v1198, %v890
        %v1404 = vmin.f32 %v1198, %v891
        %v1405 = vmin.f32 %v1198, %v892
        %v1406 = vmin.f32 %v1198, %v893
        %v1407 = vmin.f32 %v1198, %v894
        %v1408 = vmin.f32 %v1198, %v895
        %v1409 = vmin.f32 %v1198, %v896
        %v1410 = vmin.f32 %v1198, %v897
        %v1411 = vmin.f32 %v1198, %v898
        %v1412 = vmin.f32 %v1198, %v899
        %v1413 = vmin.f32 %v1198, %v900
        %v1414 = vmin.f32 %v1198, %v901
        %v1415 = vmin.f32 %v1198, %v902
        %v1416 = vmin.f32 %v1198, %v903
        %v1417 = vmin.f32 %v1198, %v904
        %v1418 = vmin.f32 %v1198, %v905
        %v1419 = vmin.f32 %v1198, %v906
        %v1420 = vmin.f32 %v1198, %v907
        %v1421 = vmin.f32 %v1198, %v908
        %v1422 = vmin.f32 %v1198, %v909
        %v1423 = vmin.f32 %v1198, %v910
        %v1424 = vmin.f32 %v1198, %v911
        %v1425 = vmin.f32 %v1198, %v912
        %v1426 = vmin.f32 %v1198, %v913
        %v1427 = vmin.f32 %v1198, %v914
        %v1428 = vmin.f32 %v1198, %v915
        %v1429 = vmin.f32 %v1198, %v916
        %v1430 = vmin.f32 %v1198, %v917
        %v1431 = vmin.f32 %v1198, %v918
        %v1432 = vmin.f32 %v1198, %v919
        %v1433 = vmin.f32 %v1198, %v920
        %v1434 = vmin.f32 %v1198, %v921
        %v1435 = vmin.f32 %v1198, %v922
        %v1436 = vmin.f32 %v1198, %v923
        %v1437 = vmin.f32 %v1198, %v924
        %v1438 = vmin.f32 %v1198, %v925
        %v1439 = vmin.f32 %v1198, %v926
        %v1440 = vmin.f32 %v1198, %v927
        %v1441 = vmin.f32 %v1198, %v928
        %v1442 = vmin.f32 %v1198, %v929
        %v1443 = vmin.f32 %v1198, %v930
        %v1444 = vmin.f32 %v1198, %v931
        %v1445 = vmin.f32 %v1198, %v932
        %v1446 = vmin.f32 %v1198, %v933
        %v1447 = vmin.f32 %v1198, %v934
        %v1448 = vmin.f32 %v1198, %v935
        %v1449 = vmin.f32 %v1198, %v936
        %v1450 = vmin.f32 %v1198, %v937
        %v1451 = vmin.f32 %v1198, %v938
        %v1452 = vmin.f32 %v1198, %v939
        %v1453 = vmin.f32 %v1198, %v940
        %v1454 = vmin.f32 %v1198, %v941
        %v1455 = vmin.f32 %v1198, %v942
        %v1456 = vmin.f32 %v1198, %v943
        %v1457 = vmin.f32 %v1198, %v944
        %v1458 = vmin.f32 %v1198, %v945
        %v1459 = vmin.f32 %v1198, %v946
        %v1460 = vmin.f32 %v1198, %v947
        %v1461 = vmin.f32 %v1198, %v948
        %v1462 = vmin.f32 %v1198, %v949
        %v1463 = vmin.f32 %v1198, %v950
        %v1464 = vmin.f32 %v1198, %v951
        %v1465 = vmin.f32 %v1198, %v952
        %v1466 = vmin.f32 %v1198, %v953
        %v1467 = vmin.f32 %v1198, %v954
        %v1468 = vmin.f32 %v1198, %v955
        %v1469 = vmin.f32 %v1198, %v956
        %v1470 = vmin.f32 %v1198, %v957
        %v1471 = vmin.f32 %v1198, %v958
        %v1472 = vmin.f32 %v1198, %v959
        %v1473 = vmin.f32 %v1198, %v960
        %v1474 = vmin.f32 %v1198, %v961
        %v1475 = vmin.f32 %v1198, %v962
        %v1476 = vmin.f32 %v1198, %v963
        %v1477 = vmin.f32 %v1198, %v964
        %v1478 = vmin.f32 %v1198, %v965
        %v1479 = vmin.f32 %v1198, %v966
        %v1480 = vmin.f32 %v1198, %v967
        %v1481 = vmin.f32 %v1198, %v968
        %v1482 = vmin.f32 %v1198, %v969
        %v1483 = vmin.f32 %v1198, %v970
        %v1484 = vmin.f32 %v1198, %v971
        %v1485 = vmin.f32 %v1198, %v972
        %v1486 = vmin.f32 %v1198, %v973
        %v1487 = vmin.f32 %v1198, %v974
        %v1488 = vmin.f32 %v1198, %v975
        %v1489 = vmin.f32 %v1198, %v976
        %v1490 = vmin.f32 %v1198, %v977
        %v1491 = vmin.f32 %v1198, %v978
        %v1492 = vmin.f32 %v1198, %v979
        %v1493 = vmin.f32 %v1198, %v980
        %v1494 = vmin.f32 %v1198, %v981
        %v1495 = vmin.f32 %v1198, %v982
        %v1496 = vmin.f32 %v1198, %v983
        %v1497 = vmin.f32 %v1198, %v984
        %v1498 = vmin.f32 %v1198, %v985
        %v1499 = vmin.f32 %v1198, %v986
        %v1500 = vmin.f32 %v1198, %v987
        %v1501 = vmin.f32 %v1198, %v988
        %v1502 = vmin.f32 %v1198, %v989
        %v1503 = vmin.f32 %v1198, %v990
        %v1504 = vmin.f32 %v1198, %v991
        %v1505 = vmin.f32 %v1198, %v992
        %v1506 = vmin.f32 %v1198, %v993
        %v1507 = vmin.f32 %v1198, %v994
        %v1508 = vmin.f32 %v1198, %v995
        %v1509 = vmin.f32 %v1198, %v996
        %v1510 = vmin.f32 %v1198, %v997
        %v1511 = vmin.f32 %v1198, %v998
        %v1512 = vmin.f32 %v1198, %v999
        %v1513 = vmin.f32 %v1198, %v1000
        %v1514 = vmin.f32 %v1198, %v1001
        %v1515 = vmin.f32 %v1198, %v1002
        %v1516 = vmin.f32 %v1198, %v1003
        %v1517 = vmin.f32 %v1198, %v1004
        %v1518 = vmin.f32 %v1198, %v1005
        %v1519 = vmin.f32 %v1198, %v1006
        %v1520 = vmin.f32 %v1198, %v1007
        %v1521 = vmin.f32 %v1198, %v1008
        %v1522 = vmin.f32 %v1198, %v1009
        %v1523 = vmin.f32 %v1198, %v1010
        %v1524 = vmin.f32 %v1198, %v1011
        %v1525 = vmin.f32 %v1198, %v1012
        %v1526 = vmin.f32 %v1198, %v1013
        %v1527 = vmin.f32 %v1198, %v1014
        %v1528 = vmin.f32 %v1198, %v1015
        %v1529 = vmin.f32 %v1198, %v1016
        %v1530 = vmin.f32 %v1198, %v1017
        %v1531 = vmin.f32 %v1198, %v1018
        %v1532 = vmin.f32 %v1198, %v1019
        %v1533 = vmin.f32 %v1198, %v1020
        %v1534 = vmin.f32 %v1198, %v1021
        %v1535 = vmin.f32 %v1198, %v1022
        %v1536 = vmin.f32 %v1198, %v1023
        %v1537 = vmin.f32 %v1198, %v1024
        %v1538 = vmin.f32 %v1198, %v1025
        %v1539 = vmin.f32 %v1198, %v1026
        %v1540 = vmin.f32 %v1198, %v1027
        %v1541 = vmin.f32 %v1198, %v1028
        %v1542 = vmin.f32 %v1198, %v1029
        %v1543 = vmin.f32 %v1198, %v1030
        %v1544 = vmin.f32 %v1198, %v1031
        %v1545 = vmin.f32 %v1198, %v1032
        %v1546 = vmin.f32 %v1198, %v1033
        %v1547 = vmin.f32 %v1198, %v1034
        %v1548 = vmin.f32 %v1198, %v1035
        %v1549 = vmin.f32 %v1198, %v1036
        %v1550 = vmin.f32 %v1198, %v1037
        %v1551 = vmin.f32 %v1198, %v1038
        %v1552 = vmin.f32 %v1198, %v1039
        %v1553 = vmin.f32 %v1198, %v1040
        %v1554 = vmin.f32 %v1198, %v1041
        %v1555 = vmin.f32 %v1198, %v1042
        %v1556 = vmin.f32 %v1198, %v1043
        %v1557 = vmin.f32 %v1198, %v1044
        %v1558 = vmin.f32 %v1198, %v1045
        %v1559 = vmin.f32 %v1198, %v1046
        %v1560 = vmin.f32 %v1198, %v1047
        %v1561 = vmin.f32 %v1198, %v1048
        %v1562 = vmin.f32 %v1198, %v1049
        %v1563 = vmin.f32 %v1198, %v1050
        %v1564 = vmin.f32 %v1198, %v1051
        %v1565 = vmin.f32 %v1198, %v1052
        %v1566 = vmin.f32 %v1198, %v1053
        %v1567 = vmin.f32 %v1198, %v1054
        %v1568 = vmin.f32 %v1198, %v1055
        %v1569 = vmin.f32 %v1198, %v1056
        %v1570 = vmin.f32 %v1198, %v1057
        %v1571 = vmin.f32 %v1198, %v1058
        %v1572 = vmin.f32 %v1198, %v1059
        %v1573 = vmin.f32 %v1198, %v1060
        %v1574 = vmin.f32 %v1198, %v1061
        %v1575 = vmin.f32 %v1198, %v1062
        %v1576 = vmin.f32 %v1198, %v1063
        %v1577 = vmin.f32 %v1198, %v1064
        %v1578 = vmin.f32 %v1198, %v1065
        %v1579 = vmin.f32 %v1198, %v1066
        %v1580 = vmin.f32 %v1198, %v1067
        %v1581 = vmin.f32 %v1198, %v1068
        %v1582 = vmin.f32 %v1198, %v1069
        %v1583 = vmin.f32 %v1198, %v1070
        %v1584 = vmin.f32 %v1198, %v1071
        %v1585 = vmin.f32 %v1198, %v1072
        %v1586 = vmin.f32 %v1198, %v1073
        %v1587 = vmin.f32 %v1198, %v1074
        %v1588 = vmin.f32 %v1198, %v1075
        %v1589 = vmin.f32 %v1198, %v1076
        %v1590 = vmin.f32 %v1198, %v1077
        %v1591 = vmin.f32 %v1198, %v1078
        %v1592 = vmin.f32 %v1198, %v1079
        %v1593 = vmin.f32 %v1198, %v1080
        %v1594 = vmin.f32 %v1198, %v1081
        %v1595 = vmin.f32 %v1198, %v1082
        %v1596 = vmin.f32 %v1198, %v1083
        %v1597 = vmin.f32 %v1198, %v1084
        %v1598 = vmin.f32 %v1198, %v1085
        %v1599 = vmin.f32 %v1198, %v1086
        %v1600 = vmin.f32 %v1198, %v1087
        %v1601 = vmin.f32 %v1198, %v1088
        %v1602 = vmin.f32 %v1198, %v1089
        %v1603 = vmin.f32 %v1198, %v1090
        %v1604 = vmin.f32 %v1198, %v1091
        %v1605 = vmin.f32 %v1198, %v1092
        %v1606 = vmin.f32 %v1198, %v1093
        %v1607 = vmin.f32 %v1198, %v1094
        %v1608 = vmin.f32 %v1198, %v1095
        %v1609 = vmin.f32 %v1198, %v1096
        %v1610 = vmin.f32 %v1198, %v1097
        %v1611 = vmin.f32 %v1198, %v1098
        %v1612 = vmin.f32 %v1198, %v1099
        %v1613 = vmin.f32 %v1198, %v1100
        %v1614 = vmin.f32 %v1198, %v1101
        %v1615 = vmin.f32 %v1198, %v1102
        %v1616 = vmin.f32 %v1198, %v1103
        %v1617 = vmin.f32 %v1198, %v1104
        %v1618 = vmin.f32 %v1198, %v1105
        %v1619 = vmin.f32 %v1198, %v1106
        %v1620 = vmin.f32 %v1198, %v1107
        %v1621 = vmin.f32 %v1198, %v1108
        %v1622 = vmin.f32 %v1198, %v1109
        %v1623 = vmin.f32 %v1198, %v1110
        %v1624 = vmin.f32 %v1198, %v1111
        %v1625 = vmin.f32 %v1198, %v1112
        %v1626 = vmin.f32 %v1198, %v1113
        %v1627 = vmin.f32 %v1198, %v1114
        %v1628 = vmin.f32 %v1198, %v1115
        %v1629 = vmin.f32 %v1198, %v1116
        %v1630 = vmin.f32 %v1198, %v1117
        %v1631 = vmin.f32 %v1198, %v1118
        %v1632 = vmin.f32 %v1198, %v1119
        %v1633 = vmin.f32 %v1198, %v1120
        %v1634 = vmin.f32 %v1198, %v1121
        %v1635 = vmin.f32 %v1198, %v1122
        %v1636 = vmin.f32 %v1198, %v1123
        %v1637 = vmin.f32 %v1198, %v1124
        %v1638 = vmin.f32 %v1198, %v1125
        %v1639 = vmin.f32 %v1198, %v1126
        %v1640 = vmin.f32 %v1198, %v1127
        %v1641 = vmin.f32 %v1198, %v1128
        %v1642 = vmin.f32 %v1198, %v1129
        %v1643 = vmin.f32 %v1198, %v1130
        %v1644 = vmin.f32 %v1198, %v1131
        %v1645 = vmin.f32 %v1198, %v1132
        %v1646 = vmin.f32 %v1198, %v1133
        %v1647 = vmin.f32 %v1198, %v1134
        %v1648 = vmin.f32 %v1198, %v1135
        %v1649 = vmin.f32 %v1198, %v1136
        %v1650 = vmin.f32 %v1198, %v1137
        %v1651 = vmin.f32 %v1198, %v1138
        %v1652 = vmin.f32 %v1198, %v1139
        %v1653 = vmin.f32 %v1198, %v1140
        %v1654 = vmin.f32 %v1198, %v1141
        %v1655 = vmin.f32 %v1198, %v1142
        %v1656 = vmin.f32 %v1198, %v1143
        %v1657 = vmin.f32 %v1198, %v1144
        %v1658 = vmin.f32 %v1198, %v1145
        %v1659 = vmin.f32 %v1198, %v1146
        %v1660 = vmin.f32 %v1198, %v1147
        %v1661 = vmin.f32 %v1198, %v1148
        %v1662 = vmin.f32 %v1198, %v1149
        %v1663 = vmin.f32 %v1198, %v1150
        %v1664 = vmin.f32 %v1198, %v1151
        %v1665 = vmin.f32 %v1198, %v1152
        %v1666 = vmin.f32 %v1198, %v1153
        %v1667 = vmin.f32 %v1198, %v1154
        %v1668 = vmin.f32 %v1198, %v1155
        %v1669 = vmin.f32 %v1198, %v1156
        %v1670 = vmin.f32 %v1198, %v1157
        %v1671 = vmin.f32 %v1198, %v1158
        %v1672 = vmin.f32 %v1198, %v1159
        %v1673 = vmin.f32 %v1198, %v1160
        %v1674 = vmin.f32 %v1198, %v1161
        %v1675 = vmin.f32 %v1198, %v1162
        %v1676 = vmin.f32 %v1198, %v1163
        %v1677 = vmin.f32 %v1198, %v1164
        %v1678 = vmin.f32 %v1198, %v1165
        %v1679 = vmin.f32 %v1198, %v1166
        %v1680 = vmin.f32 %v1198, %v1167
        %v1681 = vmin.f32 %v1198, %v1168
        %v1682 = vmin.f32 %v1198, %v1169
        %v1683 = vmin.f32 %v1198, %v1170
        %v1684 = vmin.f32 %v1198, %v1171
        %v1685 = vmin.f32 %v1198, %v1172
        %v1686 = vmin.f32 %v1198, %v1173
        %v1687 = vmin.f32 %v1198, %v1174
        %v1688 = vmin.f32 %v1198, %v1175
        %v1689 = vmin.f32 %v1198, %v1176
        %v1690 = vmin.f32 %v1198, %v1177
        %v1691 = vmin.f32 %v1198, %v1178
        %v1692 = vmin.f32 %v1198, %v1179
        %v1693 = vmin.f32 %v1198, %v1180
        %v1694 = vmin.f32 %v1198, %v1181
        %v1695 = vmin.f32 %v1198, %v1182
        %v1696 = vmin.f32 %v1198, %v1183
        %v1697 = vmin.f32 %v1198, %v1184
        %v1698 = vmin.f32 %v1198, %v1185
        %v1699 = vmin.f32 %v1198, %v1186
        %v1700 = vmin.f32 %v1198, %v1187
        %v1701 = vmin.f32 %v1198, %v1188
        %v1702 = vmin.f32 %v1198, %v1189
        %v1703 = vmin.f32 %v1198, %v1190
        %v1704 = vmin.f32 %v1198, %v1191
        %v1705 = vmin.f32 %v1198, %v1192
        %v1706 = vmin.f32 %v1198, %v1193
        %v1707 = vmin.f32 %v1198, %v1194
        %v1708 = vmin.f32 %v1198, %v1195
        %v1709 = vmin.f32 %v1198, %v1196
        %v1710 = vmin.f32 %v1198, %v1197
        %v1711 = vstv %s173
        %v1712 = vmul.f32 %v1199, %v1711
        %v1713 = vmul.f32 %v1200, %v1711
        %v1714 = vmul.f32 %v1201, %v1711
        %v1715 = vmul.f32 %v1202, %v1711
        %v1716 = vmul.f32 %v1203, %v1711
        %v1717 = vmul.f32 %v1204, %v1711
        %v1718 = vmul.f32 %v1205, %v1711
        %v1719 = vmul.f32 %v1206, %v1711
        %v1720 = vmul.f32 %v1207, %v1711
        %v1721 = vmul.f32 %v1208, %v1711
        %v1722 = vmul.f32 %v1209, %v1711
        %v1723 = vmul.f32 %v1210, %v1711
        %v1724 = vmul.f32 %v1211, %v1711
        %v1725 = vmul.f32 %v1212, %v1711
        %v1726 = vmul.f32 %v1213, %v1711
        %v1727 = vmul.f32 %v1214, %v1711
        %v1728 = vmul.f32 %v1215, %v1711
        %v1729 = vmul.f32 %v1216, %v1711
        %v1730 = vmul.f32 %v1217, %v1711
        %v1731 = vmul.f32 %v1218, %v1711
        %v1732 = vmul.f32 %v1219, %v1711
        %v1733 = vmul.f32 %v1220, %v1711
        %v1734 = vmul.f32 %v1221, %v1711
        %v1735 = vmul.f32 %v1222, %v1711
        %v1736 = vmul.f32 %v1223, %v1711
        %v1737 = vmul.f32 %v1224, %v1711
        %v1738 = vmul.f32 %v1225, %v1711
        %v1739 = vmul.f32 %v1226, %v1711
        %v1740 = vmul.f32 %v1227, %v1711
        %v1741 = vmul.f32 %v1228, %v1711
        %v1742 = vmul.f32 %v1229, %v1711
        %v1743 = vmul.f32 %v1230, %v1711
        %v1744 = vmul.f32 %v1231, %v1711
        %v1745 = vmul.f32 %v1232, %v1711
        %v1746 = vmul.f32 %v1233, %v1711
        %v1747 = vmul.f32 %v1234, %v1711
        %v1748 = vmul.f32 %v1235, %v1711
        %v1749 = vmul.f32 %v1236, %v1711
        %v1750 = vmul.f32 %v1237, %v1711
        %v1751 = vmul.f32 %v1238, %v1711
        %v1752 = vmul.f32 %v1239, %v1711
        %v1753 = vmul.f32 %v1240, %v1711
        %v1754 = vmul.f32 %v1241, %v1711
        %v1755 = vmul.f32 %v1242, %v1711
        %v1756 = vmul.f32 %v1243, %v1711
        %v1757 = vmul.f32 %v1244, %v1711
        %v1758 = vmul.f32 %v1245, %v1711
        %v1759 = vmul.f32 %v1246, %v1711
        %v1760 = vmul.f32 %v1247, %v1711
        %v1761 = vmul.f32 %v1248, %v1711
        %v1762 = vmul.f32 %v1249, %v1711
        %v1763 = vmul.f32 %v1250, %v1711
        %v1764 = vmul.f32 %v1251, %v1711
        %v1765 = vmul.f32 %v1252, %v1711
        %v1766 = vmul.f32 %v1253, %v1711
        %v1767 = vmul.f32 %v1254, %v1711
        %v1768 = vmul.f32 %v1255, %v1711
        %v1769 = vmul.f32 %v1256, %v1711
        %v1770 = vmul.f32 %v1257, %v1711
        %v1771 = vmul.f32 %v1258, %v1711
        %v1772 = vmul.f32 %v1259, %v1711
        %v1773 = vmul.f32 %v1260, %v1711
        %v1774 = vmul.f32 %v1261, %v1711
        %v1775 = vmul.f32 %v1262, %v1711
        %v1776 = vmul.f32 %v1263, %v1711
        %v1777 = vmul.f32 %v1264, %v1711
        %v1778 = vmul.f32 %v1265, %v1711
        %v1779 = vmul.f32 %v1266, %v1711
        %v1780 = vmul.f32 %v1267, %v1711
        %v1781 = vmul.f32 %v1268, %v1711
        %v1782 = vmul.f32 %v1269, %v1711
        %v1783 = vmul.f32 %v1270, %v1711
        %v1784 = vmul.f32 %v1271, %v1711
        %v1785 = vmul.f32 %v1272, %v1711
        %v1786 = vmul.f32 %v1273, %v1711
        %v1787 = vmul.f32 %v1274, %v1711
        %v1788 = vmul.f32 %v1275, %v1711
        %v1789 = vmul.f32 %v1276, %v1711
        %v1790 = vmul.f32 %v1277, %v1711
        %v1791 = vmul.f32 %v1278, %v1711
        %v1792 = vmul.f32 %v1279, %v1711
        %v1793 = vmul.f32 %v1280, %v1711
        %v1794 = vmul.f32 %v1281, %v1711
        %v1795 = vmul.f32 %v1282, %v1711
        %v1796 = vmul.f32 %v1283, %v1711
        %v1797 = vmul.f32 %v1284, %v1711
        %v1798 = vmul.f32 %v1285, %v1711
        %v1799 = vmul.f32 %v1286, %v1711
        %v1800 = vmul.f32 %v1287, %v1711
        %v1801 = vmul.f32 %v1288, %v1711
        %v1802 = vmul.f32 %v1289, %v1711
        %v1803 = vmul.f32 %v1290, %v1711
        %v1804 = vmul.f32 %v1291, %v1711
        %v1805 = vmul.f32 %v1292, %v1711
        %v1806 = vmul.f32 %v1293, %v1711
        %v1807 = vmul.f32 %v1294, %v1711
        %v1808 = vmul.f32 %v1295, %v1711
        %v1809 = vmul.f32 %v1296, %v1711
        %v1810 = vmul.f32 %v1297, %v1711
        %v1811 = vmul.f32 %v1298, %v1711
        %v1812 = vmul.f32 %v1299, %v1711
        %v1813 = vmul.f32 %v1300, %v1711
        %v1814 = vmul.f32 %v1301, %v1711
        %v1815 = vmul.f32 %v1302, %v1711
        %v1816 = vmul.f32 %v1303, %v1711
        %v1817 = vmul.f32 %v1304, %v1711
        %v1818 = vmul.f32 %v1305, %v1711
        %v1819 = vmul.f32 %v1306, %v1711
        %v1820 = vmul.f32 %v1307, %v1711
        %v1821 = vmul.f32 %v1308, %v1711
        %v1822 = vmul.f32 %v1309, %v1711
        %v1823 = vmul.f32 %v1310, %v1711
        %v1824 = vmul.f32 %v1311, %v1711
        %v1825 = vmul.f32 %v1312, %v1711
        %v1826 = vmul.f32 %v1313, %v1711
        %v1827 = vmul.f32 %v1314, %v1711
        %v1828 = vmul.f32 %v1315, %v1711
        %v1829 = vmul.f32 %v1316, %v1711
        %v1830 = vmul.f32 %v1317, %v1711
        %v1831 = vmul.f32 %v1318, %v1711
        %v1832 = vmul.f32 %v1319, %v1711
        %v1833 = vmul.f32 %v1320, %v1711
        %v1834 = vmul.f32 %v1321, %v1711
        %v1835 = vmul.f32 %v1322, %v1711
        %v1836 = vmul.f32 %v1323, %v1711
        %v1837 = vmul.f32 %v1324, %v1711
        %v1838 = vmul.f32 %v1325, %v1711
        %v1839 = vmul.f32 %v1326, %v1711
        %v1840 = vmul.f32 %v1327, %v1711
        %v1841 = vmul.f32 %v1328, %v1711
        %v1842 = vmul.f32 %v1329, %v1711
        %v1843 = vmul.f32 %v1330, %v1711
        %v1844 = vmul.f32 %v1331, %v1711
        %v1845 = vmul.f32 %v1332, %v1711
        %v1846 = vmul.f32 %v1333, %v1711
        %v1847 = vmul.f32 %v1334, %v1711
        %v1848 = vmul.f32 %v1335, %v1711
        %v1849 = vmul.f32 %v1336, %v1711
        %v1850 = vmul.f32 %v1337, %v1711
        %v1851 = vmul.f32 %v1338, %v1711
        %v1852 = vmul.f32 %v1339, %v1711
        %v1853 = vmul.f32 %v1340, %v1711
        %v1854 = vmul.f32 %v1341, %v1711
        %v1855 = vmul.f32 %v1342, %v1711
        %v1856 = vmul.f32 %v1343, %v1711
        %v1857 = vmul.f32 %v1344, %v1711
        %v1858 = vmul.f32 %v1345, %v1711
        %v1859 = vmul.f32 %v1346, %v1711
        %v1860 = vmul.f32 %v1347, %v1711
        %v1861 = vmul.f32 %v1348, %v1711
        %v1862 = vmul.f32 %v1349, %v1711
        %v1863 = vmul.f32 %v1350, %v1711
        %v1864 = vmul.f32 %v1351, %v1711
        %v1865 = vmul.f32 %v1352, %v1711
        %v1866 = vmul.f32 %v1353, %v1711
        %v1867 = vmul.f32 %v1354, %v1711
        %v1868 = vmul.f32 %v1355, %v1711
        %v1869 = vmul.f32 %v1356, %v1711
        %v1870 = vmul.f32 %v1357, %v1711
        %v1871 = vmul.f32 %v1358, %v1711
        %v1872 = vmul.f32 %v1359, %v1711
        %v1873 = vmul.f32 %v1360, %v1711
        %v1874 = vmul.f32 %v1361, %v1711
        %v1875 = vmul.f32 %v1362, %v1711
        %v1876 = vmul.f32 %v1363, %v1711
        %v1877 = vmul.f32 %v1364, %v1711
        %v1878 = vmul.f32 %v1365, %v1711
        %v1879 = vmul.f32 %v1366, %v1711
        %v1880 = vmul.f32 %v1367, %v1711
        %v1881 = vmul.f32 %v1368, %v1711
        %v1882 = vmul.f32 %v1369, %v1711
        %v1883 = vmul.f32 %v1370, %v1711
        %v1884 = vmul.f32 %v1371, %v1711
        %v1885 = vmul.f32 %v1372, %v1711
        %v1886 = vmul.f32 %v1373, %v1711
        %v1887 = vmul.f32 %v1374, %v1711
        %v1888 = vmul.f32 %v1375, %v1711
        %v1889 = vmul.f32 %v1376, %v1711
        %v1890 = vmul.f32 %v1377, %v1711
        %v1891 = vmul.f32 %v1378, %v1711
        %v1892 = vmul.f32 %v1379, %v1711
        %v1893 = vmul.f32 %v1380, %v1711
        %v1894 = vmul.f32 %v1381, %v1711
        %v1895 = vmul.f32 %v1382, %v1711
        %v1896 = vmul.f32 %v1383, %v1711
        %v1897 = vmul.f32 %v1384, %v1711
        %v1898 = vmul.f32 %v1385, %v1711
        %v1899 = vmul.f32 %v1386, %v1711
        %v1900 = vmul.f32 %v1387, %v1711
        %v1901 = vmul.f32 %v1388, %v1711
        %v1902 = vmul.f32 %v1389, %v1711
        %v1903 = vmul.f32 %v1390, %v1711
        %v1904 = vmul.f32 %v1391, %v1711
        %v1905 = vmul.f32 %v1392, %v1711
        %v1906 = vmul.f32 %v1393, %v1711
        %v1907 = vmul.f32 %v1394, %v1711
        %v1908 = vmul.f32 %v1395, %v1711
        %v1909 = vmul.f32 %v1396, %v1711
        %v1910 = vmul.f32 %v1397, %v1711
        %v1911 = vmul.f32 %v1398, %v1711
        %v1912 = vmul.f32 %v1399, %v1711
        %v1913 = vmul.f32 %v1400, %v1711
        %v1914 = vmul.f32 %v1401, %v1711
        %v1915 = vmul.f32 %v1402, %v1711
        %v1916 = vmul.f32 %v1403, %v1711
        %v1917 = vmul.f32 %v1404, %v1711
        %v1918 = vmul.f32 %v1405, %v1711
        %v1919 = vmul.f32 %v1406, %v1711
        %v1920 = vmul.f32 %v1407, %v1711
        %v1921 = vmul.f32 %v1408, %v1711
        %v1922 = vmul.f32 %v1409, %v1711
        %v1923 = vmul.f32 %v1410, %v1711
        %v1924 = vmul.f32 %v1411, %v1711
        %v1925 = vmul.f32 %v1412, %v1711
        %v1926 = vmul.f32 %v1413, %v1711
        %v1927 = vmul.f32 %v1414, %v1711
        %v1928 = vmul.f32 %v1415, %v1711
        %v1929 = vmul.f32 %v1416, %v1711
        %v1930 = vmul.f32 %v1417, %v1711
        %v1931 = vmul.f32 %v1418, %v1711
        %v1932 = vmul.f32 %v1419, %v1711
        %v1933 = vmul.f32 %v1420, %v1711
        %v1934 = vmul.f32 %v1421, %v1711
        %v1935 = vmul.f32 %v1422, %v1711
        %v1936 = vmul.f32 %v1423, %v1711
        %v1937 = vmul.f32 %v1424, %v1711
        %v1938 = vmul.f32 %v1425, %v1711
        %v1939 = vmul.f32 %v1426, %v1711
        %v1940 = vmul.f32 %v1427, %v1711
        %v1941 = vmul.f32 %v1428, %v1711
        %v1942 = vmul.f32 %v1429, %v1711
        %v1943 = vmul.f32 %v1430, %v1711
        %v1944 = vmul.f32 %v1431, %v1711
        %v1945 = vmul.f32 %v1432, %v1711
        %v1946 = vmul.f32 %v1433, %v1711
        %v1947 = vmul.f32 %v1434, %v1711
        %v1948 = vmul.f32 %v1435, %v1711
        %v1949 = vmul.f32 %v1436, %v1711
        %v1950 = vmul.f32 %v1437, %v1711
        %v1951 = vmul.f32 %v1438, %v1711
        %v1952 = vmul.f32 %v1439, %v1711
        %v1953 = vmul.f32 %v1440, %v1711
        %v1954 = vmul.f32 %v1441, %v1711
        %v1955 = vmul.f32 %v1442, %v1711
        %v1956 = vmul.f32 %v1443, %v1711
        %v1957 = vmul.f32 %v1444, %v1711
        %v1958 = vmul.f32 %v1445, %v1711
        %v1959 = vmul.f32 %v1446, %v1711
        %v1960 = vmul.f32 %v1447, %v1711
        %v1961 = vmul.f32 %v1448, %v1711
        %v1962 = vmul.f32 %v1449, %v1711
        %v1963 = vmul.f32 %v1450, %v1711
        %v1964 = vmul.f32 %v1451, %v1711
        %v1965 = vmul.f32 %v1452, %v1711
        %v1966 = vmul.f32 %v1453, %v1711
        %v1967 = vmul.f32 %v1454, %v1711
        %v1968 = vmul.f32 %v1455, %v1711
        %v1969 = vmul.f32 %v1456, %v1711
        %v1970 = vmul.f32 %v1457, %v1711
        %v1971 = vmul.f32 %v1458, %v1711
        %v1972 = vmul.f32 %v1459, %v1711
        %v1973 = vmul.f32 %v1460, %v1711
        %v1974 = vmul.f32 %v1461, %v1711
        %v1975 = vmul.f32 %v1462, %v1711
        %v1976 = vmul.f32 %v1463, %v1711
        %v1977 = vmul.f32 %v1464, %v1711
        %v1978 = vmul.f32 %v1465, %v1711
        %v1979 = vmul.f32 %v1466, %v1711
        %v1980 = vmul.f32 %v1467, %v1711
        %v1981 = vmul.f32 %v1468, %v1711
        %v1982 = vmul.f32 %v1469, %v1711
        %v1983 = vmul.f32 %v1470, %v1711
        %v1984 = vmul.f32 %v1471, %v1711
        %v1985 = vmul.f32 %v1472, %v1711
        %v1986 = vmul.f32 %v1473, %v1711
        %v1987 = vmul.f32 %v1474, %v1711
        %v1988 = vmul.f32 %v1475, %v1711
        %v1989 = vmul.f32 %v1476, %v1711
        %v1990 = vmul.f32 %v1477, %v1711
        %v1991 = vmul.f32 %v1478, %v1711
        %v1992 = vmul.f32 %v1479, %v1711
        %v1993 = vmul.f32 %v1480, %v1711
        %v1994 = vmul.f32 %v1481, %v1711
        %v1995 = vmul.f32 %v1482, %v1711
        %v1996 = vmul.f32 %v1483, %v1711
        %v1997 = vmul.f32 %v1484, %v1711
        %v1998 = vmul.f32 %v1485, %v1711
        %v1999 = vmul.f32 %v1486, %v1711
        %v2000 = vmul.f32 %v1487, %v1711
        %v2001 = vmul.f32 %v1488, %v1711
        %v2002 = vmul.f32 %v1489, %v1711
        %v2003 = vmul.f32 %v1490, %v1711
        %v2004 = vmul.f32 %v1491, %v1711
        %v2005 = vmul.f32 %v1492, %v1711
        %v2006 = vmul.f32 %v1493, %v1711
        %v2007 = vmul.f32 %v1494, %v1711
        %v2008 = vmul.f32 %v1495, %v1711
        %v2009 = vmul.f32 %v1496, %v1711
        %v2010 = vmul.f32 %v1497, %v1711
        %v2011 = vmul.f32 %v1498, %v1711
        %v2012 = vmul.f32 %v1499, %v1711
        %v2013 = vmul.f32 %v1500, %v1711
        %v2014 = vmul.f32 %v1501, %v1711
        %v2015 = vmul.f32 %v1502, %v1711
        %v2016 = vmul.f32 %v1503, %v1711
        %v2017 = vmul.f32 %v1504, %v1711
        %v2018 = vmul.f32 %v1505, %v1711
        %v2019 = vmul.f32 %v1506, %v1711
        %v2020 = vmul.f32 %v1507, %v1711
        %v2021 = vmul.f32 %v1508, %v1711
        %v2022 = vmul.f32 %v1509, %v1711
        %v2023 = vmul.f32 %v1510, %v1711
        %v2024 = vmul.f32 %v1511, %v1711
        %v2025 = vmul.f32 %v1512, %v1711
        %v2026 = vmul.f32 %v1513, %v1711
        %v2027 = vmul.f32 %v1514, %v1711
        %v2028 = vmul.f32 %v1515, %v1711
        %v2029 = vmul.f32 %v1516, %v1711
        %v2030 = vmul.f32 %v1517, %v1711
        %v2031 = vmul.f32 %v1518, %v1711
        %v2032 = vmul.f32 %v1519, %v1711
        %v2033 = vmul.f32 %v1520, %v1711
        %v2034 = vmul.f32 %v1521, %v1711
        %v2035 = vmul.f32 %v1522, %v1711
        %v2036 = vmul.f32 %v1523, %v1711
        %v2037 = vmul.f32 %v1524, %v1711
        %v2038 = vmul.f32 %v1525, %v1711
        %v2039 = vmul.f32 %v1526, %v1711
        %v2040 = vmul.f32 %v1527, %v1711
        %v2041 = vmul.f32 %v1528, %v1711
        %v2042 = vmul.f32 %v1529, %v1711
        %v2043 = vmul.f32 %v1530, %v1711
        %v2044 = vmul.f32 %v1531, %v1711
        %v2045 = vmul.f32 %v1532, %v1711
        %v2046 = vmul.f32 %v1533, %v1711
        %v2047 = vmul.f32 %v1534, %v1711
        %v2048 = vmul.f32 %v1535, %v1711
        %v2049 = vmul.f32 %v1536, %v1711
        %v2050 = vmul.f32 %v1537, %v1711
        %v2051 = vmul.f32 %v1538, %v1711
        %v2052 = vmul.f32 %v1539, %v1711
        %v2053 = vmul.f32 %v1540, %v1711
        %v2054 = vmul.f32 %v1541, %v1711
        %v2055 = vmul.f32 %v1542, %v1711
        %v2056 = vmul.f32 %v1543, %v1711
        %v2057 = vmul.f32 %v1544, %v1711
        %v2058 = vmul.f32 %v1545, %v1711
        %v2059 = vmul.f32 %v1546, %v1711
        %v2060 = vmul.f32 %v1547, %v1711
        %v2061 = vmul.f32 %v1548, %v1711
        %v2062 = vmul.f32 %v1549, %v1711
        %v2063 = vmul.f32 %v1550, %v1711
        %v2064 = vmul.f32 %v1551, %v1711
        %v2065 = vmul.f32 %v1552, %v1711
        %v2066 = vmul.f32 %v1553, %v1711
        %v2067 = vmul.f32 %v1554, %v1711
        %v2068 = vmul.f32 %v1555, %v1711
        %v2069 = vmul.f32 %v1556, %v1711
        %v2070 = vmul.f32 %v1557, %v1711
        %v2071 = vmul.f32 %v1558, %v1711
        %v2072 = vmul.f32 %v1559, %v1711
        %v2073 = vmul.f32 %v1560, %v1711
        %v2074 = vmul.f32 %v1561, %v1711
        %v2075 = vmul.f32 %v1562, %v1711
        %v2076 = vmul.f32 %v1563, %v1711
        %v2077 = vmul.f32 %v1564, %v1711
        %v2078 = vmul.f32 %v1565, %v1711
        %v2079 = vmul.f32 %v1566, %v1711
        %v2080 = vmul.f32 %v1567, %v1711
        %v2081 = vmul.f32 %v1568, %v1711
        %v2082 = vmul.f32 %v1569, %v1711
        %v2083 = vmul.f32 %v1570, %v1711
        %v2084 = vmul.f32 %v1571, %v1711
        %v2085 = vmul.f32 %v1572, %v1711
        %v2086 = vmul.f32 %v1573, %v1711
        %v2087 = vmul.f32 %v1574, %v1711
        %v2088 = vmul.f32 %v1575, %v1711
        %v2089 = vmul.f32 %v1576, %v1711
        %v2090 = vmul.f32 %v1577, %v1711
        %v2091 = vmul.f32 %v1578, %v1711
        %v2092 = vmul.f32 %v1579, %v1711
        %v2093 = vmul.f32 %v1580, %v1711
        %v2094 = vmul.f32 %v1581, %v1711
        %v2095 = vmul.f32 %v1582, %v1711
        %v2096 = vmul.f32 %v1583, %v1711
        %v2097 = vmul.f32 %v1584, %v1711
        %v2098 = vmul.f32 %v1585, %v1711
        %v2099 = vmul.f32 %v1586, %v1711
        %v2100 = vmul.f32 %v1587, %v1711
        %v2101 = vmul.f32 %v1588, %v1711
        %v2102 = vmul.f32 %v1589, %v1711
        %v2103 = vmul.f32 %v1590, %v1711
        %v2104 = vmul.f32 %v1591, %v1711
        %v2105 = vmul.f32 %v1592, %v1711
        %v2106 = vmul.f32 %v1593, %v1711
        %v2107 = vmul.f32 %v1594, %v1711
        %v2108 = vmul.f32 %v1595, %v1711
        %v2109 = vmul.f32 %v1596, %v1711
        %v2110 = vmul.f32 %v1597, %v1711
        %v2111 = vmul.f32 %v1598, %v1711
        %v2112 = vmul.f32 %v1599, %v1711
        %v2113 = vmul.f32 %v1600, %v1711
        %v2114 = vmul.f32 %v1601, %v1711
        %v2115 = vmul.f32 %v1602, %v1711
        %v2116 = vmul.f32 %v1603, %v1711
        %v2117 = vmul.f32 %v1604, %v1711
        %v2118 = vmul.f32 %v1605, %v1711
        %v2119 = vmul.f32 %v1606, %v1711
        %v2120 = vmul.f32 %v1607, %v1711
        %v2121 = vmul.f32 %v1608, %v1711
        %v2122 = vmul.f32 %v1609, %v1711
        %v2123 = vmul.f32 %v1610, %v1711
        %v2124 = vmul.f32 %v1611, %v1711
        %v2125 = vmul.f32 %v1612, %v1711
        %v2126 = vmul.f32 %v1613, %v1711
        %v2127 = vmul.f32 %v1614, %v1711
        %v2128 = vmul.f32 %v1615, %v1711
        %v2129 = vmul.f32 %v1616, %v1711
        %v2130 = vmul.f32 %v1617, %v1711
        %v2131 = vmul.f32 %v1618, %v1711
        %v2132 = vmul.f32 %v1619, %v1711
        %v2133 = vmul.f32 %v1620, %v1711
        %v2134 = vmul.f32 %v1621, %v1711
        %v2135 = vmul.f32 %v1622, %v1711
        %v2136 = vmul.f32 %v1623, %v1711
        %v2137 = vmul.f32 %v1624, %v1711
        %v2138 = vmul.f32 %v1625, %v1711
        %v2139 = vmul.f32 %v1626, %v1711
        %v2140 = vmul.f32 %v1627, %v1711
        %v2141 = vmul.f32 %v1628, %v1711
        %v2142 = vmul.f32 %v1629, %v1711
        %v2143 = vmul.f32 %v1630, %v1711
        %v2144 = vmul.f32 %v1631, %v1711
        %v2145 = vmul.f32 %v1632, %v1711
        %v2146 = vmul.f32 %v1633, %v1711
        %v2147 = vmul.f32 %v1634, %v1711
        %v2148 = vmul.f32 %v1635, %v1711
        %v2149 = vmul.f32 %v1636, %v1711
        %v2150 = vmul.f32 %v1637, %v1711
        %v2151 = vmul.f32 %v1638, %v1711
        %v2152 = vmul.f32 %v1639, %v1711
        %v2153 = vmul.f32 %v1640, %v1711
        %v2154 = vmul.f32 %v1641, %v1711
        %v2155 = vmul.f32 %v1642, %v1711
        %v2156 = vmul.f32 %v1643, %v1711
        %v2157 = vmul.f32 %v1644, %v1711
        %v2158 = vmul.f32 %v1645, %v1711
        %v2159 = vmul.f32 %v1646, %v1711
        %v2160 = vmul.f32 %v1647, %v1711
        %v2161 = vmul.f32 %v1648, %v1711
        %v2162 = vmul.f32 %v1649, %v1711
        %v2163 = vmul.f32 %v1650, %v1711
        %v2164 = vmul.f32 %v1651, %v1711
        %v2165 = vmul.f32 %v1652, %v1711
        %v2166 = vmul.f32 %v1653, %v1711
        %v2167 = vmul.f32 %v1654, %v1711
        %v2168 = vmul.f32 %v1655, %v1711
        %v2169 = vmul.f32 %v1656, %v1711
        %v2170 = vmul.f32 %v1657, %v1711
        %v2171 = vmul.f32 %v1658, %v1711
        %v2172 = vmul.f32 %v1659, %v1711
        %v2173 = vmul.f32 %v1660, %v1711
        %v2174 = vmul.f32 %v1661, %v1711
        %v2175 = vmul.f32 %v1662, %v1711
        %v2176 = vmul.f32 %v1663, %v1711
        %v2177 = vmul.f32 %v1664, %v1711
        %v2178 = vmul.f32 %v1665, %v1711
        %v2179 = vmul.f32 %v1666, %v1711
        %v2180 = vmul.f32 %v1667, %v1711
        %v2181 = vmul.f32 %v1668, %v1711
        %v2182 = vmul.f32 %v1669, %v1711
        %v2183 = vmul.f32 %v1670, %v1711
        %v2184 = vmul.f32 %v1671, %v1711
        %v2185 = vmul.f32 %v1672, %v1711
        %v2186 = vmul.f32 %v1673, %v1711
        %v2187 = vmul.f32 %v1674, %v1711
        %v2188 = vmul.f32 %v1675, %v1711
        %v2189 = vmul.f32 %v1676, %v1711
        %v2190 = vmul.f32 %v1677, %v1711
        %v2191 = vmul.f32 %v1678, %v1711
        %v2192 = vmul.f32 %v1679, %v1711
        %v2193 = vmul.f32 %v1680, %v1711
        %v2194 = vmul.f32 %v1681, %v1711
        %v2195 = vmul.f32 %v1682, %v1711
        %v2196 = vmul.f32 %v1683, %v1711
        %v2197 = vmul.f32 %v1684, %v1711
        %v2198 = vmul.f32 %v1685, %v1711
        %v2199 = vmul.f32 %v1686, %v1711
        %v2200 = vmul.f32 %v1687, %v1711
        %v2201 = vmul.f32 %v1688, %v1711
        %v2202 = vmul.f32 %v1689, %v1711
        %v2203 = vmul.f32 %v1690, %v1711
        %v2204 = vmul.f32 %v1691, %v1711
        %v2205 = vmul.f32 %v1692, %v1711
        %v2206 = vmul.f32 %v1693, %v1711
        %v2207 = vmul.f32 %v1694, %v1711
        %v2208 = vmul.f32 %v1695, %v1711
        %v2209 = vmul.f32 %v1696, %v1711
        %v2210 = vmul.f32 %v1697, %v1711
        %v2211 = vmul.f32 %v1698, %v1711
        %v2212 = vmul.f32 %v1699, %v1711
        %v2213 = vmul.f32 %v1700, %v1711
        %v2214 = vmul.f32 %v1701, %v1711
        %v2215 = vmul.f32 %v1702, %v1711
        %v2216 = vmul.f32 %v1703, %v1711
        %v2217 = vmul.f32 %v1704, %v1711
        %v2218 = vmul.f32 %v1705, %v1711
        %v2219 = vmul.f32 %v1706, %v1711
        %v2220 = vmul.f32 %v1707, %v1711
        %v2221 = vmul.f32 %v1708, %v1711
        %v2222 = vmul.f32 %v1709, %v1711
        %v2223 = vmul.f32 %v1710, %v1711
        %v2224 = vround.ne.pseudo %v1712
        %v2225 = vround.ne.pseudo %v1713
        %v2226 = vround.ne.pseudo %v1714
        %v2227 = vround.ne.pseudo %v1715
        %v2228 = vround.ne.pseudo %v1716
        %v2229 = vround.ne.pseudo %v1717
        %v2230 = vround.ne.pseudo %v1718
        %v2231 = vround.ne.pseudo %v1719
        %v2232 = vround.ne.pseudo %v1720
        %v2233 = vround.ne.pseudo %v1721
        %v2234 = vround.ne.pseudo %v1722
        %v2235 = vround.ne.pseudo %v1723
        %v2236 = vround.ne.pseudo %v1724
        %v2237 = vround.ne.pseudo %v1725
        %v2238 = vround.ne.pseudo %v1726
        %v2239 = vround.ne.pseudo %v1727
        %v2240 = vround.ne.pseudo %v1728
        %v2241 = vround.ne.pseudo %v1729
        %v2242 = vround.ne.pseudo %v1730
        %v2243 = vround.ne.pseudo %v1731
        %v2244 = vround.ne.pseudo %v1732
        %v2245 = vround.ne.pseudo %v1733
        %v2246 = vround.ne.pseudo %v1734
        %v2247 = vround.ne.pseudo %v1735
        %v2248 = vround.ne.pseudo %v1736
        %v2249 = vround.ne.pseudo %v1737
        %v2250 = vround.ne.pseudo %v1738
        %v2251 = vround.ne.pseudo %v1739
        %v2252 = vround.ne.pseudo %v1740
        %v2253 = vround.ne.pseudo %v1741
        %v2254 = vround.ne.pseudo %v1742
        %v2255 = vround.ne.pseudo %v1743
        %v2256 = vround.ne.pseudo %v1744
        %v2257 = vround.ne.pseudo %v1745
        %v2258 = vround.ne.pseudo %v1746
        %v2259 = vround.ne.pseudo %v1747
        %v2260 = vround.ne.pseudo %v1748
        %v2261 = vround.ne.pseudo %v1749
        %v2262 = vround.ne.pseudo %v1750
        %v2263 = vround.ne.pseudo %v1751
        %v2264 = vround.ne.pseudo %v1752
        %v2265 = vround.ne.pseudo %v1753
        %v2266 = vround.ne.pseudo %v1754
        %v2267 = vround.ne.pseudo %v1755
        %v2268 = vround.ne.pseudo %v1756
        %v2269 = vround.ne.pseudo %v1757
        %v2270 = vround.ne.pseudo %v1758
        %v2271 = vround.ne.pseudo %v1759
        %v2272 = vround.ne.pseudo %v1760
        %v2273 = vround.ne.pseudo %v1761
        %v2274 = vround.ne.pseudo %v1762
        %v2275 = vround.ne.pseudo %v1763
        %v2276 = vround.ne.pseudo %v1764
        %v2277 = vround.ne.pseudo %v1765
        %v2278 = vround.ne.pseudo %v1766
        %v2279 = vround.ne.pseudo %v1767
        %v2280 = vround.ne.pseudo %v1768
        %v2281 = vround.ne.pseudo %v1769
        %v2282 = vround.ne.pseudo %v1770
        %v2283 = vround.ne.pseudo %v1771
        %v2284 = vround.ne.pseudo %v1772
        %v2285 = vround.ne.pseudo %v1773
        %v2286 = vround.ne.pseudo %v1774
        %v2287 = vround.ne.pseudo %v1775
        %v2288 = vround.ne.pseudo %v1776
        %v2289 = vround.ne.pseudo %v1777
        %v2290 = vround.ne.pseudo %v1778
        %v2291 = vround.ne.pseudo %v1779
        %v2292 = vround.ne.pseudo %v1780
        %v2293 = vround.ne.pseudo %v1781
        %v2294 = vround.ne.pseudo %v1782
        %v2295 = vround.ne.pseudo %v1783
        %v2296 = vround.ne.pseudo %v1784
        %v2297 = vround.ne.pseudo %v1785
        %v2298 = vround.ne.pseudo %v1786
        %v2299 = vround.ne.pseudo %v1787
        %v2300 = vround.ne.pseudo %v1788
        %v2301 = vround.ne.pseudo %v1789
        %v2302 = vround.ne.pseudo %v1790
        %v2303 = vround.ne.pseudo %v1791
        %v2304 = vround.ne.pseudo %v1792
        %v2305 = vround.ne.pseudo %v1793
        %v2306 = vround.ne.pseudo %v1794
        %v2307 = vround.ne.pseudo %v1795
        %v2308 = vround.ne.pseudo %v1796
        %v2309 = vround.ne.pseudo %v1797
        %v2310 = vround.ne.pseudo %v1798
        %v2311 = vround.ne.pseudo %v1799
        %v2312 = vround.ne.pseudo %v1800
        %v2313 = vround.ne.pseudo %v1801
        %v2314 = vround.ne.pseudo %v1802
        %v2315 = vround.ne.pseudo %v1803
        %v2316 = vround.ne.pseudo %v1804
        %v2317 = vround.ne.pseudo %v1805
        %v2318 = vround.ne.pseudo %v1806
        %v2319 = vround.ne.pseudo %v1807
        %v2320 = vround.ne.pseudo %v1808
        %v2321 = vround.ne.pseudo %v1809
        %v2322 = vround.ne.pseudo %v1810
        %v2323 = vround.ne.pseudo %v1811
        %v2324 = vround.ne.pseudo %v1812
        %v2325 = vround.ne.pseudo %v1813
        %v2326 = vround.ne.pseudo %v1814
        %v2327 = vround.ne.pseudo %v1815
        %v2328 = vround.ne.pseudo %v1816
        %v2329 = vround.ne.pseudo %v1817
        %v2330 = vround.ne.pseudo %v1818
        %v2331 = vround.ne.pseudo %v1819
        %v2332 = vround.ne.pseudo %v1820
        %v2333 = vround.ne.pseudo %v1821
        %v2334 = vround.ne.pseudo %v1822
        %v2335 = vround.ne.pseudo %v1823
        %v2336 = vround.ne.pseudo %v1824
        %v2337 = vround.ne.pseudo %v1825
        %v2338 = vround.ne.pseudo %v1826
        %v2339 = vround.ne.pseudo %v1827
        %v2340 = vround.ne.pseudo %v1828
        %v2341 = vround.ne.pseudo %v1829
        %v2342 = vround.ne.pseudo %v1830
        %v2343 = vround.ne.pseudo %v1831
        %v2344 = vround.ne.pseudo %v1832
        %v2345 = vround.ne.pseudo %v1833
        %v2346 = vround.ne.pseudo %v1834
        %v2347 = vround.ne.pseudo %v1835
        %v2348 = vround.ne.pseudo %v1836
        %v2349 = vround.ne.pseudo %v1837
        %v2350 = vround.ne.pseudo %v1838
        %v2351 = vround.ne.pseudo %v1839
        %v2352 = vround.ne.pseudo %v1840
        %v2353 = vround.ne.pseudo %v1841
        %v2354 = vround.ne.pseudo %v1842
        %v2355 = vround.ne.pseudo %v1843
        %v2356 = vround.ne.pseudo %v1844
        %v2357 = vround.ne.pseudo %v1845
        %v2358 = vround.ne.pseudo %v1846
        %v2359 = vround.ne.pseudo %v1847
        %v2360 = vround.ne.pseudo %v1848
        %v2361 = vround.ne.pseudo %v1849
        %v2362 = vround.ne.pseudo %v1850
        %v2363 = vround.ne.pseudo %v1851
        %v2364 = vround.ne.pseudo %v1852
        %v2365 = vround.ne.pseudo %v1853
        %v2366 = vround.ne.pseudo %v1854
        %v2367 = vround.ne.pseudo %v1855
        %v2368 = vround.ne.pseudo %v1856
        %v2369 = vround.ne.pseudo %v1857
        %v2370 = vround.ne.pseudo %v1858
        %v2371 = vround.ne.pseudo %v1859
        %v2372 = vround.ne.pseudo %v1860
        %v2373 = vround.ne.pseudo %v1861
        %v2374 = vround.ne.pseudo %v1862
        %v2375 = vround.ne.pseudo %v1863
        %v2376 = vround.ne.pseudo %v1864
        %v2377 = vround.ne.pseudo %v1865
        %v2378 = vround.ne.pseudo %v1866
        %v2379 = vround.ne.pseudo %v1867
        %v2380 = vround.ne.pseudo %v1868
        %v2381 = vround.ne.pseudo %v1869
        %v2382 = vround.ne.pseudo %v1870
        %v2383 = vround.ne.pseudo %v1871
        %v2384 = vround.ne.pseudo %v1872
        %v2385 = vround.ne.pseudo %v1873
        %v2386 = vround.ne.pseudo %v1874
        %v2387 = vround.ne.pseudo %v1875
        %v2388 = vround.ne.pseudo %v1876
        %v2389 = vround.ne.pseudo %v1877
        %v2390 = vround.ne.pseudo %v1878
        %v2391 = vround.ne.pseudo %v1879
        %v2392 = vround.ne.pseudo %v1880
        %v2393 = vround.ne.pseudo %v1881
        %v2394 = vround.ne.pseudo %v1882
        %v2395 = vround.ne.pseudo %v1883
        %v2396 = vround.ne.pseudo %v1884
        %v2397 = vround.ne.pseudo %v1885
        %v2398 = vround.ne.pseudo %v1886
        %v2399 = vround.ne.pseudo %v1887
        %v2400 = vround.ne.pseudo %v1888
        %v2401 = vround.ne.pseudo %v1889
        %v2402 = vround.ne.pseudo %v1890
        %v2403 = vround.ne.pseudo %v1891
        %v2404 = vround.ne.pseudo %v1892
        %v2405 = vround.ne.pseudo %v1893
        %v2406 = vround.ne.pseudo %v1894
        %v2407 = vround.ne.pseudo %v1895
        %v2408 = vround.ne.pseudo %v1896
        %v2409 = vround.ne.pseudo %v1897
        %v2410 = vround.ne.pseudo %v1898
        %v2411 = vround.ne.pseudo %v1899
        %v2412 = vround.ne.pseudo %v1900
        %v2413 = vround.ne.pseudo %v1901
        %v2414 = vround.ne.pseudo %v1902
        %v2415 = vround.ne.pseudo %v1903
        %v2416 = vround.ne.pseudo %v1904
        %v2417 = vround.ne.pseudo %v1905
        %v2418 = vround.ne.pseudo %v1906
        %v2419 = vround.ne.pseudo %v1907
        %v2420 = vround.ne.pseudo %v1908
        %v2421 = vround.ne.pseudo %v1909
        %v2422 = vround.ne.pseudo %v1910
        %v2423 = vround.ne.pseudo %v1911
        %v2424 = vround.ne.pseudo %v1912
        %v2425 = vround.ne.pseudo %v1913
        %v2426 = vround.ne.pseudo %v1914
        %v2427 = vround.ne.pseudo %v1915
        %v2428 = vround.ne.pseudo %v1916
        %v2429 = vround.ne.pseudo %v1917
        %v2430 = vround.ne.pseudo %v1918
        %v2431 = vround.ne.pseudo %v1919
        %v2432 = vround.ne.pseudo %v1920
        %v2433 = vround.ne.pseudo %v1921
        %v2434 = vround.ne.pseudo %v1922
        %v2435 = vround.ne.pseudo %v1923
        %v2436 = vround.ne.pseudo %v1924
        %v2437 = vround.ne.pseudo %v1925
        %v2438 = vround.ne.pseudo %v1926
        %v2439 = vround.ne.pseudo %v1927
        %v2440 = vround.ne.pseudo %v1928
        %v2441 = vround.ne.pseudo %v1929
        %v2442 = vround.ne.pseudo %v1930
        %v2443 = vround.ne.pseudo %v1931
        %v2444 = vround.ne.pseudo %v1932
        %v2445 = vround.ne.pseudo %v1933
        %v2446 = vround.ne.pseudo %v1934
        %v2447 = vround.ne.pseudo %v1935
        %v2448 = vround.ne.pseudo %v1936
        %v2449 = vround.ne.pseudo %v1937
        %v2450 = vround.ne.pseudo %v1938
        %v2451 = vround.ne.pseudo %v1939
        %v2452 = vround.ne.pseudo %v1940
        %v2453 = vround.ne.pseudo %v1941
        %v2454 = vround.ne.pseudo %v1942
        %v2455 = vround.ne.pseudo %v1943
        %v2456 = vround.ne.pseudo %v1944
        %v2457 = vround.ne.pseudo %v1945
        %v2458 = vround.ne.pseudo %v1946
        %v2459 = vround.ne.pseudo %v1947
        %v2460 = vround.ne.pseudo %v1948
        %v2461 = vround.ne.pseudo %v1949
        %v2462 = vround.ne.pseudo %v1950
        %v2463 = vround.ne.pseudo %v1951
        %v2464 = vround.ne.pseudo %v1952
        %v2465 = vround.ne.pseudo %v1953
        %v2466 = vround.ne.pseudo %v1954
        %v2467 = vround.ne.pseudo %v1955
        %v2468 = vround.ne.pseudo %v1956
        %v2469 = vround.ne.pseudo %v1957
        %v2470 = vround.ne.pseudo %v1958
        %v2471 = vround.ne.pseudo %v1959
        %v2472 = vround.ne.pseudo %v1960
        %v2473 = vround.ne.pseudo %v1961
        %v2474 = vround.ne.pseudo %v1962
        %v2475 = vround.ne.pseudo %v1963
        %v2476 = vround.ne.pseudo %v1964
        %v2477 = vround.ne.pseudo %v1965
        %v2478 = vround.ne.pseudo %v1966
        %v2479 = vround.ne.pseudo %v1967
        %v2480 = vround.ne.pseudo %v1968
        %v2481 = vround.ne.pseudo %v1969
        %v2482 = vround.ne.pseudo %v1970
        %v2483 = vround.ne.pseudo %v1971
        %v2484 = vround.ne.pseudo %v1972
        %v2485 = vround.ne.pseudo %v1973
        %v2486 = vround.ne.pseudo %v1974
        %v2487 = vround.ne.pseudo %v1975
        %v2488 = vround.ne.pseudo %v1976
        %v2489 = vround.ne.pseudo %v1977
        %v2490 = vround.ne.pseudo %v1978
        %v2491 = vround.ne.pseudo %v1979
        %v2492 = vround.ne.pseudo %v1980
        %v2493 = vround.ne.pseudo %v1981
        %v2494 = vround.ne.pseudo %v1982
        %v2495 = vround.ne.pseudo %v1983
        %v2496 = vround.ne.pseudo %v1984
        %v2497 = vround.ne.pseudo %v1985
        %v2498 = vround.ne.pseudo %v1986
        %v2499 = vround.ne.pseudo %v1987
        %v2500 = vround.ne.pseudo %v1988
        %v2501 = vround.ne.pseudo %v1989
        %v2502 = vround.ne.pseudo %v1990
        %v2503 = vround.ne.pseudo %v1991
        %v2504 = vround.ne.pseudo %v1992
        %v2505 = vround.ne.pseudo %v1993
        %v2506 = vround.ne.pseudo %v1994
        %v2507 = vround.ne.pseudo %v1995
        %v2508 = vround.ne.pseudo %v1996
        %v2509 = vround.ne.pseudo %v1997
        %v2510 = vround.ne.pseudo %v1998
        %v2511 = vround.ne.pseudo %v1999
        %v2512 = vround.ne.pseudo %v2000
        %v2513 = vround.ne.pseudo %v2001
        %v2514 = vround.ne.pseudo %v2002
        %v2515 = vround.ne.pseudo %v2003
        %v2516 = vround.ne.pseudo %v2004
        %v2517 = vround.ne.pseudo %v2005
        %v2518 = vround.ne.pseudo %v2006
        %v2519 = vround.ne.pseudo %v2007
        %v2520 = vround.ne.pseudo %v2008
        %v2521 = vround.ne.pseudo %v2009
        %v2522 = vround.ne.pseudo %v2010
        %v2523 = vround.ne.pseudo %v2011
        %v2524 = vround.ne.pseudo %v2012
        %v2525 = vround.ne.pseudo %v2013
        %v2526 = vround.ne.pseudo %v2014
        %v2527 = vround.ne.pseudo %v2015
        %v2528 = vround.ne.pseudo %v2016
        %v2529 = vround.ne.pseudo %v2017
        %v2530 = vround.ne.pseudo %v2018
        %v2531 = vround.ne.pseudo %v2019
        %v2532 = vround.ne.pseudo %v2020
        %v2533 = vround.ne.pseudo %v2021
        %v2534 = vround.ne.pseudo %v2022
        %v2535 = vround.ne.pseudo %v2023
        %v2536 = vround.ne.pseudo %v2024
        %v2537 = vround.ne.pseudo %v2025
        %v2538 = vround.ne.pseudo %v2026
        %v2539 = vround.ne.pseudo %v2027
        %v2540 = vround.ne.pseudo %v2028
        %v2541 = vround.ne.pseudo %v2029
        %v2542 = vround.ne.pseudo %v2030
        %v2543 = vround.ne.pseudo %v2031
        %v2544 = vround.ne.pseudo %v2032
        %v2545 = vround.ne.pseudo %v2033
        %v2546 = vround.ne.pseudo %v2034
        %v2547 = vround.ne.pseudo %v2035
        %v2548 = vround.ne.pseudo %v2036
        %v2549 = vround.ne.pseudo %v2037
        %v2550 = vround.ne.pseudo %v2038
        %v2551 = vround.ne.pseudo %v2039
        %v2552 = vround.ne.pseudo %v2040
        %v2553 = vround.ne.pseudo %v2041
        %v2554 = vround.ne.pseudo %v2042
        %v2555 = vround.ne.pseudo %v2043
        %v2556 = vround.ne.pseudo %v2044
        %v2557 = vround.ne.pseudo %v2045
        %v2558 = vround.ne.pseudo %v2046
        %v2559 = vround.ne.pseudo %v2047
        %v2560 = vround.ne.pseudo %v2048
        %v2561 = vround.ne.pseudo %v2049
        %v2562 = vround.ne.pseudo %v2050
        %v2563 = vround.ne.pseudo %v2051
        %v2564 = vround.ne.pseudo %v2052
        %v2565 = vround.ne.pseudo %v2053
        %v2566 = vround.ne.pseudo %v2054
        %v2567 = vround.ne.pseudo %v2055
        %v2568 = vround.ne.pseudo %v2056
        %v2569 = vround.ne.pseudo %v2057
        %v2570 = vround.ne.pseudo %v2058
        %v2571 = vround.ne.pseudo %v2059
        %v2572 = vround.ne.pseudo %v2060
        %v2573 = vround.ne.pseudo %v2061
        %v2574 = vround.ne.pseudo %v2062
        %v2575 = vround.ne.pseudo %v2063
        %v2576 = vround.ne.pseudo %v2064
        %v2577 = vround.ne.pseudo %v2065
        %v2578 = vround.ne.pseudo %v2066
        %v2579 = vround.ne.pseudo %v2067
        %v2580 = vround.ne.pseudo %v2068
        %v2581 = vround.ne.pseudo %v2069
        %v2582 = vround.ne.pseudo %v2070
        %v2583 = vround.ne.pseudo %v2071
        %v2584 = vround.ne.pseudo %v2072
        %v2585 = vround.ne.pseudo %v2073
        %v2586 = vround.ne.pseudo %v2074
        %v2587 = vround.ne.pseudo %v2075
        %v2588 = vround.ne.pseudo %v2076
        %v2589 = vround.ne.pseudo %v2077
        %v2590 = vround.ne.pseudo %v2078
        %v2591 = vround.ne.pseudo %v2079
        %v2592 = vround.ne.pseudo %v2080
        %v2593 = vround.ne.pseudo %v2081
        %v2594 = vround.ne.pseudo %v2082
        %v2595 = vround.ne.pseudo %v2083
        %v2596 = vround.ne.pseudo %v2084
        %v2597 = vround.ne.pseudo %v2085
        %v2598 = vround.ne.pseudo %v2086
        %v2599 = vround.ne.pseudo %v2087
        %v2600 = vround.ne.pseudo %v2088
        %v2601 = vround.ne.pseudo %v2089
        %v2602 = vround.ne.pseudo %v2090
        %v2603 = vround.ne.pseudo %v2091
        %v2604 = vround.ne.pseudo %v2092
        %v2605 = vround.ne.pseudo %v2093
        %v2606 = vround.ne.pseudo %v2094
        %v2607 = vround.ne.pseudo %v2095
        %v2608 = vround.ne.pseudo %v2096
        %v2609 = vround.ne.pseudo %v2097
        %v2610 = vround.ne.pseudo %v2098
        %v2611 = vround.ne.pseudo %v2099
        %v2612 = vround.ne.pseudo %v2100
        %v2613 = vround.ne.pseudo %v2101
        %v2614 = vround.ne.pseudo %v2102
        %v2615 = vround.ne.pseudo %v2103
        %v2616 = vround.ne.pseudo %v2104
        %v2617 = vround.ne.pseudo %v2105
        %v2618 = vround.ne.pseudo %v2106
        %v2619 = vround.ne.pseudo %v2107
        %v2620 = vround.ne.pseudo %v2108
        %v2621 = vround.ne.pseudo %v2109
        %v2622 = vround.ne.pseudo %v2110
        %v2623 = vround.ne.pseudo %v2111
        %v2624 = vround.ne.pseudo %v2112
        %v2625 = vround.ne.pseudo %v2113
        %v2626 = vround.ne.pseudo %v2114
        %v2627 = vround.ne.pseudo %v2115
        %v2628 = vround.ne.pseudo %v2116
        %v2629 = vround.ne.pseudo %v2117
        %v2630 = vround.ne.pseudo %v2118
        %v2631 = vround.ne.pseudo %v2119
        %v2632 = vround.ne.pseudo %v2120
        %v2633 = vround.ne.pseudo %v2121
        %v2634 = vround.ne.pseudo %v2122
        %v2635 = vround.ne.pseudo %v2123
        %v2636 = vround.ne.pseudo %v2124
        %v2637 = vround.ne.pseudo %v2125
        %v2638 = vround.ne.pseudo %v2126
        %v2639 = vround.ne.pseudo %v2127
        %v2640 = vround.ne.pseudo %v2128
        %v2641 = vround.ne.pseudo %v2129
        %v2642 = vround.ne.pseudo %v2130
        %v2643 = vround.ne.pseudo %v2131
        %v2644 = vround.ne.pseudo %v2132
        %v2645 = vround.ne.pseudo %v2133
        %v2646 = vround.ne.pseudo %v2134
        %v2647 = vround.ne.pseudo %v2135
        %v2648 = vround.ne.pseudo %v2136
        %v2649 = vround.ne.pseudo %v2137
        %v2650 = vround.ne.pseudo %v2138
        %v2651 = vround.ne.pseudo %v2139
        %v2652 = vround.ne.pseudo %v2140
        %v2653 = vround.ne.pseudo %v2141
        %v2654 = vround.ne.pseudo %v2142
        %v2655 = vround.ne.pseudo %v2143
        %v2656 = vround.ne.pseudo %v2144
        %v2657 = vround.ne.pseudo %v2145
        %v2658 = vround.ne.pseudo %v2146
        %v2659 = vround.ne.pseudo %v2147
        %v2660 = vround.ne.pseudo %v2148
        %v2661 = vround.ne.pseudo %v2149
        %v2662 = vround.ne.pseudo %v2150
        %v2663 = vround.ne.pseudo %v2151
        %v2664 = vround.ne.pseudo %v2152
        %v2665 = vround.ne.pseudo %v2153
        %v2666 = vround.ne.pseudo %v2154
        %v2667 = vround.ne.pseudo %v2155
        %v2668 = vround.ne.pseudo %v2156
        %v2669 = vround.ne.pseudo %v2157
        %v2670 = vround.ne.pseudo %v2158
        %v2671 = vround.ne.pseudo %v2159
        %v2672 = vround.ne.pseudo %v2160
        %v2673 = vround.ne.pseudo %v2161
        %v2674 = vround.ne.pseudo %v2162
        %v2675 = vround.ne.pseudo %v2163
        %v2676 = vround.ne.pseudo %v2164
        %v2677 = vround.ne.pseudo %v2165
        %v2678 = vround.ne.pseudo %v2166
        %v2679 = vround.ne.pseudo %v2167
        %v2680 = vround.ne.pseudo %v2168
        %v2681 = vround.ne.pseudo %v2169
        %v2682 = vround.ne.pseudo %v2170
        %v2683 = vround.ne.pseudo %v2171
        %v2684 = vround.ne.pseudo %v2172
        %v2685 = vround.ne.pseudo %v2173
        %v2686 = vround.ne.pseudo %v2174
        %v2687 = vround.ne.pseudo %v2175
        %v2688 = vround.ne.pseudo %v2176
        %v2689 = vround.ne.pseudo %v2177
        %v2690 = vround.ne.pseudo %v2178
        %v2691 = vround.ne.pseudo %v2179
        %v2692 = vround.ne.pseudo %v2180
        %v2693 = vround.ne.pseudo %v2181
        %v2694 = vround.ne.pseudo %v2182
        %v2695 = vround.ne.pseudo %v2183
        %v2696 = vround.ne.pseudo %v2184
        %v2697 = vround.ne.pseudo %v2185
        %v2698 = vround.ne.pseudo %v2186
        %v2699 = vround.ne.pseudo %v2187
        %v2700 = vround.ne.pseudo %v2188
        %v2701 = vround.ne.pseudo %v2189
        %v2702 = vround.ne.pseudo %v2190
        %v2703 = vround.ne.pseudo %v2191
        %v2704 = vround.ne.pseudo %v2192
        %v2705 = vround.ne.pseudo %v2193
        %v2706 = vround.ne.pseudo %v2194
        %v2707 = vround.ne.pseudo %v2195
        %v2708 = vround.ne.pseudo %v2196
        %v2709 = vround.ne.pseudo %v2197
        %v2710 = vround.ne.pseudo %v2198
        %v2711 = vround.ne.pseudo %v2199
        %v2712 = vround.ne.pseudo %v2200
        %v2713 = vround.ne.pseudo %v2201
        %v2714 = vround.ne.pseudo %v2202
        %v2715 = vround.ne.pseudo %v2203
        %v2716 = vround.ne.pseudo %v2204
        %v2717 = vround.ne.pseudo %v2205
        %v2718 = vround.ne.pseudo %v2206
        %v2719 = vround.ne.pseudo %v2207
        %v2720 = vround.ne.pseudo %v2208
        %v2721 = vround.ne.pseudo %v2209
        %v2722 = vround.ne.pseudo %v2210
        %v2723 = vround.ne.pseudo %v2211
        %v2724 = vround.ne.pseudo %v2212
        %v2725 = vround.ne.pseudo %v2213
        %v2726 = vround.ne.pseudo %v2214
        %v2727 = vround.ne.pseudo %v2215
        %v2728 = vround.ne.pseudo %v2216
        %v2729 = vround.ne.pseudo %v2217
        %v2730 = vround.ne.pseudo %v2218
        %v2731 = vround.ne.pseudo %v2219
        %v2732 = vround.ne.pseudo %v2220
        %v2733 = vround.ne.pseudo %v2221
        %v2734 = vround.ne.pseudo %v2222
        %v2735 = vround.ne.pseudo %v2223
        %v2736 = vstv %s169
        %v2737 = vmul.f32 %v2224, %v2736
        %v2738 = vmul.f32 %v2225, %v2736
        %v2739 = vmul.f32 %v2226, %v2736
        %v2740 = vmul.f32 %v2227, %v2736
        %v2741 = vmul.f32 %v2228, %v2736
        %v2742 = vmul.f32 %v2229, %v2736
        %v2743 = vmul.f32 %v2230, %v2736
        %v2744 = vmul.f32 %v2231, %v2736
        %v2745 = vmul.f32 %v2232, %v2736
        %v2746 = vmul.f32 %v2233, %v2736
        %v2747 = vmul.f32 %v2234, %v2736
        %v2748 = vmul.f32 %v2235, %v2736
        %v2749 = vmul.f32 %v2236, %v2736
        %v2750 = vmul.f32 %v2237, %v2736
        %v2751 = vmul.f32 %v2238, %v2736
        %v2752 = vmul.f32 %v2239, %v2736
        %v2753 = vmul.f32 %v2240, %v2736
        %v2754 = vmul.f32 %v2241, %v2736
        %v2755 = vmul.f32 %v2242, %v2736
        %v2756 = vmul.f32 %v2243, %v2736
        %v2757 = vmul.f32 %v2244, %v2736
        %v2758 = vmul.f32 %v2245, %v2736
        %v2759 = vmul.f32 %v2246, %v2736
        %v2760 = vmul.f32 %v2247, %v2736
        %v2761 = vmul.f32 %v2248, %v2736
        %v2762 = vmul.f32 %v2249, %v2736
        %v2763 = vmul.f32 %v2250, %v2736
        %v2764 = vmul.f32 %v2251, %v2736
        %v2765 = vmul.f32 %v2252, %v2736
        %v2766 = vmul.f32 %v2253, %v2736
        %v2767 = vmul.f32 %v2254, %v2736
        %v2768 = vmul.f32 %v2255, %v2736
        %v2769 = vmul.f32 %v2256, %v2736
        %v2770 = vmul.f32 %v2257, %v2736
        %v2771 = vmul.f32 %v2258, %v2736
        %v2772 = vmul.f32 %v2259, %v2736
        %v2773 = vmul.f32 %v2260, %v2736
        %v2774 = vmul.f32 %v2261, %v2736
        %v2775 = vmul.f32 %v2262, %v2736
        %v2776 = vmul.f32 %v2263, %v2736
        %v2777 = vmul.f32 %v2264, %v2736
        %v2778 = vmul.f32 %v2265, %v2736
        %v2779 = vmul.f32 %v2266, %v2736
        %v2780 = vmul.f32 %v2267, %v2736
        %v2781 = vmul.f32 %v2268, %v2736
        %v2782 = vmul.f32 %v2269, %v2736
        %v2783 = vmul.f32 %v2270, %v2736
        %v2784 = vmul.f32 %v2271, %v2736
        %v2785 = vmul.f32 %v2272, %v2736
        %v2786 = vmul.f32 %v2273, %v2736
        %v2787 = vmul.f32 %v2274, %v2736
        %v2788 = vmul.f32 %v2275, %v2736
        %v2789 = vmul.f32 %v2276, %v2736
        %v2790 = vmul.f32 %v2277, %v2736
        %v2791 = vmul.f32 %v2278, %v2736
        %v2792 = vmul.f32 %v2279, %v2736
        %v2793 = vmul.f32 %v2280, %v2736
        %v2794 = vmul.f32 %v2281, %v2736
        %v2795 = vmul.f32 %v2282, %v2736
        %v2796 = vmul.f32 %v2283, %v2736
        %v2797 = vmul.f32 %v2284, %v2736
        %v2798 = vmul.f32 %v2285, %v2736
        %v2799 = vmul.f32 %v2286, %v2736
        %v2800 = vmul.f32 %v2287, %v2736
        %v2801 = vmul.f32 %v2288, %v2736
        %v2802 = vmul.f32 %v2289, %v2736
        %v2803 = vmul.f32 %v2290, %v2736
        %v2804 = vmul.f32 %v2291, %v2736
        %v2805 = vmul.f32 %v2292, %v2736
        %v2806 = vmul.f32 %v2293, %v2736
        %v2807 = vmul.f32 %v2294, %v2736
        %v2808 = vmul.f32 %v2295, %v2736
        %v2809 = vmul.f32 %v2296, %v2736
        %v2810 = vmul.f32 %v2297, %v2736
        %v2811 = vmul.f32 %v2298, %v2736
        %v2812 = vmul.f32 %v2299, %v2736
        %v2813 = vmul.f32 %v2300, %v2736
        %v2814 = vmul.f32 %v2301, %v2736
        %v2815 = vmul.f32 %v2302, %v2736
        %v2816 = vmul.f32 %v2303, %v2736
        %v2817 = vmul.f32 %v2304, %v2736
        %v2818 = vmul.f32 %v2305, %v2736
        %v2819 = vmul.f32 %v2306, %v2736
        %v2820 = vmul.f32 %v2307, %v2736
        %v2821 = vmul.f32 %v2308, %v2736
        %v2822 = vmul.f32 %v2309, %v2736
        %v2823 = vmul.f32 %v2310, %v2736
        %v2824 = vmul.f32 %v2311, %v2736
        %v2825 = vmul.f32 %v2312, %v2736
        %v2826 = vmul.f32 %v2313, %v2736
        %v2827 = vmul.f32 %v2314, %v2736
        %v2828 = vmul.f32 %v2315, %v2736
        %v2829 = vmul.f32 %v2316, %v2736
        %v2830 = vmul.f32 %v2317, %v2736
        %v2831 = vmul.f32 %v2318, %v2736
        %v2832 = vmul.f32 %v2319, %v2736
        %v2833 = vmul.f32 %v2320, %v2736
        %v2834 = vmul.f32 %v2321, %v2736
        %v2835 = vmul.f32 %v2322, %v2736
        %v2836 = vmul.f32 %v2323, %v2736
        %v2837 = vmul.f32 %v2324, %v2736
        %v2838 = vmul.f32 %v2325, %v2736
        %v2839 = vmul.f32 %v2326, %v2736
        %v2840 = vmul.f32 %v2327, %v2736
        %v2841 = vmul.f32 %v2328, %v2736
        %v2842 = vmul.f32 %v2329, %v2736
        %v2843 = vmul.f32 %v2330, %v2736
        %v2844 = vmul.f32 %v2331, %v2736
        %v2845 = vmul.f32 %v2332, %v2736
        %v2846 = vmul.f32 %v2333, %v2736
        %v2847 = vmul.f32 %v2334, %v2736
        %v2848 = vmul.f32 %v2335, %v2736
        %v2849 = vmul.f32 %v2336, %v2736
        %v2850 = vmul.f32 %v2337, %v2736
        %v2851 = vmul.f32 %v2338, %v2736
        %v2852 = vmul.f32 %v2339, %v2736
        %v2853 = vmul.f32 %v2340, %v2736
        %v2854 = vmul.f32 %v2341, %v2736
        %v2855 = vmul.f32 %v2342, %v2736
        %v2856 = vmul.f32 %v2343, %v2736
        %v2857 = vmul.f32 %v2344, %v2736
        %v2858 = vmul.f32 %v2345, %v2736
        %v2859 = vmul.f32 %v2346, %v2736
        %v2860 = vmul.f32 %v2347, %v2736
        %v2861 = vmul.f32 %v2348, %v2736
        %v2862 = vmul.f32 %v2349, %v2736
        %v2863 = vmul.f32 %v2350, %v2736
        %v2864 = vmul.f32 %v2351, %v2736
        %v2865 = vmul.f32 %v2352, %v2736
        %v2866 = vmul.f32 %v2353, %v2736
        %v2867 = vmul.f32 %v2354, %v2736
        %v2868 = vmul.f32 %v2355, %v2736
        %v2869 = vmul.f32 %v2356, %v2736
        %v2870 = vmul.f32 %v2357, %v2736
        %v2871 = vmul.f32 %v2358, %v2736
        %v2872 = vmul.f32 %v2359, %v2736
        %v2873 = vmul.f32 %v2360, %v2736
        %v2874 = vmul.f32 %v2361, %v2736
        %v2875 = vmul.f32 %v2362, %v2736
        %v2876 = vmul.f32 %v2363, %v2736
        %v2877 = vmul.f32 %v2364, %v2736
        %v2878 = vmul.f32 %v2365, %v2736
        %v2879 = vmul.f32 %v2366, %v2736
        %v2880 = vmul.f32 %v2367, %v2736
        %v2881 = vmul.f32 %v2368, %v2736
        %v2882 = vmul.f32 %v2369, %v2736
        %v2883 = vmul.f32 %v2370, %v2736
        %v2884 = vmul.f32 %v2371, %v2736
        %v2885 = vmul.f32 %v2372, %v2736
        %v2886 = vmul.f32 %v2373, %v2736
        %v2887 = vmul.f32 %v2374, %v2736
        %v2888 = vmul.f32 %v2375, %v2736
        %v2889 = vmul.f32 %v2376, %v2736
        %v2890 = vmul.f32 %v2377, %v2736
        %v2891 = vmul.f32 %v2378, %v2736
        %v2892 = vmul.f32 %v2379, %v2736
        %v2893 = vmul.f32 %v2380, %v2736
        %v2894 = vmul.f32 %v2381, %v2736
        %v2895 = vmul.f32 %v2382, %v2736
        %v2896 = vmul.f32 %v2383, %v2736
        %v2897 = vmul.f32 %v2384, %v2736
        %v2898 = vmul.f32 %v2385, %v2736
        %v2899 = vmul.f32 %v2386, %v2736
        %v2900 = vmul.f32 %v2387, %v2736
        %v2901 = vmul.f32 %v2388, %v2736
        %v2902 = vmul.f32 %v2389, %v2736
        %v2903 = vmul.f32 %v2390, %v2736
        %v2904 = vmul.f32 %v2391, %v2736
        %v2905 = vmul.f32 %v2392, %v2736
        %v2906 = vmul.f32 %v2393, %v2736
        %v2907 = vmul.f32 %v2394, %v2736
        %v2908 = vmul.f32 %v2395, %v2736
        %v2909 = vmul.f32 %v2396, %v2736
        %v2910 = vmul.f32 %v2397, %v2736
        %v2911 = vmul.f32 %v2398, %v2736
        %v2912 = vmul.f32 %v2399, %v2736
        %v2913 = vmul.f32 %v2400, %v2736
        %v2914 = vmul.f32 %v2401, %v2736
        %v2915 = vmul.f32 %v2402, %v2736
        %v2916 = vmul.f32 %v2403, %v2736
        %v2917 = vmul.f32 %v2404, %v2736
        %v2918 = vmul.f32 %v2405, %v2736
        %v2919 = vmul.f32 %v2406, %v2736
        %v2920 = vmul.f32 %v2407, %v2736
        %v2921 = vmul.f32 %v2408, %v2736
        %v2922 = vmul.f32 %v2409, %v2736
        %v2923 = vmul.f32 %v2410, %v2736
        %v2924 = vmul.f32 %v2411, %v2736
        %v2925 = vmul.f32 %v2412, %v2736
        %v2926 = vmul.f32 %v2413, %v2736
        %v2927 = vmul.f32 %v2414, %v2736
        %v2928 = vmul.f32 %v2415, %v2736
        %v2929 = vmul.f32 %v2416, %v2736
        %v2930 = vmul.f32 %v2417, %v2736
        %v2931 = vmul.f32 %v2418, %v2736
        %v2932 = vmul.f32 %v2419, %v2736
        %v2933 = vmul.f32 %v2420, %v2736
        %v2934 = vmul.f32 %v2421, %v2736
        %v2935 = vmul.f32 %v2422, %v2736
        %v2936 = vmul.f32 %v2423, %v2736
        %v2937 = vmul.f32 %v2424, %v2736
        %v2938 = vmul.f32 %v2425, %v2736
        %v2939 = vmul.f32 %v2426, %v2736
        %v2940 = vmul.f32 %v2427, %v2736
        %v2941 = vmul.f32 %v2428, %v2736
        %v2942 = vmul.f32 %v2429, %v2736
        %v2943 = vmul.f32 %v2430, %v2736
        %v2944 = vmul.f32 %v2431, %v2736
        %v2945 = vmul.f32 %v2432, %v2736
        %v2946 = vmul.f32 %v2433, %v2736
        %v2947 = vmul.f32 %v2434, %v2736
        %v2948 = vmul.f32 %v2435, %v2736
        %v2949 = vmul.f32 %v2436, %v2736
        %v2950 = vmul.f32 %v2437, %v2736
        %v2951 = vmul.f32 %v2438, %v2736
        %v2952 = vmul.f32 %v2439, %v2736
        %v2953 = vmul.f32 %v2440, %v2736
        %v2954 = vmul.f32 %v2441, %v2736
        %v2955 = vmul.f32 %v2442, %v2736
        %v2956 = vmul.f32 %v2443, %v2736
        %v2957 = vmul.f32 %v2444, %v2736
        %v2958 = vmul.f32 %v2445, %v2736
        %v2959 = vmul.f32 %v2446, %v2736
        %v2960 = vmul.f32 %v2447, %v2736
        %v2961 = vmul.f32 %v2448, %v2736
        %v2962 = vmul.f32 %v2449, %v2736
        %v2963 = vmul.f32 %v2450, %v2736
        %v2964 = vmul.f32 %v2451, %v2736
        %v2965 = vmul.f32 %v2452, %v2736
        %v2966 = vmul.f32 %v2453, %v2736
        %v2967 = vmul.f32 %v2454, %v2736
        %v2968 = vmul.f32 %v2455, %v2736
        %v2969 = vmul.f32 %v2456, %v2736
        %v2970 = vmul.f32 %v2457, %v2736
        %v2971 = vmul.f32 %v2458, %v2736
        %v2972 = vmul.f32 %v2459, %v2736
        %v2973 = vmul.f32 %v2460, %v2736
        %v2974 = vmul.f32 %v2461, %v2736
        %v2975 = vmul.f32 %v2462, %v2736
        %v2976 = vmul.f32 %v2463, %v2736
        %v2977 = vmul.f32 %v2464, %v2736
        %v2978 = vmul.f32 %v2465, %v2736
        %v2979 = vmul.f32 %v2466, %v2736
        %v2980 = vmul.f32 %v2467, %v2736
        %v2981 = vmul.f32 %v2468, %v2736
        %v2982 = vmul.f32 %v2469, %v2736
        %v2983 = vmul.f32 %v2470, %v2736
        %v2984 = vmul.f32 %v2471, %v2736
        %v2985 = vmul.f32 %v2472, %v2736
        %v2986 = vmul.f32 %v2473, %v2736
        %v2987 = vmul.f32 %v2474, %v2736
        %v2988 = vmul.f32 %v2475, %v2736
        %v2989 = vmul.f32 %v2476, %v2736
        %v2990 = vmul.f32 %v2477, %v2736
        %v2991 = vmul.f32 %v2478, %v2736
        %v2992 = vmul.f32 %v2479, %v2736
        %v2993 = vmul.f32 %v2480, %v2736
        %v2994 = vmul.f32 %v2481, %v2736
        %v2995 = vmul.f32 %v2482, %v2736
        %v2996 = vmul.f32 %v2483, %v2736
        %v2997 = vmul.f32 %v2484, %v2736
        %v2998 = vmul.f32 %v2485, %v2736
        %v2999 = vmul.f32 %v2486, %v2736
        %v3000 = vmul.f32 %v2487, %v2736
        %v3001 = vmul.f32 %v2488, %v2736
        %v3002 = vmul.f32 %v2489, %v2736
        %v3003 = vmul.f32 %v2490, %v2736
        %v3004 = vmul.f32 %v2491, %v2736
        %v3005 = vmul.f32 %v2492, %v2736
        %v3006 = vmul.f32 %v2493, %v2736
        %v3007 = vmul.f32 %v2494, %v2736
        %v3008 = vmul.f32 %v2495, %v2736
        %v3009 = vmul.f32 %v2496, %v2736
        %v3010 = vmul.f32 %v2497, %v2736
        %v3011 = vmul.f32 %v2498, %v2736
        %v3012 = vmul.f32 %v2499, %v2736
        %v3013 = vmul.f32 %v2500, %v2736
        %v3014 = vmul.f32 %v2501, %v2736
        %v3015 = vmul.f32 %v2502, %v2736
        %v3016 = vmul.f32 %v2503, %v2736
        %v3017 = vmul.f32 %v2504, %v2736
        %v3018 = vmul.f32 %v2505, %v2736
        %v3019 = vmul.f32 %v2506, %v2736
        %v3020 = vmul.f32 %v2507, %v2736
        %v3021 = vmul.f32 %v2508, %v2736
        %v3022 = vmul.f32 %v2509, %v2736
        %v3023 = vmul.f32 %v2510, %v2736
        %v3024 = vmul.f32 %v2511, %v2736
        %v3025 = vmul.f32 %v2512, %v2736
        %v3026 = vmul.f32 %v2513, %v2736
        %v3027 = vmul.f32 %v2514, %v2736
        %v3028 = vmul.f32 %v2515, %v2736
        %v3029 = vmul.f32 %v2516, %v2736
        %v3030 = vmul.f32 %v2517, %v2736
        %v3031 = vmul.f32 %v2518, %v2736
        %v3032 = vmul.f32 %v2519, %v2736
        %v3033 = vmul.f32 %v2520, %v2736
        %v3034 = vmul.f32 %v2521, %v2736
        %v3035 = vmul.f32 %v2522, %v2736
        %v3036 = vmul.f32 %v2523, %v2736
        %v3037 = vmul.f32 %v2524, %v2736
        %v3038 = vmul.f32 %v2525, %v2736
        %v3039 = vmul.f32 %v2526, %v2736
        %v3040 = vmul.f32 %v2527, %v2736
        %v3041 = vmul.f32 %v2528, %v2736
        %v3042 = vmul.f32 %v2529, %v2736
        %v3043 = vmul.f32 %v2530, %v2736
        %v3044 = vmul.f32 %v2531, %v2736
        %v3045 = vmul.f32 %v2532, %v2736
        %v3046 = vmul.f32 %v2533, %v2736
        %v3047 = vmul.f32 %v2534, %v2736
        %v3048 = vmul.f32 %v2535, %v2736
        %v3049 = vmul.f32 %v2536, %v2736
        %v3050 = vmul.f32 %v2537, %v2736
        %v3051 = vmul.f32 %v2538, %v2736
        %v3052 = vmul.f32 %v2539, %v2736
        %v3053 = vmul.f32 %v2540, %v2736
        %v3054 = vmul.f32 %v2541, %v2736
        %v3055 = vmul.f32 %v2542, %v2736
        %v3056 = vmul.f32 %v2543, %v2736
        %v3057 = vmul.f32 %v2544, %v2736
        %v3058 = vmul.f32 %v2545, %v2736
        %v3059 = vmul.f32 %v2546, %v2736
        %v3060 = vmul.f32 %v2547, %v2736
        %v3061 = vmul.f32 %v2548, %v2736
        %v3062 = vmul.f32 %v2549, %v2736
        %v3063 = vmul.f32 %v2550, %v2736
        %v3064 = vmul.f32 %v2551, %v2736
        %v3065 = vmul.f32 %v2552, %v2736
        %v3066 = vmul.f32 %v2553, %v2736
        %v3067 = vmul.f32 %v2554, %v2736
        %v3068 = vmul.f32 %v2555, %v2736
        %v3069 = vmul.f32 %v2556, %v2736
        %v3070 = vmul.f32 %v2557, %v2736
        %v3071 = vmul.f32 %v2558, %v2736
        %v3072 = vmul.f32 %v2559, %v2736
        %v3073 = vmul.f32 %v2560, %v2736
        %v3074 = vmul.f32 %v2561, %v2736
        %v3075 = vmul.f32 %v2562, %v2736
        %v3076 = vmul.f32 %v2563, %v2736
        %v3077 = vmul.f32 %v2564, %v2736
        %v3078 = vmul.f32 %v2565, %v2736
        %v3079 = vmul.f32 %v2566, %v2736
        %v3080 = vmul.f32 %v2567, %v2736
        %v3081 = vmul.f32 %v2568, %v2736
        %v3082 = vmul.f32 %v2569, %v2736
        %v3083 = vmul.f32 %v2570, %v2736
        %v3084 = vmul.f32 %v2571, %v2736
        %v3085 = vmul.f32 %v2572, %v2736
        %v3086 = vmul.f32 %v2573, %v2736
        %v3087 = vmul.f32 %v2574, %v2736
        %v3088 = vmul.f32 %v2575, %v2736
        %v3089 = vmul.f32 %v2576, %v2736
        %v3090 = vmul.f32 %v2577, %v2736
        %v3091 = vmul.f32 %v2578, %v2736
        %v3092 = vmul.f32 %v2579, %v2736
        %v3093 = vmul.f32 %v2580, %v2736
        %v3094 = vmul.f32 %v2581, %v2736
        %v3095 = vmul.f32 %v2582, %v2736
        %v3096 = vmul.f32 %v2583, %v2736
        %v3097 = vmul.f32 %v2584, %v2736
        %v3098 = vmul.f32 %v2585, %v2736
        %v3099 = vmul.f32 %v2586, %v2736
        %v3100 = vmul.f32 %v2587, %v2736
        %v3101 = vmul.f32 %v2588, %v2736
        %v3102 = vmul.f32 %v2589, %v2736
        %v3103 = vmul.f32 %v2590, %v2736
        %v3104 = vmul.f32 %v2591, %v2736
        %v3105 = vmul.f32 %v2592, %v2736
        %v3106 = vmul.f32 %v2593, %v2736
        %v3107 = vmul.f32 %v2594, %v2736
        %v3108 = vmul.f32 %v2595, %v2736
        %v3109 = vmul.f32 %v2596, %v2736
        %v3110 = vmul.f32 %v2597, %v2736
        %v3111 = vmul.f32 %v2598, %v2736
        %v3112 = vmul.f32 %v2599, %v2736
        %v3113 = vmul.f32 %v2600, %v2736
        %v3114 = vmul.f32 %v2601, %v2736
        %v3115 = vmul.f32 %v2602, %v2736
        %v3116 = vmul.f32 %v2603, %v2736
        %v3117 = vmul.f32 %v2604, %v2736
        %v3118 = vmul.f32 %v2605, %v2736
        %v3119 = vmul.f32 %v2606, %v2736
        %v3120 = vmul.f32 %v2607, %v2736
        %v3121 = vmul.f32 %v2608, %v2736
        %v3122 = vmul.f32 %v2609, %v2736
        %v3123 = vmul.f32 %v2610, %v2736
        %v3124 = vmul.f32 %v2611, %v2736
        %v3125 = vmul.f32 %v2612, %v2736
        %v3126 = vmul.f32 %v2613, %v2736
        %v3127 = vmul.f32 %v2614, %v2736
        %v3128 = vmul.f32 %v2615, %v2736
        %v3129 = vmul.f32 %v2616, %v2736
        %v3130 = vmul.f32 %v2617, %v2736
        %v3131 = vmul.f32 %v2618, %v2736
        %v3132 = vmul.f32 %v2619, %v2736
        %v3133 = vmul.f32 %v2620, %v2736
        %v3134 = vmul.f32 %v2621, %v2736
        %v3135 = vmul.f32 %v2622, %v2736
        %v3136 = vmul.f32 %v2623, %v2736
        %v3137 = vmul.f32 %v2624, %v2736
        %v3138 = vmul.f32 %v2625, %v2736
        %v3139 = vmul.f32 %v2626, %v2736
        %v3140 = vmul.f32 %v2627, %v2736
        %v3141 = vmul.f32 %v2628, %v2736
        %v3142 = vmul.f32 %v2629, %v2736
        %v3143 = vmul.f32 %v2630, %v2736
        %v3144 = vmul.f32 %v2631, %v2736
        %v3145 = vmul.f32 %v2632, %v2736
        %v3146 = vmul.f32 %v2633, %v2736
        %v3147 = vmul.f32 %v2634, %v2736
        %v3148 = vmul.f32 %v2635, %v2736
        %v3149 = vmul.f32 %v2636, %v2736
        %v3150 = vmul.f32 %v2637, %v2736
        %v3151 = vmul.f32 %v2638, %v2736
        %v3152 = vmul.f32 %v2639, %v2736
        %v3153 = vmul.f32 %v2640, %v2736
        %v3154 = vmul.f32 %v2641, %v2736
        %v3155 = vmul.f32 %v2642, %v2736
        %v3156 = vmul.f32 %v2643, %v2736
        %v3157 = vmul.f32 %v2644, %v2736
        %v3158 = vmul.f32 %v2645, %v2736
        %v3159 = vmul.f32 %v2646, %v2736
        %v3160 = vmul.f32 %v2647, %v2736
        %v3161 = vmul.f32 %v2648, %v2736
        %v3162 = vmul.f32 %v2649, %v2736
        %v3163 = vmul.f32 %v2650, %v2736
        %v3164 = vmul.f32 %v2651, %v2736
        %v3165 = vmul.f32 %v2652, %v2736
        %v3166 = vmul.f32 %v2653, %v2736
        %v3167 = vmul.f32 %v2654, %v2736
        %v3168 = vmul.f32 %v2655, %v2736
        %v3169 = vmul.f32 %v2656, %v2736
        %v3170 = vmul.f32 %v2657, %v2736
        %v3171 = vmul.f32 %v2658, %v2736
        %v3172 = vmul.f32 %v2659, %v2736
        %v3173 = vmul.f32 %v2660, %v2736
        %v3174 = vmul.f32 %v2661, %v2736
        %v3175 = vmul.f32 %v2662, %v2736
        %v3176 = vmul.f32 %v2663, %v2736
        %v3177 = vmul.f32 %v2664, %v2736
        %v3178 = vmul.f32 %v2665, %v2736
        %v3179 = vmul.f32 %v2666, %v2736
        %v3180 = vmul.f32 %v2667, %v2736
        %v3181 = vmul.f32 %v2668, %v2736
        %v3182 = vmul.f32 %v2669, %v2736
        %v3183 = vmul.f32 %v2670, %v2736
        %v3184 = vmul.f32 %v2671, %v2736
        %v3185 = vmul.f32 %v2672, %v2736
        %v3186 = vmul.f32 %v2673, %v2736
        %v3187 = vmul.f32 %v2674, %v2736
        %v3188 = vmul.f32 %v2675, %v2736
        %v3189 = vmul.f32 %v2676, %v2736
        %v3190 = vmul.f32 %v2677, %v2736
        %v3191 = vmul.f32 %v2678, %v2736
        %v3192 = vmul.f32 %v2679, %v2736
        %v3193 = vmul.f32 %v2680, %v2736
        %v3194 = vmul.f32 %v2681, %v2736
        %v3195 = vmul.f32 %v2682, %v2736
        %v3196 = vmul.f32 %v2683, %v2736
        %v3197 = vmul.f32 %v2684, %v2736
        %v3198 = vmul.f32 %v2685, %v2736
        %v3199 = vmul.f32 %v2686, %v2736
        %v3200 = vmul.f32 %v2687, %v2736
        %v3201 = vmul.f32 %v2688, %v2736
        %v3202 = vmul.f32 %v2689, %v2736
        %v3203 = vmul.f32 %v2690, %v2736
        %v3204 = vmul.f32 %v2691, %v2736
        %v3205 = vmul.f32 %v2692, %v2736
        %v3206 = vmul.f32 %v2693, %v2736
        %v3207 = vmul.f32 %v2694, %v2736
        %v3208 = vmul.f32 %v2695, %v2736
        %v3209 = vmul.f32 %v2696, %v2736
        %v3210 = vmul.f32 %v2697, %v2736
        %v3211 = vmul.f32 %v2698, %v2736
        %v3212 = vmul.f32 %v2699, %v2736
        %v3213 = vmul.f32 %v2700, %v2736
        %v3214 = vmul.f32 %v2701, %v2736
        %v3215 = vmul.f32 %v2702, %v2736
        %v3216 = vmul.f32 %v2703, %v2736
        %v3217 = vmul.f32 %v2704, %v2736
        %v3218 = vmul.f32 %v2705, %v2736
        %v3219 = vmul.f32 %v2706, %v2736
        %v3220 = vmul.f32 %v2707, %v2736
        %v3221 = vmul.f32 %v2708, %v2736
        %v3222 = vmul.f32 %v2709, %v2736
        %v3223 = vmul.f32 %v2710, %v2736
        %v3224 = vmul.f32 %v2711, %v2736
        %v3225 = vmul.f32 %v2712, %v2736
        %v3226 = vmul.f32 %v2713, %v2736
        %v3227 = vmul.f32 %v2714, %v2736
        %v3228 = vmul.f32 %v2715, %v2736
        %v3229 = vmul.f32 %v2716, %v2736
        %v3230 = vmul.f32 %v2717, %v2736
        %v3231 = vmul.f32 %v2718, %v2736
        %v3232 = vmul.f32 %v2719, %v2736
        %v3233 = vmul.f32 %v2720, %v2736
        %v3234 = vmul.f32 %v2721, %v2736
        %v3235 = vmul.f32 %v2722, %v2736
        %v3236 = vmul.f32 %v2723, %v2736
        %v3237 = vmul.f32 %v2724, %v2736
        %v3238 = vmul.f32 %v2725, %v2736
        %v3239 = vmul.f32 %v2726, %v2736
        %v3240 = vmul.f32 %v2727, %v2736
        %v3241 = vmul.f32 %v2728, %v2736
        %v3242 = vmul.f32 %v2729, %v2736
        %v3243 = vmul.f32 %v2730, %v2736
        %v3244 = vmul.f32 %v2731, %v2736
        %v3245 = vmul.f32 %v2732, %v2736
        %v3246 = vmul.f32 %v2733, %v2736
        %v3247 = vmul.f32 %v2734, %v2736
        %v3248 = vmul.f32 %v2735, %v2736
        %3249 = vst [vmem:[%s162] sm:$0xff] %v2737
        %3250 = vst [vmem:[%s162 + $0x8] sm:$0xff] %v2738
        %3251 = vst [vmem:[%s162 + $0x10] sm:$0xff] %v2739
        %3252 = vst [vmem:[%s162 + $0x18] sm:$0xff] %v2740
        %3253 = vst [vmem:[%s162 + $0x20] sm:$0xff] %v2741
        %3254 = vst [vmem:[%s162 + $0x28] sm:$0xff] %v2742
        %3255 = vst [vmem:[%s162 + $0x30] sm:$0xff] %v2743
        %3256 = vst [vmem:[%s162 + $0x38] sm:$0xff] %v2744
        %3257 = vst [vmem:[%s162 + $0x40] sm:$0xff] %v2745
        %3258 = vst [vmem:[%s162 + $0x48] sm:$0xff] %v2746
        %3259 = vst [vmem:[%s162 + $0x50] sm:$0xff] %v2747
        %3260 = vst [vmem:[%s162 + $0x58] sm:$0xff] %v2748
        %3261 = vst [vmem:[%s162 + $0x60] sm:$0xff] %v2749
        %3262 = vst [vmem:[%s162 + $0x68] sm:$0xff] %v2750
        %3263 = vst [vmem:[%s162 + $0x70] sm:$0xff] %v2751
        %3264 = vst [vmem:[%s162 + $0x78] sm:$0xff] %v2752
        %3265 = vst [vmem:[%s162 + $0x80] sm:$0xff] %v2753
        %3266 = vst [vmem:[%s162 + $0x88] sm:$0xff] %v2754
        %3267 = vst [vmem:[%s162 + $0x90] sm:$0xff] %v2755
        %3268 = vst [vmem:[%s162 + $0x98] sm:$0xff] %v2756
        %3269 = vst [vmem:[%s162 + $0xa0] sm:$0xff] %v2757
        %3270 = vst [vmem:[%s162 + $0xa8] sm:$0xff] %v2758
        %3271 = vst [vmem:[%s162 + $0xb0] sm:$0xff] %v2759
        %3272 = vst [vmem:[%s162 + $0xb8] sm:$0xff] %v2760
        %3273 = vst [vmem:[%s162 + $0xc0] sm:$0xff] %v2761
        %3274 = vst [vmem:[%s162 + $0xc8] sm:$0xff] %v2762
        %3275 = vst [vmem:[%s162 + $0xd0] sm:$0xff] %v2763
        %3276 = vst [vmem:[%s162 + $0xd8] sm:$0xff] %v2764
        %3277 = vst [vmem:[%s162 + $0xe0] sm:$0xff] %v2765
        %3278 = vst [vmem:[%s162 + $0xe8] sm:$0xff] %v2766
        %3279 = vst [vmem:[%s162 + $0xf0] sm:$0xff] %v2767
        %3280 = vst [vmem:[%s162 + $0xf8] sm:$0xff] %v2768
        %3281 = vst [vmem:[%s162 + $0x100] sm:$0xff] %v2769
        %3282 = vst [vmem:[%s162 + $0x108] sm:$0xff] %v2770
        %3283 = vst [vmem:[%s162 + $0x110] sm:$0xff] %v2771
        %3284 = vst [vmem:[%s162 + $0x118] sm:$0xff] %v2772
        %3285 = vst [vmem:[%s162 + $0x120] sm:$0xff] %v2773
        %3286 = vst [vmem:[%s162 + $0x128] sm:$0xff] %v2774
        %3287 = vst [vmem:[%s162 + $0x130] sm:$0xff] %v2775
        %3288 = vst [vmem:[%s162 + $0x138] sm:$0xff] %v2776
        %3289 = vst [vmem:[%s162 + $0x140] sm:$0xff] %v2777
        %3290 = vst [vmem:[%s162 + $0x148] sm:$0xff] %v2778
        %3291 = vst [vmem:[%s162 + $0x150] sm:$0xff] %v2779
        %3292 = vst [vmem:[%s162 + $0x158] sm:$0xff] %v2780
        %3293 = vst [vmem:[%s162 + $0x160] sm:$0xff] %v2781
        %3294 = vst [vmem:[%s162 + $0x168] sm:$0xff] %v2782
        %3295 = vst [vmem:[%s162 + $0x170] sm:$0xff] %v2783
        %3296 = vst [vmem:[%s162 + $0x178] sm:$0xff] %v2784
        %3297 = vst [vmem:[%s162 + $0x180] sm:$0xff] %v2785
        %3298 = vst [vmem:[%s162 + $0x188] sm:$0xff] %v2786
        %3299 = vst [vmem:[%s162 + $0x190] sm:$0xff] %v2787
        %3300 = vst [vmem:[%s162 + $0x198] sm:$0xff] %v2788
        %3301 = vst [vmem:[%s162 + $0x1a0] sm:$0xff] %v2789
        %3302 = vst [vmem:[%s162 + $0x1a8] sm:$0xff] %v2790
        %3303 = vst [vmem:[%s162 + $0x1b0] sm:$0xff] %v2791
        %3304 = vst [vmem:[%s162 + $0x1b8] sm:$0xff] %v2792
        %3305 = vst [vmem:[%s162 + $0x1c0] sm:$0xff] %v2793
        %3306 = vst [vmem:[%s162 + $0x1c8] sm:$0xff] %v2794
        %3307 = vst [vmem:[%s162 + $0x1d0] sm:$0xff] %v2795
        %3308 = vst [vmem:[%s162 + $0x1d8] sm:$0xff] %v2796
        %3309 = vst [vmem:[%s162 + $0x1e0] sm:$0xff] %v2797
        %3310 = vst [vmem:[%s162 + $0x1e8] sm:$0xff] %v2798
        %3311 = vst [vmem:[%s162 + $0x1f0] sm:$0xff] %v2799
        %3312 = vst [vmem:[%s162 + $0x1f8] sm:$0xff] %v2800
        %3313 = vst [vmem:[%s162 + $0x200] sm:$0xff] %v2801
        %3314 = vst [vmem:[%s162 + $0x208] sm:$0xff] %v2802
        %3315 = vst [vmem:[%s162 + $0x210] sm:$0xff] %v2803
        %3316 = vst [vmem:[%s162 + $0x218] sm:$0xff] %v2804
        %3317 = vst [vmem:[%s162 + $0x220] sm:$0xff] %v2805
        %3318 = vst [vmem:[%s162 + $0x228] sm:$0xff] %v2806
        %3319 = vst [vmem:[%s162 + $0x230] sm:$0xff] %v2807
        %3320 = vst [vmem:[%s162 + $0x238] sm:$0xff] %v2808
        %3321 = vst [vmem:[%s162 + $0x240] sm:$0xff] %v2809
        %3322 = vst [vmem:[%s162 + $0x248] sm:$0xff] %v2810
        %3323 = vst [vmem:[%s162 + $0x250] sm:$0xff] %v2811
        %3324 = vst [vmem:[%s162 + $0x258] sm:$0xff] %v2812
        %3325 = vst [vmem:[%s162 + $0x260] sm:$0xff] %v2813
        %3326 = vst [vmem:[%s162 + $0x268] sm:$0xff] %v2814
        %3327 = vst [vmem:[%s162 + $0x270] sm:$0xff] %v2815
        %3328 = vst [vmem:[%s162 + $0x278] sm:$0xff] %v2816
        %3329 = vst [vmem:[%s162 + $0x280] sm:$0xff] %v2817
        %3330 = vst [vmem:[%s162 + $0x288] sm:$0xff] %v2818
        %3331 = vst [vmem:[%s162 + $0x290] sm:$0xff] %v2819
        %3332 = vst [vmem:[%s162 + $0x298] sm:$0xff] %v2820
        %3333 = vst [vmem:[%s162 + $0x2a0] sm:$0xff] %v2821
        %3334 = vst [vmem:[%s162 + $0x2a8] sm:$0xff] %v2822
        %3335 = vst [vmem:[%s162 + $0x2b0] sm:$0xff] %v2823
        %3336 = vst [vmem:[%s162 + $0x2b8] sm:$0xff] %v2824
        %3337 = vst [vmem:[%s162 + $0x2c0] sm:$0xff] %v2825
        %3338 = vst [vmem:[%s162 + $0x2c8] sm:$0xff] %v2826
        %3339 = vst [vmem:[%s162 + $0x2d0] sm:$0xff] %v2827
        %3340 = vst [vmem:[%s162 + $0x2d8] sm:$0xff] %v2828
        %3341 = vst [vmem:[%s162 + $0x2e0] sm:$0xff] %v2829
        %3342 = vst [vmem:[%s162 + $0x2e8] sm:$0xff] %v2830
        %3343 = vst [vmem:[%s162 + $0x2f0] sm:$0xff] %v2831
        %3344 = vst [vmem:[%s162 + $0x2f8] sm:$0xff] %v2832
        %3345 = vst [vmem:[%s162 + $0x300] sm:$0xff] %v2833
        %3346 = vst [vmem:[%s162 + $0x308] sm:$0xff] %v2834
        %3347 = vst [vmem:[%s162 + $0x310] sm:$0xff] %v2835
        %3348 = vst [vmem:[%s162 + $0x318] sm:$0xff] %v2836
        %3349 = vst [vmem:[%s162 + $0x320] sm:$0xff] %v2837
        %3350 = vst [vmem:[%s162 + $0x328] sm:$0xff] %v2838
        %3351 = vst [vmem:[%s162 + $0x330] sm:$0xff] %v2839
        %3352 = vst [vmem:[%s162 + $0x338] sm:$0xff] %v2840
        %3353 = vst [vmem:[%s162 + $0x340] sm:$0xff] %v2841
        %3354 = vst [vmem:[%s162 + $0x348] sm:$0xff] %v2842
        %3355 = vst [vmem:[%s162 + $0x350] sm:$0xff] %v2843
        %3356 = vst [vmem:[%s162 + $0x358] sm:$0xff] %v2844
        %3357 = vst [vmem:[%s162 + $0x360] sm:$0xff] %v2845
        %3358 = vst [vmem:[%s162 + $0x368] sm:$0xff] %v2846
        %3359 = vst [vmem:[%s162 + $0x370] sm:$0xff] %v2847
        %3360 = vst [vmem:[%s162 + $0x378] sm:$0xff] %v2848
        %3361 = vst [vmem:[%s162 + $0x380] sm:$0xff] %v2849
        %3362 = vst [vmem:[%s162 + $0x388] sm:$0xff] %v2850
        %3363 = vst [vmem:[%s162 + $0x390] sm:$0xff] %v2851
        %3364 = vst [vmem:[%s162 + $0x398] sm:$0xff] %v2852
        %3365 = vst [vmem:[%s162 + $0x3a0] sm:$0xff] %v2853
        %3366 = vst [vmem:[%s162 + $0x3a8] sm:$0xff] %v2854
        %3367 = vst [vmem:[%s162 + $0x3b0] sm:$0xff] %v2855
        %3368 = vst [vmem:[%s162 + $0x3b8] sm:$0xff] %v2856
        %3369 = vst [vmem:[%s162 + $0x3c0] sm:$0xff] %v2857
        %3370 = vst [vmem:[%s162 + $0x3c8] sm:$0xff] %v2858
        %3371 = vst [vmem:[%s162 + $0x3d0] sm:$0xff] %v2859
        %3372 = vst [vmem:[%s162 + $0x3d8] sm:$0xff] %v2860
        %3373 = vst [vmem:[%s162 + $0x3e0] sm:$0xff] %v2861
        %3374 = vst [vmem:[%s162 + $0x3e8] sm:$0xff] %v2862
        %3375 = vst [vmem:[%s162 + $0x3f0] sm:$0xff] %v2863
        %3376 = vst [vmem:[%s162 + $0x3f8] sm:$0xff] %v2864
        %3377 = vst [vmem:[%s162 + $0x400] sm:$0xff] %v2865
        %3378 = vst [vmem:[%s162 + $0x408] sm:$0xff] %v2866
        %3379 = vst [vmem:[%s162 + $0x410] sm:$0xff] %v2867
        %3380 = vst [vmem:[%s162 + $0x418] sm:$0xff] %v2868
        %3381 = vst [vmem:[%s162 + $0x420] sm:$0xff] %v2869
        %3382 = vst [vmem:[%s162 + $0x428] sm:$0xff] %v2870
        %3383 = vst [vmem:[%s162 + $0x430] sm:$0xff] %v2871
        %3384 = vst [vmem:[%s162 + $0x438] sm:$0xff] %v2872
        %3385 = vst [vmem:[%s162 + $0x440] sm:$0xff] %v2873
        %3386 = vst [vmem:[%s162 + $0x448] sm:$0xff] %v2874
        %3387 = vst [vmem:[%s162 + $0x450] sm:$0xff] %v2875
        %3388 = vst [vmem:[%s162 + $0x458] sm:$0xff] %v2876
        %3389 = vst [vmem:[%s162 + $0x460] sm:$0xff] %v2877
        %3390 = vst [vmem:[%s162 + $0x468] sm:$0xff] %v2878
        %3391 = vst [vmem:[%s162 + $0x470] sm:$0xff] %v2879
        %3392 = vst [vmem:[%s162 + $0x478] sm:$0xff] %v2880
        %3393 = vst [vmem:[%s162 + $0x480] sm:$0xff] %v2881
        %3394 = vst [vmem:[%s162 + $0x488] sm:$0xff] %v2882
        %3395 = vst [vmem:[%s162 + $0x490] sm:$0xff] %v2883
        %3396 = vst [vmem:[%s162 + $0x498] sm:$0xff] %v2884
        %3397 = vst [vmem:[%s162 + $0x4a0] sm:$0xff] %v2885
        %3398 = vst [vmem:[%s162 + $0x4a8] sm:$0xff] %v2886
        %3399 = vst [vmem:[%s162 + $0x4b0] sm:$0xff] %v2887
        %3400 = vst [vmem:[%s162 + $0x4b8] sm:$0xff] %v2888
        %3401 = vst [vmem:[%s162 + $0x4c0] sm:$0xff] %v2889
        %3402 = vst [vmem:[%s162 + $0x4c8] sm:$0xff] %v2890
        %3403 = vst [vmem:[%s162 + $0x4d0] sm:$0xff] %v2891
        %3404 = vst [vmem:[%s162 + $0x4d8] sm:$0xff] %v2892
        %3405 = vst [vmem:[%s162 + $0x4e0] sm:$0xff] %v2893
        %3406 = vst [vmem:[%s162 + $0x4e8] sm:$0xff] %v2894
        %3407 = vst [vmem:[%s162 + $0x4f0] sm:$0xff] %v2895
        %3408 = vst [vmem:[%s162 + $0x4f8] sm:$0xff] %v2896
        %3409 = vst [vmem:[%s162 + $0x500] sm:$0xff] %v2897
        %3410 = vst [vmem:[%s162 + $0x508] sm:$0xff] %v2898
        %3411 = vst [vmem:[%s162 + $0x510] sm:$0xff] %v2899
        %3412 = vst [vmem:[%s162 + $0x518] sm:$0xff] %v2900
        %3413 = vst [vmem:[%s162 + $0x520] sm:$0xff] %v2901
        %3414 = vst [vmem:[%s162 + $0x528] sm:$0xff] %v2902
        %3415 = vst [vmem:[%s162 + $0x530] sm:$0xff] %v2903
        %3416 = vst [vmem:[%s162 + $0x538] sm:$0xff] %v2904
        %3417 = vst [vmem:[%s162 + $0x540] sm:$0xff] %v2905
        %3418 = vst [vmem:[%s162 + $0x548] sm:$0xff] %v2906
        %3419 = vst [vmem:[%s162 + $0x550] sm:$0xff] %v2907
        %3420 = vst [vmem:[%s162 + $0x558] sm:$0xff] %v2908
        %3421 = vst [vmem:[%s162 + $0x560] sm:$0xff] %v2909
        %3422 = vst [vmem:[%s162 + $0x568] sm:$0xff] %v2910
        %3423 = vst [vmem:[%s162 + $0x570] sm:$0xff] %v2911
        %3424 = vst [vmem:[%s162 + $0x578] sm:$0xff] %v2912
        %3425 = vst [vmem:[%s162 + $0x580] sm:$0xff] %v2913
        %3426 = vst [vmem:[%s162 + $0x588] sm:$0xff] %v2914
        %3427 = vst [vmem:[%s162 + $0x590] sm:$0xff] %v2915
        %3428 = vst [vmem:[%s162 + $0x598] sm:$0xff] %v2916
        %3429 = vst [vmem:[%s162 + $0x5a0] sm:$0xff] %v2917
        %3430 = vst [vmem:[%s162 + $0x5a8] sm:$0xff] %v2918
        %3431 = vst [vmem:[%s162 + $0x5b0] sm:$0xff] %v2919
        %3432 = vst [vmem:[%s162 + $0x5b8] sm:$0xff] %v2920
        %3433 = vst [vmem:[%s162 + $0x5c0] sm:$0xff] %v2921
        %3434 = vst [vmem:[%s162 + $0x5c8] sm:$0xff] %v2922
        %3435 = vst [vmem:[%s162 + $0x5d0] sm:$0xff] %v2923
        %3436 = vst [vmem:[%s162 + $0x5d8] sm:$0xff] %v2924
        %3437 = vst [vmem:[%s162 + $0x5e0] sm:$0xff] %v2925
        %3438 = vst [vmem:[%s162 + $0x5e8] sm:$0xff] %v2926
        %3439 = vst [vmem:[%s162 + $0x5f0] sm:$0xff] %v2927
        %3440 = vst [vmem:[%s162 + $0x5f8] sm:$0xff] %v2928
        %3441 = vst [vmem:[%s162 + $0x600] sm:$0xff] %v2929
        %3442 = vst [vmem:[%s162 + $0x608] sm:$0xff] %v2930
        %3443 = vst [vmem:[%s162 + $0x610] sm:$0xff] %v2931
        %3444 = vst [vmem:[%s162 + $0x618] sm:$0xff] %v2932
        %3445 = vst [vmem:[%s162 + $0x620] sm:$0xff] %v2933
        %3446 = vst [vmem:[%s162 + $0x628] sm:$0xff] %v2934
        %3447 = vst [vmem:[%s162 + $0x630] sm:$0xff] %v2935
        %3448 = vst [vmem:[%s162 + $0x638] sm:$0xff] %v2936
        %3449 = vst [vmem:[%s162 + $0x640] sm:$0xff] %v2937
        %3450 = vst [vmem:[%s162 + $0x648] sm:$0xff] %v2938
        %3451 = vst [vmem:[%s162 + $0x650] sm:$0xff] %v2939
        %3452 = vst [vmem:[%s162 + $0x658] sm:$0xff] %v2940
        %3453 = vst [vmem:[%s162 + $0x660] sm:$0xff] %v2941
        %3454 = vst [vmem:[%s162 + $0x668] sm:$0xff] %v2942
        %3455 = vst [vmem:[%s162 + $0x670] sm:$0xff] %v2943
        %3456 = vst [vmem:[%s162 + $0x678] sm:$0xff] %v2944
        %3457 = vst [vmem:[%s162 + $0x680] sm:$0xff] %v2945
        %3458 = vst [vmem:[%s162 + $0x688] sm:$0xff] %v2946
        %3459 = vst [vmem:[%s162 + $0x690] sm:$0xff] %v2947
        %3460 = vst [vmem:[%s162 + $0x698] sm:$0xff] %v2948
        %3461 = vst [vmem:[%s162 + $0x6a0] sm:$0xff] %v2949
        %3462 = vst [vmem:[%s162 + $0x6a8] sm:$0xff] %v2950
        %3463 = vst [vmem:[%s162 + $0x6b0] sm:$0xff] %v2951
        %3464 = vst [vmem:[%s162 + $0x6b8] sm:$0xff] %v2952
        %3465 = vst [vmem:[%s162 + $0x6c0] sm:$0xff] %v2953
        %3466 = vst [vmem:[%s162 + $0x6c8] sm:$0xff] %v2954
        %3467 = vst [vmem:[%s162 + $0x6d0] sm:$0xff] %v2955
        %3468 = vst [vmem:[%s162 + $0x6d8] sm:$0xff] %v2956
        %3469 = vst [vmem:[%s162 + $0x6e0] sm:$0xff] %v2957
        %3470 = vst [vmem:[%s162 + $0x6e8] sm:$0xff] %v2958
        %3471 = vst [vmem:[%s162 + $0x6f0] sm:$0xff] %v2959
        %3472 = vst [vmem:[%s162 + $0x6f8] sm:$0xff] %v2960
        %3473 = vst [vmem:[%s162 + $0x700] sm:$0xff] %v2961
        %3474 = vst [vmem:[%s162 + $0x708] sm:$0xff] %v2962
        %3475 = vst [vmem:[%s162 + $0x710] sm:$0xff] %v2963
        %3476 = vst [vmem:[%s162 + $0x718] sm:$0xff] %v2964
        %3477 = vst [vmem:[%s162 + $0x720] sm:$0xff] %v2965
        %3478 = vst [vmem:[%s162 + $0x728] sm:$0xff] %v2966
        %3479 = vst [vmem:[%s162 + $0x730] sm:$0xff] %v2967
        %3480 = vst [vmem:[%s162 + $0x738] sm:$0xff] %v2968
        %3481 = vst [vmem:[%s162 + $0x740] sm:$0xff] %v2969
        %3482 = vst [vmem:[%s162 + $0x748] sm:$0xff] %v2970
        %3483 = vst [vmem:[%s162 + $0x750] sm:$0xff] %v2971
        %3484 = vst [vmem:[%s162 + $0x758] sm:$0xff] %v2972
        %3485 = vst [vmem:[%s162 + $0x760] sm:$0xff] %v2973
        %3486 = vst [vmem:[%s162 + $0x768] sm:$0xff] %v2974
        %3487 = vst [vmem:[%s162 + $0x770] sm:$0xff] %v2975
        %3488 = vst [vmem:[%s162 + $0x778] sm:$0xff] %v2976
        %3489 = vst [vmem:[%s162 + $0x780] sm:$0xff] %v2977
        %3490 = vst [vmem:[%s162 + $0x788] sm:$0xff] %v2978
        %3491 = vst [vmem:[%s162 + $0x790] sm:$0xff] %v2979
        %3492 = vst [vmem:[%s162 + $0x798] sm:$0xff] %v2980
        %3493 = vst [vmem:[%s162 + $0x7a0] sm:$0xff] %v2981
        %3494 = vst [vmem:[%s162 + $0x7a8] sm:$0xff] %v2982
        %3495 = vst [vmem:[%s162 + $0x7b0] sm:$0xff] %v2983
        %3496 = vst [vmem:[%s162 + $0x7b8] sm:$0xff] %v2984
        %3497 = vst [vmem:[%s162 + $0x7c0] sm:$0xff] %v2985
        %3498 = vst [vmem:[%s162 + $0x7c8] sm:$0xff] %v2986
        %3499 = vst [vmem:[%s162 + $0x7d0] sm:$0xff] %v2987
        %3500 = vst [vmem:[%s162 + $0x7d8] sm:$0xff] %v2988
        %3501 = vst [vmem:[%s162 + $0x7e0] sm:$0xff] %v2989
        %3502 = vst [vmem:[%s162 + $0x7e8] sm:$0xff] %v2990
        %3503 = vst [vmem:[%s162 + $0x7f0] sm:$0xff] %v2991
        %3504 = vst [vmem:[%s162 + $0x7f8] sm:$0xff] %v2992
        %3505 = vst [vmem:[%s162 + $0x800] sm:$0xff] %v2993
        %3506 = vst [vmem:[%s162 + $0x808] sm:$0xff] %v2994
        %3507 = vst [vmem:[%s162 + $0x810] sm:$0xff] %v2995
        %3508 = vst [vmem:[%s162 + $0x818] sm:$0xff] %v2996
        %3509 = vst [vmem:[%s162 + $0x820] sm:$0xff] %v2997
        %3510 = vst [vmem:[%s162 + $0x828] sm:$0xff] %v2998
        %3511 = vst [vmem:[%s162 + $0x830] sm:$0xff] %v2999
        %3512 = vst [vmem:[%s162 + $0x838] sm:$0xff] %v3000
        %3513 = vst [vmem:[%s162 + $0x840] sm:$0xff] %v3001
        %3514 = vst [vmem:[%s162 + $0x848] sm:$0xff] %v3002
        %3515 = vst [vmem:[%s162 + $0x850] sm:$0xff] %v3003
        %3516 = vst [vmem:[%s162 + $0x858] sm:$0xff] %v3004
        %3517 = vst [vmem:[%s162 + $0x860] sm:$0xff] %v3005
        %3518 = vst [vmem:[%s162 + $0x868] sm:$0xff] %v3006
        %3519 = vst [vmem:[%s162 + $0x870] sm:$0xff] %v3007
        %3520 = vst [vmem:[%s162 + $0x878] sm:$0xff] %v3008
        %3521 = vst [vmem:[%s162 + $0x880] sm:$0xff] %v3009
        %3522 = vst [vmem:[%s162 + $0x888] sm:$0xff] %v3010
        %3523 = vst [vmem:[%s162 + $0x890] sm:$0xff] %v3011
        %3524 = vst [vmem:[%s162 + $0x898] sm:$0xff] %v3012
        %3525 = vst [vmem:[%s162 + $0x8a0] sm:$0xff] %v3013
        %3526 = vst [vmem:[%s162 + $0x8a8] sm:$0xff] %v3014
        %3527 = vst [vmem:[%s162 + $0x8b0] sm:$0xff] %v3015
        %3528 = vst [vmem:[%s162 + $0x8b8] sm:$0xff] %v3016
        %3529 = vst [vmem:[%s162 + $0x8c0] sm:$0xff] %v3017
        %3530 = vst [vmem:[%s162 + $0x8c8] sm:$0xff] %v3018
        %3531 = vst [vmem:[%s162 + $0x8d0] sm:$0xff] %v3019
        %3532 = vst [vmem:[%s162 + $0x8d8] sm:$0xff] %v3020
        %3533 = vst [vmem:[%s162 + $0x8e0] sm:$0xff] %v3021
        %3534 = vst [vmem:[%s162 + $0x8e8] sm:$0xff] %v3022
        %3535 = vst [vmem:[%s162 + $0x8f0] sm:$0xff] %v3023
        %3536 = vst [vmem:[%s162 + $0x8f8] sm:$0xff] %v3024
        %3537 = vst [vmem:[%s162 + $0x900] sm:$0xff] %v3025
        %3538 = vst [vmem:[%s162 + $0x908] sm:$0xff] %v3026
        %3539 = vst [vmem:[%s162 + $0x910] sm:$0xff] %v3027
        %3540 = vst [vmem:[%s162 + $0x918] sm:$0xff] %v3028
        %3541 = vst [vmem:[%s162 + $0x920] sm:$0xff] %v3029
        %3542 = vst [vmem:[%s162 + $0x928] sm:$0xff] %v3030
        %3543 = vst [vmem:[%s162 + $0x930] sm:$0xff] %v3031
        %3544 = vst [vmem:[%s162 + $0x938] sm:$0xff] %v3032
        %3545 = vst [vmem:[%s162 + $0x940] sm:$0xff] %v3033
        %3546 = vst [vmem:[%s162 + $0x948] sm:$0xff] %v3034
        %3547 = vst [vmem:[%s162 + $0x950] sm:$0xff] %v3035
        %3548 = vst [vmem:[%s162 + $0x958] sm:$0xff] %v3036
        %3549 = vst [vmem:[%s162 + $0x960] sm:$0xff] %v3037
        %3550 = vst [vmem:[%s162 + $0x968] sm:$0xff] %v3038
        %3551 = vst [vmem:[%s162 + $0x970] sm:$0xff] %v3039
        %3552 = vst [vmem:[%s162 + $0x978] sm:$0xff] %v3040
        %3553 = vst [vmem:[%s162 + $0x980] sm:$0xff] %v3041
        %3554 = vst [vmem:[%s162 + $0x988] sm:$0xff] %v3042
        %3555 = vst [vmem:[%s162 + $0x990] sm:$0xff] %v3043
        %3556 = vst [vmem:[%s162 + $0x998] sm:$0xff] %v3044
        %3557 = vst [vmem:[%s162 + $0x9a0] sm:$0xff] %v3045
        %3558 = vst [vmem:[%s162 + $0x9a8] sm:$0xff] %v3046
        %3559 = vst [vmem:[%s162 + $0x9b0] sm:$0xff] %v3047
        %3560 = vst [vmem:[%s162 + $0x9b8] sm:$0xff] %v3048
        %3561 = vst [vmem:[%s162 + $0x9c0] sm:$0xff] %v3049
        %3562 = vst [vmem:[%s162 + $0x9c8] sm:$0xff] %v3050
        %3563 = vst [vmem:[%s162 + $0x9d0] sm:$0xff] %v3051
        %3564 = vst [vmem:[%s162 + $0x9d8] sm:$0xff] %v3052
        %3565 = vst [vmem:[%s162 + $0x9e0] sm:$0xff] %v3053
        %3566 = vst [vmem:[%s162 + $0x9e8] sm:$0xff] %v3054
        %3567 = vst [vmem:[%s162 + $0x9f0] sm:$0xff] %v3055
        %3568 = vst [vmem:[%s162 + $0x9f8] sm:$0xff] %v3056
        %3569 = vst [vmem:[%s162 + $0xa00] sm:$0xff] %v3057
        %3570 = vst [vmem:[%s162 + $0xa08] sm:$0xff] %v3058
        %3571 = vst [vmem:[%s162 + $0xa10] sm:$0xff] %v3059
        %3572 = vst [vmem:[%s162 + $0xa18] sm:$0xff] %v3060
        %3573 = vst [vmem:[%s162 + $0xa20] sm:$0xff] %v3061
        %3574 = vst [vmem:[%s162 + $0xa28] sm:$0xff] %v3062
        %3575 = vst [vmem:[%s162 + $0xa30] sm:$0xff] %v3063
        %3576 = vst [vmem:[%s162 + $0xa38] sm:$0xff] %v3064
        %3577 = vst [vmem:[%s162 + $0xa40] sm:$0xff] %v3065
        %3578 = vst [vmem:[%s162 + $0xa48] sm:$0xff] %v3066
        %3579 = vst [vmem:[%s162 + $0xa50] sm:$0xff] %v3067
        %3580 = vst [vmem:[%s162 + $0xa58] sm:$0xff] %v3068
        %3581 = vst [vmem:[%s162 + $0xa60] sm:$0xff] %v3069
        %3582 = vst [vmem:[%s162 + $0xa68] sm:$0xff] %v3070
        %3583 = vst [vmem:[%s162 + $0xa70] sm:$0xff] %v3071
        %3584 = vst [vmem:[%s162 + $0xa78] sm:$0xff] %v3072
        %3585 = vst [vmem:[%s162 + $0xa80] sm:$0xff] %v3073
        %3586 = vst [vmem:[%s162 + $0xa88] sm:$0xff] %v3074
        %3587 = vst [vmem:[%s162 + $0xa90] sm:$0xff] %v3075
        %3588 = vst [vmem:[%s162 + $0xa98] sm:$0xff] %v3076
        %3589 = vst [vmem:[%s162 + $0xaa0] sm:$0xff] %v3077
        %3590 = vst [vmem:[%s162 + $0xaa8] sm:$0xff] %v3078
        %3591 = vst [vmem:[%s162 + $0xab0] sm:$0xff] %v3079
        %3592 = vst [vmem:[%s162 + $0xab8] sm:$0xff] %v3080
        %3593 = vst [vmem:[%s162 + $0xac0] sm:$0xff] %v3081
        %3594 = vst [vmem:[%s162 + $0xac8] sm:$0xff] %v3082
        %3595 = vst [vmem:[%s162 + $0xad0] sm:$0xff] %v3083
        %3596 = vst [vmem:[%s162 + $0xad8] sm:$0xff] %v3084
        %3597 = vst [vmem:[%s162 + $0xae0] sm:$0xff] %v3085
        %3598 = vst [vmem:[%s162 + $0xae8] sm:$0xff] %v3086
        %3599 = vst [vmem:[%s162 + $0xaf0] sm:$0xff] %v3087
        %3600 = vst [vmem:[%s162 + $0xaf8] sm:$0xff] %v3088
        %3601 = vst [vmem:[%s162 + $0xb00] sm:$0xff] %v3089
        %3602 = vst [vmem:[%s162 + $0xb08] sm:$0xff] %v3090
        %3603 = vst [vmem:[%s162 + $0xb10] sm:$0xff] %v3091
        %3604 = vst [vmem:[%s162 + $0xb18] sm:$0xff] %v3092
        %3605 = vst [vmem:[%s162 + $0xb20] sm:$0xff] %v3093
        %3606 = vst [vmem:[%s162 + $0xb28] sm:$0xff] %v3094
        %3607 = vst [vmem:[%s162 + $0xb30] sm:$0xff] %v3095
        %3608 = vst [vmem:[%s162 + $0xb38] sm:$0xff] %v3096
        %3609 = vst [vmem:[%s162 + $0xb40] sm:$0xff] %v3097
        %3610 = vst [vmem:[%s162 + $0xb48] sm:$0xff] %v3098
        %3611 = vst [vmem:[%s162 + $0xb50] sm:$0xff] %v3099
        %3612 = vst [vmem:[%s162 + $0xb58] sm:$0xff] %v3100
        %3613 = vst [vmem:[%s162 + $0xb60] sm:$0xff] %v3101
        %3614 = vst [vmem:[%s162 + $0xb68] sm:$0xff] %v3102
        %3615 = vst [vmem:[%s162 + $0xb70] sm:$0xff] %v3103
        %3616 = vst [vmem:[%s162 + $0xb78] sm:$0xff] %v3104
        %3617 = vst [vmem:[%s162 + $0xb80] sm:$0xff] %v3105
        %3618 = vst [vmem:[%s162 + $0xb88] sm:$0xff] %v3106
        %3619 = vst [vmem:[%s162 + $0xb90] sm:$0xff] %v3107
        %3620 = vst [vmem:[%s162 + $0xb98] sm:$0xff] %v3108
        %3621 = vst [vmem:[%s162 + $0xba0] sm:$0xff] %v3109
        %3622 = vst [vmem:[%s162 + $0xba8] sm:$0xff] %v3110
        %3623 = vst [vmem:[%s162 + $0xbb0] sm:$0xff] %v3111
        %3624 = vst [vmem:[%s162 + $0xbb8] sm:$0xff] %v3112
        %3625 = vst [vmem:[%s162 + $0xbc0] sm:$0xff] %v3113
        %3626 = vst [vmem:[%s162 + $0xbc8] sm:$0xff] %v3114
        %3627 = vst [vmem:[%s162 + $0xbd0] sm:$0xff] %v3115
        %3628 = vst [vmem:[%s162 + $0xbd8] sm:$0xff] %v3116
        %3629 = vst [vmem:[%s162 + $0xbe0] sm:$0xff] %v3117
        %3630 = vst [vmem:[%s162 + $0xbe8] sm:$0xff] %v3118
        %3631 = vst [vmem:[%s162 + $0xbf0] sm:$0xff] %v3119
        %3632 = vst [vmem:[%s162 + $0xbf8] sm:$0xff] %v3120
        %3633 = vst [vmem:[%s162 + $0xc00] sm:$0xff] %v3121
        %3634 = vst [vmem:[%s162 + $0xc08] sm:$0xff] %v3122
        %3635 = vst [vmem:[%s162 + $0xc10] sm:$0xff] %v3123
        %3636 = vst [vmem:[%s162 + $0xc18] sm:$0xff] %v3124
        %3637 = vst [vmem:[%s162 + $0xc20] sm:$0xff] %v3125
        %3638 = vst [vmem:[%s162 + $0xc28] sm:$0xff] %v3126
        %3639 = vst [vmem:[%s162 + $0xc30] sm:$0xff] %v3127
        %3640 = vst [vmem:[%s162 + $0xc38] sm:$0xff] %v3128
        %3641 = vst [vmem:[%s162 + $0xc40] sm:$0xff] %v3129
        %3642 = vst [vmem:[%s162 + $0xc48] sm:$0xff] %v3130
        %3643 = vst [vmem:[%s162 + $0xc50] sm:$0xff] %v3131
        %3644 = vst [vmem:[%s162 + $0xc58] sm:$0xff] %v3132
        %3645 = vst [vmem:[%s162 + $0xc60] sm:$0xff] %v3133
        %3646 = vst [vmem:[%s162 + $0xc68] sm:$0xff] %v3134
        %3647 = vst [vmem:[%s162 + $0xc70] sm:$0xff] %v3135
        %3648 = vst [vmem:[%s162 + $0xc78] sm:$0xff] %v3136
        %3649 = vst [vmem:[%s162 + $0xc80] sm:$0xff] %v3137
        %3650 = vst [vmem:[%s162 + $0xc88] sm:$0xff] %v3138
        %3651 = vst [vmem:[%s162 + $0xc90] sm:$0xff] %v3139
        %3652 = vst [vmem:[%s162 + $0xc98] sm:$0xff] %v3140
        %3653 = vst [vmem:[%s162 + $0xca0] sm:$0xff] %v3141
        %3654 = vst [vmem:[%s162 + $0xca8] sm:$0xff] %v3142
        %3655 = vst [vmem:[%s162 + $0xcb0] sm:$0xff] %v3143
        %3656 = vst [vmem:[%s162 + $0xcb8] sm:$0xff] %v3144
        %3657 = vst [vmem:[%s162 + $0xcc0] sm:$0xff] %v3145
        %3658 = vst [vmem:[%s162 + $0xcc8] sm:$0xff] %v3146
        %3659 = vst [vmem:[%s162 + $0xcd0] sm:$0xff] %v3147
        %3660 = vst [vmem:[%s162 + $0xcd8] sm:$0xff] %v3148
        %3661 = vst [vmem:[%s162 + $0xce0] sm:$0xff] %v3149
        %3662 = vst [vmem:[%s162 + $0xce8] sm:$0xff] %v3150
        %3663 = vst [vmem:[%s162 + $0xcf0] sm:$0xff] %v3151
        %3664 = vst [vmem:[%s162 + $0xcf8] sm:$0xff] %v3152
        %3665 = vst [vmem:[%s162 + $0xd00] sm:$0xff] %v3153
        %3666 = vst [vmem:[%s162 + $0xd08] sm:$0xff] %v3154
        %3667 = vst [vmem:[%s162 + $0xd10] sm:$0xff] %v3155
        %3668 = vst [vmem:[%s162 + $0xd18] sm:$0xff] %v3156
        %3669 = vst [vmem:[%s162 + $0xd20] sm:$0xff] %v3157
        %3670 = vst [vmem:[%s162 + $0xd28] sm:$0xff] %v3158
        %3671 = vst [vmem:[%s162 + $0xd30] sm:$0xff] %v3159
        %3672 = vst [vmem:[%s162 + $0xd38] sm:$0xff] %v3160
        %3673 = vst [vmem:[%s162 + $0xd40] sm:$0xff] %v3161
        %3674 = vst [vmem:[%s162 + $0xd48] sm:$0xff] %v3162
        %3675 = vst [vmem:[%s162 + $0xd50] sm:$0xff] %v3163
        %3676 = vst [vmem:[%s162 + $0xd58] sm:$0xff] %v3164
        %3677 = vst [vmem:[%s162 + $0xd60] sm:$0xff] %v3165
        %3678 = vst [vmem:[%s162 + $0xd68] sm:$0xff] %v3166
        %3679 = vst [vmem:[%s162 + $0xd70] sm:$0xff] %v3167
        %3680 = vst [vmem:[%s162 + $0xd78] sm:$0xff] %v3168
        %3681 = vst [vmem:[%s162 + $0xd80] sm:$0xff] %v3169
        %3682 = vst [vmem:[%s162 + $0xd88] sm:$0xff] %v3170
        %3683 = vst [vmem:[%s162 + $0xd90] sm:$0xff] %v3171
        %3684 = vst [vmem:[%s162 + $0xd98] sm:$0xff] %v3172
        %3685 = vst [vmem:[%s162 + $0xda0] sm:$0xff] %v3173
        %3686 = vst [vmem:[%s162 + $0xda8] sm:$0xff] %v3174
        %3687 = vst [vmem:[%s162 + $0xdb0] sm:$0xff] %v3175
        %3688 = vst [vmem:[%s162 + $0xdb8] sm:$0xff] %v3176
        %3689 = vst [vmem:[%s162 + $0xdc0] sm:$0xff] %v3177
        %3690 = vst [vmem:[%s162 + $0xdc8] sm:$0xff] %v3178
        %3691 = vst [vmem:[%s162 + $0xdd0] sm:$0xff] %v3179
        %3692 = vst [vmem:[%s162 + $0xdd8] sm:$0xff] %v3180
        %3693 = vst [vmem:[%s162 + $0xde0] sm:$0xff] %v3181
        %3694 = vst [vmem:[%s162 + $0xde8] sm:$0xff] %v3182
        %3695 = vst [vmem:[%s162 + $0xdf0] sm:$0xff] %v3183
        %3696 = vst [vmem:[%s162 + $0xdf8] sm:$0xff] %v3184
        %3697 = vst [vmem:[%s162 + $0xe00] sm:$0xff] %v3185
        %3698 = vst [vmem:[%s162 + $0xe08] sm:$0xff] %v3186
        %3699 = vst [vmem:[%s162 + $0xe10] sm:$0xff] %v3187
        %3700 = vst [vmem:[%s162 + $0xe18] sm:$0xff] %v3188
        %3701 = vst [vmem:[%s162 + $0xe20] sm:$0xff] %v3189
        %3702 = vst [vmem:[%s162 + $0xe28] sm:$0xff] %v3190
        %3703 = vst [vmem:[%s162 + $0xe30] sm:$0xff] %v3191
        %3704 = vst [vmem:[%s162 + $0xe38] sm:$0xff] %v3192
        %3705 = vst [vmem:[%s162 + $0xe40] sm:$0xff] %v3193
        %3706 = vst [vmem:[%s162 + $0xe48] sm:$0xff] %v3194
        %3707 = vst [vmem:[%s162 + $0xe50] sm:$0xff] %v3195
        %3708 = vst [vmem:[%s162 + $0xe58] sm:$0xff] %v3196
        %3709 = vst [vmem:[%s162 + $0xe60] sm:$0xff] %v3197
        %3710 = vst [vmem:[%s162 + $0xe68] sm:$0xff] %v3198
        %3711 = vst [vmem:[%s162 + $0xe70] sm:$0xff] %v3199
        %3712 = vst [vmem:[%s162 + $0xe78] sm:$0xff] %v3200
        %3713 = vst [vmem:[%s162 + $0xe80] sm:$0xff] %v3201
        %3714 = vst [vmem:[%s162 + $0xe88] sm:$0xff] %v3202
        %3715 = vst [vmem:[%s162 + $0xe90] sm:$0xff] %v3203
        %3716 = vst [vmem:[%s162 + $0xe98] sm:$0xff] %v3204
        %3717 = vst [vmem:[%s162 + $0xea0] sm:$0xff] %v3205
        %3718 = vst [vmem:[%s162 + $0xea8] sm:$0xff] %v3206
        %3719 = vst [vmem:[%s162 + $0xeb0] sm:$0xff] %v3207
        %3720 = vst [vmem:[%s162 + $0xeb8] sm:$0xff] %v3208
        %3721 = vst [vmem:[%s162 + $0xec0] sm:$0xff] %v3209
        %3722 = vst [vmem:[%s162 + $0xec8] sm:$0xff] %v3210
        %3723 = vst [vmem:[%s162 + $0xed0] sm:$0xff] %v3211
        %3724 = vst [vmem:[%s162 + $0xed8] sm:$0xff] %v3212
        %3725 = vst [vmem:[%s162 + $0xee0] sm:$0xff] %v3213
        %3726 = vst [vmem:[%s162 + $0xee8] sm:$0xff] %v3214
        %3727 = vst [vmem:[%s162 + $0xef0] sm:$0xff] %v3215
        %3728 = vst [vmem:[%s162 + $0xef8] sm:$0xff] %v3216
        %3729 = vst [vmem:[%s162 + $0xf00] sm:$0xff] %v3217
        %3730 = vst [vmem:[%s162 + $0xf08] sm:$0xff] %v3218
        %3731 = vst [vmem:[%s162 + $0xf10] sm:$0xff] %v3219
        %3732 = vst [vmem:[%s162 + $0xf18] sm:$0xff] %v3220
        %3733 = vst [vmem:[%s162 + $0xf20] sm:$0xff] %v3221
        %3734 = vst [vmem:[%s162 + $0xf28] sm:$0xff] %v3222
        %3735 = vst [vmem:[%s162 + $0xf30] sm:$0xff] %v3223
        %3736 = vst [vmem:[%s162 + $0xf38] sm:$0xff] %v3224
        %3737 = vst [vmem:[%s162 + $0xf40] sm:$0xff] %v3225
        %3738 = vst [vmem:[%s162 + $0xf48] sm:$0xff] %v3226
        %3739 = vst [vmem:[%s162 + $0xf50] sm:$0xff] %v3227
        %3740 = vst [vmem:[%s162 + $0xf58] sm:$0xff] %v3228
        %3741 = vst [vmem:[%s162 + $0xf60] sm:$0xff] %v3229
        %3742 = vst [vmem:[%s162 + $0xf68] sm:$0xff] %v3230
        %3743 = vst [vmem:[%s162 + $0xf70] sm:$0xff] %v3231
        %3744 = vst [vmem:[%s162 + $0xf78] sm:$0xff] %v3232
        %3745 = vst [vmem:[%s162 + $0xf80] sm:$0xff] %v3233
        %3746 = vst [vmem:[%s162 + $0xf88] sm:$0xff] %v3234
        %3747 = vst [vmem:[%s162 + $0xf90] sm:$0xff] %v3235
        %3748 = vst [vmem:[%s162 + $0xf98] sm:$0xff] %v3236
        %3749 = vst [vmem:[%s162 + $0xfa0] sm:$0xff] %v3237
        %3750 = vst [vmem:[%s162 + $0xfa8] sm:$0xff] %v3238
        %3751 = vst [vmem:[%s162 + $0xfb0] sm:$0xff] %v3239
        %3752 = vst [vmem:[%s162 + $0xfb8] sm:$0xff] %v3240
        %3753 = vst [vmem:[%s162 + $0xfc0] sm:$0xff] %v3241
        %3754 = vst [vmem:[%s162 + $0xfc8] sm:$0xff] %v3242
        %3755 = vst [vmem:[%s162 + $0xfd0] sm:$0xff] %v3243
        %3756 = vst [vmem:[%s162 + $0xfd8] sm:$0xff] %v3244
        %3757 = vst [vmem:[%s162 + $0xfe0] sm:$0xff] %v3245
        %3758 = vst [vmem:[%s162 + $0xfe8] sm:$0xff] %v3246
        %3759 = vst [vmem:[%s162 + $0xff0] sm:$0xff] %v3247
        %3760 = vst [vmem:[%s162 + $0xff8] sm:$0xff] %v3248
        %s3761 = sand.u32 %s75, 1
        %s3762 = scalar_lea.sflag [#allocation5], %s3761
        %s3763 = sand.u32 %s75, 1
        %s3764 = smul.addr %s3763, 4096
        %s3765 = scalar_lea.vmem [#allocation6], %s3764
        // Predicated region
        $region33: #{tpu_custom_call.1} parent=27 // pred_check
          %p3766 = pneg %p85
        $region34: #{tpu_custom_call.1} parent=27 // pred_check_branch
          %3768 = sbr.rel (%p3766) target = $region36
        $region35: #{tpu_custom_call.1} parent=27 // pred_region
          %s3769 = smul.u32 512, %s20
          %s3771 = ssub.s32 65536, 65536
          %3772 = vsyncadd %s3762, %s3771
          %s3773 = smul.addr %s3769, 128
          %s3774 = scalar_lea.hbm %s2, %s3773
          %s3775 = sshll.u32 %s3765, 4
          %s3776 = int_to_ptr.vmem [resolvable:$true] %s3775
          %3781 = dma.vmem_to_hbm [thread:$0]  %s3776, 65536, %s3774, %s3762, 128, 128, 8
        $region36: #{tpu_custom_call.1} parent=27 // pred_fallthru
          _
      $region28: #{tpu_custom_call.1} parent=5 // pred_fallthru
        _
      %p3782 = scmp.le.s32.totalorder 2, %s15
      // Predicated region
      $region37: #{tpu_custom_call.1} parent=5 // pred_check
        %p3783 = pneg %p3782
      $region38: #{tpu_custom_call.1} parent=5 // pred_check_branch
        %3785 = sbr.rel (%p3783) target = $region40
      $region39: #{tpu_custom_call.1} parent=5 // pred_region
        %s3786 = ssub.s32 %s15, 2
        // Predicated region
        $region41: #{tpu_custom_call.1} parent=39 // pred_check
          %p3787 = pneg %p91
        $region42: #{tpu_custom_call.1} parent=39 // pred_check_branch
          %3789 = sbr.rel (%p3787) target = $region44
        $region43: #{tpu_custom_call.1} parent=39 // pred_region
          %s3790 = sand.u32 %s76, 1
          %s3791 = scalar_lea.sflag [#allocation5], %s3790
          %s3792 = sand.u32 %s76, 1
          %s3793 = smul.addr %s3792, 4096
          %s3794 = scalar_lea.vmem [#allocation6], %s3793
          %3795 = dma.done %s3791, 65536
        $region44: #{tpu_custom_call.1} parent=39 // pred_fallthru
          _
      $region40: #{tpu_custom_call.1} parent=5 // pred_fallthru
        _
    $region6: #{tpu_custom_call.1} parent=1 // loop_footer
      %s19 = sadd.s32 1, %s15
    $region7: #{tpu_custom_call.1} parent=1 // loop_footer_branch
      %14 = sbr.rel target = $region3
    $region8: #{tpu_custom_call.1} parent=1 // loop_exit
      _
    %3796 = vsyncpa [#allocation4], 1
    %s3797 = scalar_lea.sflag [#allocation4], 1
    %3798 = vsyncpa %s3797, 1
    %3799 = vsyncpa [#allocation5], 1
    %s3800 = scalar_lea.sflag [#allocation5], 1
    %3801 = vsyncpa %s3800, 1

</llo_original>
